<compile_context>
chip_gen: v7x
topology: tpu7x:2x2x1
jax: 0.10.0
libtpu: 0.0.40
codegen_flags: <defaults>
</compile_context>

<pallas_src>
import functools
import math

import jax
import jax.numpy as jnp
from jax import lax
from jax.experimental import pallas as pl
from jax.experimental.pallas import tpu as pltpu

# ----------------------------- small config ---------------------------------
IMG = 16            # input image height/width (CLIP-L: 224)
C_IN = 3            # RGB
PATCH = 4           # conv kernel = stride (CLIP-L: 14)
N_PATCH = (IMG // PATCH) ** 2          # 16 patch tokens
N_TOK = N_PATCH + 1                    # + CLS
D_MODEL = 128       # hidden dim (CLIP-L: 1024) -- lane-dense
N_HEADS = 4
HEAD_DIM = D_MODEL // N_HEADS
FFN_DIM = 256       # (CLIP-L: 4096) -- lane-dense
N_LAYERS = 4        # (CLIP-L: 24)
SELECT_LAYERS = [-3, -2, -1]   # stand-in for [-11, -2, -1]
LN_EPS = 1e-5
K_RAW = C_IN * PATCH * PATCH   # 48
K_PAD = 128                    # zero-padded patch K dim (lane-dense)


# ----------------------------- in-kernel helpers ------------------------------
def _ln(x, g, b):
    x = x.astype(jnp.float32)
    mu = jnp.mean(x, axis=-1, keepdims=True)
    var = jnp.mean((x - mu) * (x - mu), axis=-1, keepdims=True)
    return (x - mu) * lax.rsqrt(var + LN_EPS) * g + b


# ----------------------------- fused ViT kernel -------------------------------
def _vit_kernel(sel_ref,                                   # scalar prefetch (unused in body)
                patches_ref, pw_ref, poscls_ref, preg_ref, preb_ref, bd_ref,
                ln1g_ref, ln1b_ref, wqkv_ref, bqkv_ref, wo_ref, bo_ref,
                ln2g_ref, ln2b_ref, w1_ref, b1_ref, w2_ref, b2_ref,
                out_ref, x_ref, *, n_heads, head_dim):
    """Grid = (batch_block "parallel", step "arbitrary").

    step 0              : patch matmul + (CLS+pos) add + pre-LN  -> x_ref
    step l (1..L)       : encoder layer l-1 on x_ref (resident in VMEM)
    every step          : current hidden state copied to output slot sel[step]
                          (slot 0 is a discard slot for non-selected steps).
    """
    step = pl.program_id(1)
    M, D = x_ref.shape          # M = batch_block_images * N_TOK (token-flattened)

    @pl.when(step == 0)
    def _embed():
        # CLIP's patch conv has bias=False and the CLS row of `patches` is zero,
        # so the CLS embedding is injected via the precomputed (pos + cls-row)
        # table added below.  bf16 MXU inputs, f32 accumulation.
        pe = jnp.dot(patches_ref[0].astype(jnp.bfloat16), pw_ref[...],
                     preferred_element_type=jnp.float32)                 # (M, D)
        tok = pe + poscls_ref[...]
        x_ref[...] = _ln(tok, preg_ref[...], preb_ref[...])

    @pl.when(step > 0)
    def _encoder_layer():
        x = x_ref[...]                                                   # (M, D) f32

        # ---- attention: LN1 -> fused QKV -> block-diag masked softmax(QK^T)V --
        h = _ln(x, ln1g_ref[0], ln1b_ref[0])
        qkv = jnp.dot(h.astype(jnp.bfloat16), wqkv_ref[0],
                      preferred_element_type=jnp.float32) + bqkv_ref[0]
        q = qkv[:, 0:D]            # scale already folded into wqkv host-side
        k = qkv[:, D:2 * D]        # 128-aligned lane slices
        v = qkv[:, 2 * D:3 * D]

        bd = bd_ref[...]           # (M, M): 0 within an image, -1e30 across images
        lane = lax.broadcasted_iota(jnp.int32, (1, D), 1)   # hoisted out of head loop
        attn = jnp.zeros((M, D), jnp.float32)
        # TODO(synk): at CLIP-L scale (16 heads, head_dim=64) replace this masked
        #             full-D contraction (H-fold redundant MXU work) with
        #             head-batched dots inside lax.fori_loop.
        for hh in range(n_heads):
            lo = hh * head_dim
            kmask = ((lane >= lo) & (lane < lo + head_dim)).astype(jnp.float32)
            s = lax.dot_general(q, k * kmask, (((1,), (1,)), ((), ())),
                                preferred_element_type=jnp.float32) + bd
            s = s - jnp.max(s, axis=-1, keepdims=True)
            p = jnp.exp(s)
            p = p * pl.reciprocal(jnp.sum(p, axis=-1, keepdims=True), approx=True)
            attn = attn + jnp.dot(p, v * kmask, preferred_element_type=jnp.float32)

        x = x + jnp.dot(attn.astype(jnp.bfloat16), wo_ref[0],
                        preferred_element_type=jnp.float32) + bo_ref[0]

        # ---- MLP: LN2 -> W1 -> quick-GELU -> W2 -> residual --------------------
        h2 = _ln(x, ln2g_ref[0], ln2b_ref[0])
        u = jnp.dot(h2.astype(jnp.bfloat16), w1_ref[0],
                    preferred_element_type=jnp.float32) + b1_ref[0]
        u = u * jax.nn.sigmoid(1.702 * u)      # CLIP quick_gelu (f32 on VPU/EUP)
        m = jnp.dot(u.astype(jnp.bfloat16), w2_ref[0],
                    preferred_element_type=jnp.float32) + b2_ref[0]
        x_ref[...] = x + m

    out_ref[0, 0] = x_ref[...]


# ----------------------------- pallas_call wrapper ----------------------------
def _vit_pallas(patches, prep):
    """patches: (B_img, N_TOK, K_PAD) -> (n_sel+1, B_img, N_TOK, D) hidden states."""
    B = patches.shape[0]
    D, F, L = D_MODEL, FFN_DIM, N_LAYERS
    n_sel = len(SELECT_LAYERS)

    # Batch blocking: keep >=2 "parallel" grid steps when possible so v7x's two
    # TensorCores are both used; one big block otherwise (v5e/v6e have 1 TC).
    n_bb = 2 if (B % 2 == 0 and B >= 4) else 1
    BB = B // n_bb
    M = BB * N_TOK

    # Host-side constants (static shapes; folded at trace time).
    patches_blk = patches.reshape(n_bb, M, K_PAD)
    poscls_tiled = jnp.tile(prep["pos_cls"], (BB, 1))                  # (M, D)
    img_id = jnp.arange(M, dtype=jnp.int32) // N_TOK
    bd_mask = jnp.where(img_id[:, None] == img_id[None, :], 0.0, -1e30
                        ).astype(jnp.float32)                          # (M, M)

    # Slot table: hidden_states index -> output slot (0 = discard slot).
    hs_idx = [(N_LAYERS + 1 + l) if l < 0 else l for l in SELECT_LAYERS]
    sel_np = [0] * (N_LAYERS + 1)
    for slot, idx in enumerate(hs_idx):
        sel_np[idx] = slot + 1
    sel_table = jnp.asarray(sel_np, dtype=jnp.int32)

    def cmap(rank):                 # constant (broadcast) blocks
        return lambda bi, s, sel, _r=rank: (0,) * _r
    def lmap(rank):                 # stacked per-layer blocks, selected by step
        return lambda bi, s, sel, _r=rank: (jnp.maximum(s - 1, 0),) + (0,) * _r

    in_specs = [
        pl.BlockSpec((1, M, K_PAD), lambda bi, s, sel: (bi, 0, 0)),   # patches
        pl.BlockSpec((K_PAD, D), cmap(2)),                            # patch_w (bf16)
        pl.BlockSpec((M, D), cmap(2)),                                # pos + cls (tiled)
        pl.BlockSpec((1, D), cmap(2)),                                # pre_ln_g
        pl.BlockSpec((1, D), cmap(2)),                                # pre_ln_b
        pl.BlockSpec((M, M), cmap(2)),                                # block-diag mask
        pl.BlockSpec((1, 1, D), lmap(2)),                             # ln1_g
        pl.BlockSpec((1, 1, D), lmap(2)),                             # ln1_b
        pl.BlockSpec((1, D, 3 * D), lmap(2)),                         # wqkv (bf16)
        pl.BlockSpec((1, 1, 3 * D), lmap(2)),                         # bqkv
        pl.BlockSpec((1, D, D), lmap(2)),                             # wo (bf16)
        pl.BlockSpec((1, 1, D), lmap(2)),                             # bo
        pl.BlockSpec((1, 1, D), lmap(2)),                             # ln2_g
        pl.BlockSpec((1, 1, D), lmap(2)),                             # ln2_b
        pl.BlockSpec((1, D, F), lmap(2)),                             # w1 (bf16)
        pl.BlockSpec((1, 1, F), lmap(2)),                             # b1
        pl.BlockSpec((1, F, D), lmap(2)),                             # w2 (bf16)
        pl.BlockSpec((1, 1, D), lmap(2)),                             # b2
    ]
    out_spec = pl.BlockSpec((1, 1, M, D), lambda bi, s, sel: (sel[s], bi, 0, 0))

    kern = functools.partial(_vit_kernel, n_heads=N_HEADS, head_dim=HEAD_DIM)

    # Advisory cost estimate for the whole fused call.
    flops = (2 * B * N_TOK * K_PAD * D
             + N_LAYERS * n_bb * (2 * M * D * 3 * D
                                  + N_HEADS * 4 * M * M * D
                                  + 2 * M * D * D
                                  + 4 * M * D * F))
    trans = N_LAYERS * n_bb * (N_HEADS * M * M + M * F + N_HEADS * M)
    bytes_acc = (4 * B * N_TOK * K_PAD
                 + 2 * N_LAYERS * (3 * D * D + D * D + 2 * D * F)      # bf16 weights
                 + 4 * (n_sel + 1) * B * N_TOK * D)

    out = pl.pallas_call(
        kern,
        out_shape=jax.ShapeDtypeStruct((n_sel + 1, n_bb, M, D), jnp.float32),
        grid_spec=pltpu.PrefetchScalarGridSpec(
            num_scalar_prefetch=1,
            grid=(n_bb, N_LAYERS + 1),
            in_specs=in_specs,
            out_specs=out_spec,
            scratch_shapes=[pltpu.VMEM((M, D), jnp.float32)]),
        compiler_params=pltpu.CompilerParams(
            dimension_semantics=("parallel", "arbitrary"),
            vmem_limit_bytes=32 * 1024 * 1024),
        cost_estimate=pl.CostEstimate(flops=flops, transcendentals=trans,
                                      bytes_accessed=bytes_acc),
    )(sel_table, patches_blk, prep["patch_w"], poscls_tiled,
      prep["pre_ln_g"], prep["pre_ln_b"], bd_mask,
      prep["ln1_g"], prep["ln1_b"], prep["wqkv"], prep["bqkv"],
      prep["wo"], prep["bo"], prep["ln2_g"], prep["ln2_b"],
      prep["w1"], prep["b1"], prep["w2"], prep["b2"])

    return out.reshape(n_sel + 1, B, N_TOK, D)


# ----------------------------- forward (module semantics) ---------------------
def _unfold_patches(images):
    """(B, C, H, W) -> (B, N_TOK, K_PAD); row 0 zeroed (CLS slot), K zero-padded."""
    B, c, h, w = images.shape
    P = PATCH
    nh, nw = h // P, w // P
    patches = images.reshape(B, c, nh, P, nw, P).transpose(0, 2, 4, 1, 3, 5)
    patches = patches.reshape(B, nh * nw, K_RAW)
    patches = jnp.concatenate([jnp.zeros((B, 1, K_RAW), patches.dtype), patches], 1)
    return jnp.pad(patches, ((0, 0), (0, 0), (0, K_PAD - K_RAW)))


def visual_encoder_forward(video, prep):
    """Mirrors VisualEncoder.forward: (b,t,c,h,w) -> list of (b, t*n_patch, D)."""
    b, t, c, h, w = video.shape
    B = b * t
    images = video.reshape(B, c, h, w)
    patches = _unfold_patches(images)                 # (B, N_TOK, K_PAD)
    hs = _vit_pallas(patches, prep)                   # (n_sel+1, B, N_TOK, D)

    feats = []
    for slot, _lyr in enumerate(SELECT_LAYERS):
        f = hs[slot + 1][:, 1:]                       # 'patch': drop CLS token
        feats.append(f.reshape(b, t * N_PATCH, D_MODEL))
    return feats


# ----------------------------- parameter preparation --------------------------
def prepare_params(params):
    """Stack per-layer weights along L, fold the attention scale into the Q
    projection, zero-pad the patch kernel's K dim, cast matmul weights to bf16,
    and combine pos + CLS embedding into one additive table."""
    D, F, L = D_MODEL, FFN_DIM, N_LAYERS
    scale = 1.0 / math.sqrt(HEAD_DIM)

    def stack(name):
        return jnp.stack([p[name] for p in params["layers"]])

    wqkv = stack("wqkv")                              # (L, D, 3D)
    bqkv = stack("bqkv")                              # (L, 3D)
    wqkv = wqkv.at[:, :, :D].multiply(scale)          # fold 1/sqrt(hd) into Q
    bqkv = bqkv.at[:, :D].multiply(scale)

    patch_w = jnp.pad(params["patch_w"], ((0, K_PAD - K_RAW), (0, 0)))
    cls_row = jnp.concatenate(
        [params["cls"], jnp.zeros((N_TOK - 1, D), jnp.float32)], axis=0)
    pos_cls = params["pos"] + cls_row                 # (N_TOK, D)

    return {
        "patch_w": patch_w.astype(jnp.bfloat16),
        "pos_cls": pos_cls.astype(jnp.float32),
        "pre_ln_g": params["pre_ln_g"].reshape(1, D),
        "pre_ln_b": params["pre_ln_b"].reshape(1, D),
        "ln1_g": stack("ln1_g").reshape(L, 1, D),
        "ln1_b": stack("ln1_b").reshape(L, 1, D),
        "wqkv": wqkv.astype(jnp.bfloat16),
        "bqkv": bqkv.reshape(L, 1, 3 * D),
        "wo": stack("wo").astype(jnp.bfloat16),
        "bo": stack("bo").reshape(L, 1, D),
        "ln2_g": stack("ln2_g").reshape(L, 1, D),
        "ln2_b": stack("ln2_b").reshape(L, 1, D),
        "w1": stack("w1").astype(jnp.bfloat16),
        "b1": stack("b1").reshape(L, 1, F),
        "w2": stack("w2").astype(jnp.bfloat16),
        "b2": stack("b2").reshape(L, 1, D),
    }


# ----------------------------- pure-JAX reference -----------------------------
def ref_forward(video, params):
    b, t, c, h, w = video.shape
    B = b * t
    P = PATCH
    nh, nw = h // P, w // P
    images = video.reshape(B, c, h, w)
    patches = images.reshape(B, c, nh, P, nw, P).transpose(0, 2, 4, 1, 3, 5)
    patches = patches.reshape(B, nh * nw, c * P * P)

    def ln(x, g, bb):
        mu = x.mean(-1, keepdims=True)
        var = ((x - mu) ** 2).mean(-1, keepdims=True)
        return (x - mu) * lax.rsqrt(var + LN_EPS) * g + bb

    pe = patches @ params["patch_w"]
    cls = jnp.broadcast_to(params["cls"][None], (B, 1, D_MODEL))
    tok = jnp.concatenate([cls, pe], axis=1) + params["pos"][None]
    hcur = ln(tok, params["pre_ln_g"], params["pre_ln_b"])
    hs = [hcur]
    for p in params["layers"]:
        x0 = hcur
        hln = ln(x0, p["ln1_g"], p["ln1_b"])
        qkv = hln @ p["wqkv"] + p["bqkv"]
        q, k, v = jnp.split(qkv, 3, axis=-1)
        def heads(z):
            return z.reshape(B, N_TOK, N_HEADS, HEAD_DIM).transpose(0, 2, 1, 3)
        qh, kh, vh = heads(q), heads(k), heads(v)
        s = jnp.einsum("bhqd,bhkd->bhqk", qh / math.sqrt(HEAD_DIM), kh)
        pr = jax.nn.softmax(s, axis=-1)
        o = jnp.einsum("bhqk,bhkd->bhqd", pr, vh).transpose(0, 2, 1, 3)
        o = o.reshape(B, N_TOK, D_MODEL)
        x0 = x0 + o @ p["wo"] + p["bo"]
        hln2 = ln(x0, p["ln2_g"], p["ln2_b"])
        u = hln2 @ p["w1"] + p["b1"]
        u = u * jax.nn.sigmoid(1.702 * u)
        x0 = x0 + u @ p["w2"] + p["b2"]
        hcur = x0
        hs.append(hcur)
    feats = []
    for lyr in SELECT_LAYERS:
        f = hs[lyr][:, 1:]
        feats.append(f.reshape(b, t * N_PATCH, D_MODEL))
    return feats


# ----------------------------- deterministic params ---------------------------
def init_params(key):
    def nrm(k, shape, scale=0.02):
        return scale * jax.random.normal(k, shape, dtype=jnp.float32)

    keys = jax.random.split(key, 4 + N_LAYERS)
    params = {
        "patch_w": nrm(keys[0], (K_RAW, D_MODEL)),     # conv kernel, flattened (c,pi,pj)
        "cls": nrm(keys[1], (1, D_MODEL)),
        "pos": nrm(keys[2], (N_TOK, D_MODEL)),
        "pre_ln_g": jnp.ones((D_MODEL,), jnp.float32),
        "pre_ln_b": jnp.zeros((D_MODEL,), jnp.float32),
        "layers": [],
    }
    for li in range(N_LAYERS):
        lk = jax.random.split(keys[4 + li], 4)
        params["layers"].append({
            "ln1_g": jnp.ones((D_MODEL,), jnp.float32),
            "ln1_b": jnp.zeros((D_MODEL,), jnp.float32),
            "wqkv": nrm(lk[0], (D_MODEL, 3 * D_MODEL)),   # fused q|k|v
            "bqkv": jnp.zeros((3 * D_MODEL,), jnp.float32),
            "wo": nrm(lk[1], (D_MODEL, D_MODEL)),
            "bo": jnp.zeros((D_MODEL,), jnp.float32),
            "ln2_g": jnp.ones((D_MODEL,), jnp.float32),
            "ln2_b": jnp.zeros((D_MODEL,), jnp.float32),
            "w1": nrm(lk[2], (D_MODEL, FFN_DIM)),
            "b1": jnp.zeros((FFN_DIM,), jnp.float32),
            "w2": nrm(lk[3], (FFN_DIM, D_MODEL)),
            "b2": jnp.zeros((D_MODEL,), jnp.float32),
        })
    return params


# ----------------------------- main -------------------------------------------
if __name__ == "__main__":
    key = jax.random.PRNGKey(0)
    k_video, k_params = jax.random.split(key)

    # video: (batch=2, time=2, channels=3, height=16, width=16)
    video = jax.random.normal(k_video, (2, 2, C_IN, IMG, IMG), dtype=jnp.float32)
    params = init_params(k_params)
    prep = prepare_params(params)

    fwd = jax.jit(visual_encoder_forward)
    feats = jax.block_until_ready(fwd(video, prep))

    ref = ref_forward(video, params)
    assert len(feats) == len(SELECT_LAYERS)
    for f, r in zip(feats, ref):
        assert f.shape == (2, 2 * N_PATCH, D_MODEL), f.shape
        assert bool(jnp.all(jnp.isfinite(f)))
        err = float(jnp.max(jnp.abs(f - r)))
        assert err < 2e-2, f"mismatch vs reference: {err}"
    print("KERNEL_OK")
</pallas_src>

<mosaic_0001>
module attributes {stable_mosaic.version = 11 : i64} {
  func.func @_vit_kernel(%arg0: i32, %arg1: i32, %arg2: memref<5xi32, #tpu.memory_space<smem>>, %arg3: memref<1x34x128xf32, #tpu.memory_space<vmem>>, %arg4: memref<128x128xbf16, #tpu.memory_space<vmem>>, %arg5: memref<34x128xf32, #tpu.memory_space<vmem>>, %arg6: memref<1x128xf32, #tpu.memory_space<vmem>>, %arg7: memref<1x128xf32, #tpu.memory_space<vmem>>, %arg8: memref<34x34xf32, #tpu.memory_space<vmem>>, %arg9: memref<1x1x128xf32, #tpu.memory_space<vmem>>, %arg10: memref<1x1x128xf32, #tpu.memory_space<vmem>>, %arg11: memref<1x128x384xbf16, #tpu.memory_space<vmem>>, %arg12: memref<1x1x384xf32, #tpu.memory_space<vmem>>, %arg13: memref<1x128x128xbf16, #tpu.memory_space<vmem>>, %arg14: memref<1x1x128xf32, #tpu.memory_space<vmem>>, %arg15: memref<1x1x128xf32, #tpu.memory_space<vmem>>, %arg16: memref<1x1x128xf32, #tpu.memory_space<vmem>>, %arg17: memref<1x128x256xbf16, #tpu.memory_space<vmem>>, %arg18: memref<1x1x256xf32, #tpu.memory_space<vmem>>, %arg19: memref<1x256x128xbf16, #tpu.memory_space<vmem>>, %arg20: memref<1x1x128xf32, #tpu.memory_space<vmem>>, %arg21: memref<1x1x34x128xf32, #tpu.memory_space<vmem>>, %arg22: memref<34x128xf32, #tpu.memory_space<vmem>>) attributes {dimension_semantics = [#tpu.dimension_semantics<parallel>, #tpu.dimension_semantics<arbitrary>], iteration_bounds = array<i64: 2, 5>, scalar_prefetch = 1 : i64, scratch_operands = 1 : i64, tpu.core_type = #tpu.core_type<tc>, window_params = [{transform_indices = @transform_0, window_bounds = array<i64: 1, 34, 128>}, {pipeline_mode = #tpu.pipeline_mode<synchronous>, transform_indices = @transform_1, window_bounds = array<i64: 128, 128>}, {pipeline_mode = #tpu.pipeline_mode<synchronous>, transform_indices = @transform_2, window_bounds = array<i64: 34, 128>}, {pipeline_mode = #tpu.pipeline_mode<synchronous>, transform_indices = @transform_3, window_bounds = array<i64: 1, 128>}, {pipeline_mode = #tpu.pipeline_mode<synchronous>, transform_indices = @transform_4, window_bounds = array<i64: 1, 128>}, {pipeline_mode = #tpu.pipeline_mode<synchronous>, transform_indices = @transform_5, window_bounds = array<i64: 34, 34>}, {transform_indices = @transform_6, window_bounds = array<i64: 1, 1, 128>}, {transform_indices = @transform_7, window_bounds = array<i64: 1, 1, 128>}, {transform_indices = @transform_8, window_bounds = array<i64: 1, 128, 384>}, {transform_indices = @transform_9, window_bounds = array<i64: 1, 1, 384>}, {transform_indices = @transform_10, window_bounds = array<i64: 1, 128, 128>}, {transform_indices = @transform_11, window_bounds = array<i64: 1, 1, 128>}, {transform_indices = @transform_12, window_bounds = array<i64: 1, 1, 128>}, {transform_indices = @transform_13, window_bounds = array<i64: 1, 1, 128>}, {transform_indices = @transform_14, window_bounds = array<i64: 1, 128, 256>}, {transform_indices = @transform_15, window_bounds = array<i64: 1, 1, 256>}, {transform_indices = @transform_16, window_bounds = array<i64: 1, 256, 128>}, {transform_indices = @transform_17, window_bounds = array<i64: 1, 1, 128>}, {transform_indices = @transform_18, window_bounds = array<i64: 1, 1, 34, 128>}]} {
    %c0_i32 = arith.constant 0 : i32
    %0 = arith.cmpi eq, %arg1, %c0_i32 : i32
    %1 = arith.extui %0 : i1 to i32
    %c0_i32_0 = arith.constant 0 : i32
    %2 = arith.cmpi ne, %1, %c0_i32_0 : i32
    scf.if %2 {
      %c0_8 = arith.constant 0 : index
      %c0_9 = arith.constant 0 : index
      %c0_10 = arith.constant 0 : index
      %10 = vector.load %arg3[%c0_8, %c0_9, %c0_10] : memref<1x34x128xf32, #tpu.memory_space<vmem>>, vector<1x34x128xf32>
      %11 = vector.shape_cast %10 : vector<1x34x128xf32> to vector<34x128xf32>
      %12 = arith.truncf %11 : vector<34x128xf32> to vector<34x128xbf16>
      %c0_11 = arith.constant 0 : index
      %c0_12 = arith.constant 0 : index
      %13 = vector.load %arg4[%c0_11, %c0_12] : memref<128x128xbf16, #tpu.memory_space<vmem>>, vector<128x128xbf16>
      %cst = arith.constant dense<0.000000e+00> : vector<34x128xf32>
      %14 = tpu.matmul %12, %13, %cst {dimension_numbers = #tpu.dot_dimension_numbers<[1], [0], [0], [1], [0, 0, 1, 1], [], []>} : vector<34x128xbf16>, vector<128x128xbf16>, vector<34x128xf32> -> vector<34x128xf32>
      %c0_13 = arith.constant 0 : index
      %c0_14 = arith.constant 0 : index
      %15 = vector.load %arg5[%c0_13, %c0_14] : memref<34x128xf32, #tpu.memory_space<vmem>>, vector<34x128xf32>
      %16 = arith.addf %14, %15 : vector<34x128xf32>
      %c0_15 = arith.constant 0 : index
      %c0_16 = arith.constant 0 : index
      %17 = vector.load %arg6[%c0_15, %c0_16] : memref<1x128xf32, #tpu.memory_space<vmem>>, vector<1x128xf32>
      %c0_17 = arith.constant 0 : index
      %c0_18 = arith.constant 0 : index
      %18 = vector.load %arg7[%c0_17, %c0_18] : memref<1x128xf32, #tpu.memory_space<vmem>>, vector<1x128xf32>
      %cst_19 = arith.constant dense<0.000000e+00> : vector<34xf32>
      %19 = vector.multi_reduction <add>, %16, %cst_19 [1] : vector<34x128xf32> to vector<34xf32>
      %20 = vector.shape_cast %19 : vector<34xf32> to vector<34x1xf32>
      %cst_20 = arith.constant 1.280000e+02 : f32
      %21 = vector.broadcast %cst_20 : f32 to vector<34x1xf32>
      %22 = arith.divf %20, %21 : vector<34x1xf32>
      %23 = vector.broadcast %22 : vector<34x1xf32> to vector<34x128xf32>
      %24 = arith.subf %16, %23 : vector<34x128xf32>
      %25 = vector.broadcast %22 : vector<34x1xf32> to vector<34x128xf32>
      %26 = arith.subf %16, %25 : vector<34x128xf32>
      %27 = arith.mulf %24, %26 : vector<34x128xf32>
      %cst_21 = arith.constant dense<0.000000e+00> : vector<34xf32>
      %28 = vector.multi_reduction <add>, %27, %cst_21 [1] : vector<34x128xf32> to vector<34xf32>
      %29 = vector.shape_cast %28 : vector<34xf32> to vector<34x1xf32>
      %cst_22 = arith.constant 1.280000e+02 : f32
      %30 = vector.broadcast %cst_22 : f32 to vector<34x1xf32>
      %31 = arith.divf %29, %30 : vector<34x1xf32>
      %32 = vector.broadcast %22 : vector<34x1xf32> to vector<34x128xf32>
      %33 = arith.subf %16, %32 : vector<34x128xf32>
      %cst_23 = arith.constant 9.99999974E-6 : f32
      %34 = vector.broadcast %cst_23 : f32 to vector<34x1xf32>
      %35 = arith.addf %31, %34 : vector<34x1xf32>
      %36 = math.rsqrt %35 : vector<34x1xf32>
      %37 = vector.broadcast %36 : vector<34x1xf32> to vector<34x128xf32>
      %38 = arith.mulf %33, %37 : vector<34x128xf32>
      %39 = vector.broadcast %17 : vector<1x128xf32> to vector<34x128xf32>
      %40 = arith.mulf %38, %39 : vector<34x128xf32>
      %41 = vector.broadcast %18 : vector<1x128xf32> to vector<34x128xf32>
      %42 = arith.addf %40, %41 : vector<34x128xf32>
      %c0_24 = arith.constant 0 : index
      %c0_25 = arith.constant 0 : index
      %43 = vector.load %arg22[%c0_24, %c0_25] : memref<34x128xf32, #tpu.memory_space<vmem>>, vector<34x128xf32>
      tpu.vector_store %arg22[%c0_24, %c0_25], %42 {strides = array<i32>} : memref<34x128xf32, #tpu.memory_space<vmem>>, vector<34x128xf32>,
    } else {
    }
    %c0_i32_1 = arith.constant 0 : i32
    %3 = arith.cmpi sgt, %arg1, %c0_i32_1 : i32
    %4 = arith.extui %3 : i1 to i32
    %c0_i32_2 = arith.constant 0 : i32
    %5 = arith.cmpi ne, %4, %c0_i32_2 : i32
    scf.if %5 {
      %c0_8 = arith.constant 0 : index
      %c0_9 = arith.constant 0 : index
      %10 = vector.load %arg22[%c0_8, %c0_9] : memref<34x128xf32, #tpu.memory_space<vmem>>, vector<34x128xf32>
      %c0_10 = arith.constant 0 : index
      %c0_11 = arith.constant 0 : index
      %c0_12 = arith.constant 0 : index
      %11 = vector.load %arg9[%c0_10, %c0_11, %c0_12] : memref<1x1x128xf32, #tpu.memory_space<vmem>>, vector<1x1x128xf32>
      %12 = vector.shape_cast %11 : vector<1x1x128xf32> to vector<1x128xf32>
      %c0_13 = arith.constant 0 : index
      %c0_14 = arith.constant 0 : index
      %c0_15 = arith.constant 0 : index
      %13 = vector.load %arg10[%c0_13, %c0_14, %c0_15] : memref<1x1x128xf32, #tpu.memory_space<vmem>>, vector<1x1x128xf32>
      %14 = vector.shape_cast %13 : vector<1x1x128xf32> to vector<1x128xf32>
      %cst = arith.constant dense<0.000000e+00> : vector<34xf32>
      %15 = vector.multi_reduction <add>, %10, %cst [1] : vector<34x128xf32> to vector<34xf32>
      %16 = vector.shape_cast %15 : vector<34xf32> to vector<34x1xf32>
      %cst_16 = arith.constant 1.280000e+02 : f32
      %17 = vector.broadcast %cst_16 : f32 to vector<34x1xf32>
      %18 = arith.divf %16, %17 : vector<34x1xf32>
      %19 = vector.broadcast %18 : vector<34x1xf32> to vector<34x128xf32>
      %20 = arith.subf %10, %19 : vector<34x128xf32>
      %21 = vector.broadcast %18 : vector<34x1xf32> to vector<34x128xf32>
      %22 = arith.subf %10, %21 : vector<34x128xf32>
      %23 = arith.mulf %20, %22 : vector<34x128xf32>
      %cst_17 = arith.constant dense<0.000000e+00> : vector<34xf32>
      %24 = vector.multi_reduction <add>, %23, %cst_17 [1] : vector<34x128xf32> to vector<34xf32>
      %25 = vector.shape_cast %24 : vector<34xf32> to vector<34x1xf32>
      %cst_18 = arith.constant 1.280000e+02 : f32
      %26 = vector.broadcast %cst_18 : f32 to vector<34x1xf32>
      %27 = arith.divf %25, %26 : vector<34x1xf32>
      %28 = vector.broadcast %18 : vector<34x1xf32> to vector<34x128xf32>
      %29 = arith.subf %10, %28 : vector<34x128xf32>
      %cst_19 = arith.constant 9.99999974E-6 : f32
      %30 = vector.broadcast %cst_19 : f32 to vector<34x1xf32>
      %31 = arith.addf %27, %30 : vector<34x1xf32>
      %32 = math.rsqrt %31 : vector<34x1xf32>
      %33 = vector.broadcast %32 : vector<34x1xf32> to vector<34x128xf32>
      %34 = arith.mulf %29, %33 : vector<34x128xf32>
      %35 = vector.broadcast %12 : vector<1x128xf32> to vector<34x128xf32>
      %36 = arith.mulf %34, %35 : vector<34x128xf32>
      %37 = vector.broadcast %14 : vector<1x128xf32> to vector<34x128xf32>
      %38 = arith.addf %36, %37 : vector<34x128xf32>
      %39 = arith.truncf %38 : vector<34x128xf32> to vector<34x128xbf16>
      %c0_20 = arith.constant 0 : index
      %c0_21 = arith.constant 0 : index
      %c0_22 = arith.constant 0 : index
      %40 = vector.load %arg11[%c0_20, %c0_21, %c0_22] : memref<1x128x384xbf16, #tpu.memory_space<vmem>>, vector<1x128x384xbf16>
      %41 = vector.shape_cast %40 : vector<1x128x384xbf16> to vector<128x384xbf16>
      %cst_23 = arith.constant dense<0.000000e+00> : vector<34x384xf32>
      %42 = tpu.matmul %39, %41, %cst_23 {dimension_numbers = #tpu.dot_dimension_numbers<[1], [0], [0], [1], [0, 0, 1, 1], [], []>} : vector<34x128xbf16>, vector<128x384xbf16>, vector<34x384xf32> -> vector<34x384xf32>
      %c0_24 = arith.constant 0 : index
      %c0_25 = arith.constant 0 : index
      %c0_26 = arith.constant 0 : index
      %43 = vector.load %arg12[%c0_24, %c0_25, %c0_26] : memref<1x1x384xf32, #tpu.memory_space<vmem>>, vector<1x1x384xf32>
      %44 = vector.shape_cast %43 : vector<1x1x384xf32> to vector<1x384xf32>
      %45 = vector.broadcast %44 : vector<1x384xf32> to vector<34x384xf32>
      %46 = arith.addf %42, %45 : vector<34x384xf32>
      %47 = vector.extract_strided_slice %46 {offsets = [0, 0], sizes = [34, 128], strides = [1, 1]} : vector<34x384xf32> to vector<34x128xf32>
      %48 = vector.extract_strided_slice %46 {offsets = [0, 128], sizes = [34, 128], strides = [1, 1]} : vector<34x384xf32> to vector<34x128xf32>
      %49 = vector.extract_strided_slice %46 {offsets = [0, 256], sizes = [34, 128], strides = [1, 1]} : vector<34x384xf32> to vector<34x128xf32>
      %c0_27 = arith.constant 0 : index
      %c0_28 = arith.constant 0 : index
      %50 = vector.load %arg8[%c0_27, %c0_28] : memref<34x34xf32, #tpu.memory_space<vmem>>, vector<34x34xf32>
      %51 = tpu.iota {dimensions = array<i32: 1>} : vector<1x128xi32>
      %cst_29 = arith.constant 0.000000e+00 : f32
      %52 = vector.broadcast %cst_29 : f32 to vector<34x128xf32>
      %c0_i32_30 = arith.constant 0 : i32
      %53 = vector.broadcast %c0_i32_30 : i32 to vector<1x128xi32>
      %54 = arith.cmpi sge, %51, %53 : vector<1x128xi32>
      %c32_i32 = arith.constant 32 : i32
      %55 = vector.broadcast %c32_i32 : i32 to vector<1x128xi32>
      %56 = arith.cmpi slt, %51, %55 : vector<1x128xi32>
      %57 = arith.andi %54, %56 : vector<1x128xi1>
      %58 = arith.extui %57 : vector<1x128xi1> to vector<1x128xi32>
      %59 = arith.sitofp %58 : vector<1x128xi32> to vector<1x128xf32>
      %60 = vector.broadcast %59 : vector<1x128xf32> to vector<34x128xf32>
      %61 = arith.mulf %48, %60 : vector<34x128xf32>
      %cst_31 = arith.constant dense<0.000000e+00> : vector<34x34xf32>
      %62 = tpu.matmul %47, %61, %cst_31 {dimension_numbers = #tpu.dot_dimension_numbers<[1], [1], [0], [0], [0, 0, 1, 0], [], []>} : vector<34x128xf32>, vector<34x128xf32>, vector<34x34xf32> -> vector<34x34xf32>
      %63 = arith.addf %62, %50 : vector<34x34xf32>
      %cst_32 = arith.constant dense<0xFF800000> : vector<34xf32>
      %64 = vector.multi_reduction <maximumf>, %63, %cst_32 [1] : vector<34x34xf32> to vector<34xf32>
      %65 = vector.shape_cast %64 : vector<34xf32> to vector<34x1xf32>
      %66 = vector.broadcast %65 : vector<34x1xf32> to vector<34x34xf32>
      %67 = arith.subf %63, %66 : vector<34x34xf32>
      %68 = math.exp %67 : vector<34x34xf32>
      %cst_33 = arith.constant dense<0.000000e+00> : vector<34xf32>
      %69 = vector.multi_reduction <add>, %68, %cst_33 [1] : vector<34x34xf32> to vector<34xf32>
      %70 = vector.shape_cast %69 : vector<34xf32> to vector<34x1xf32>
      %71 = tpu.reciprocal %70 {approx = true} : vector<34x1xf32> -> vector<34x1xf32>
      %72 = vector.broadcast %71 : vector<34x1xf32> to vector<34x34xf32>
      %73 = arith.mulf %68, %72 : vector<34x34xf32>
      %74 = vector.broadcast %59 : vector<1x128xf32> to vector<34x128xf32>
      %75 = arith.mulf %49, %74 : vector<34x128xf32>
      %cst_34 = arith.constant dense<0.000000e+00> : vector<34x128xf32>
      %76 = tpu.matmul %73, %75, %cst_34 {dimension_numbers = #tpu.dot_dimension_numbers<[1], [0], [0], [1], [0, 0, 1, 1], [], []>} : vector<34x34xf32>, vector<34x128xf32>, vector<34x128xf32> -> vector<34x128xf32>
      %77 = arith.addf %52, %76 : vector<34x128xf32>
      %c32_i32_35 = arith.constant 32 : i32
      %78 = vector.broadcast %c32_i32_35 : i32 to vector<1x128xi32>
      %79 = arith.cmpi sge, %51, %78 : vector<1x128xi32>
      %c64_i32 = arith.constant 64 : i32
      %80 = vector.broadcast %c64_i32 : i32 to vector<1x128xi32>
      %81 = arith.cmpi slt, %51, %80 : vector<1x128xi32>
      %82 = arith.andi %79, %81 : vector<1x128xi1>
      %83 = arith.extui %82 : vector<1x128xi1> to vector<1x128xi32>
      %84 = arith.sitofp %83 : vector<1x128xi32> to vector<1x128xf32>
      %85 = vector.broadcast %84 : vector<1x128xf32> to vector<34x128xf32>
      %86 = arith.mulf %48, %85 : vector<34x128xf32>
      %cst_36 = arith.constant dense<0.000000e+00> : vector<34x34xf32>
      %87 = tpu.matmul %47, %86, %cst_36 {dimension_numbers = #tpu.dot_dimension_numbers<[1], [1], [0], [0], [0, 0, 1, 0], [], []>} : vector<34x128xf32>, vector<34x128xf32>, vector<34x34xf32> -> vector<34x34xf32>
      %88 = arith.addf %87, %50 : vector<34x34xf32>
      %cst_37 = arith.constant dense<0xFF800000> : vector<34xf32>
      %89 = vector.multi_reduction <maximumf>, %88, %cst_37 [1] : vector<34x34xf32> to vector<34xf32>
      %90 = vector.shape_cast %89 : vector<34xf32> to vector<34x1xf32>
      %91 = vector.broadcast %90 : vector<34x1xf32> to vector<34x34xf32>
      %92 = arith.subf %88, %91 : vector<34x34xf32>
      %93 = math.exp %92 : vector<34x34xf32>
      %cst_38 = arith.constant dense<0.000000e+00> : vector<34xf32>
      %94 = vector.multi_reduction <add>, %93, %cst_38 [1] : vector<34x34xf32> to vector<34xf32>
      %95 = vector.shape_cast %94 : vector<34xf32> to vector<34x1xf32>
      %96 = tpu.reciprocal %95 {approx = true} : vector<34x1xf32> -> vector<34x1xf32>
      %97 = vector.broadcast %96 : vector<34x1xf32> to vector<34x34xf32>
      %98 = arith.mulf %93, %97 : vector<34x34xf32>
      %99 = vector.broadcast %84 : vector<1x128xf32> to vector<34x128xf32>
      %100 = arith.mulf %49, %99 : vector<34x128xf32>
      %cst_39 = arith.constant dense<0.000000e+00> : vector<34x128xf32>
      %101 = tpu.matmul %98, %100, %cst_39 {dimension_numbers = #tpu.dot_dimension_numbers<[1], [0], [0], [1], [0, 0, 1, 1], [], []>} : vector<34x34xf32>, vector<34x128xf32>, vector<34x128xf32> -> vector<34x128xf32>
      %102 = arith.addf %77, %101 : vector<34x128xf32>
      %c64_i32_40 = arith.constant 64 : i32
      %103 = vector.broadcast %c64_i32_40 : i32 to vector<1x128xi32>
      %104 = arith.cmpi sge, %51, %103 : vector<1x128xi32>
      %c96_i32 = arith.constant 96 : i32
      %105 = vector.broadcast %c96_i32 : i32 to vector<1x128xi32>
      %106 = arith.cmpi slt, %51, %105 : vector<1x128xi32>
      %107 = arith.andi %104, %106 : vector<1x128xi1>
      %108 = arith.extui %107 : vector<1x128xi1> to vector<1x128xi32>
      %109 = arith.sitofp %108 : vector<1x128xi32> to vector<1x128xf32>
      %110 = vector.broadcast %109 : vector<1x128xf32> to vector<34x128xf32>
      %111 = arith.mulf %48, %110 : vector<34x128xf32>
      %cst_41 = arith.constant dense<0.000000e+00> : vector<34x34xf32>
      %112 = tpu.matmul %47, %111, %cst_41 {dimension_numbers = #tpu.dot_dimension_numbers<[1], [1], [0], [0], [0, 0, 1, 0], [], []>} : vector<34x128xf32>, vector<34x128xf32>, vector<34x34xf32> -> vector<34x34xf32>
      %113 = arith.addf %112, %50 : vector<34x34xf32>
      %cst_42 = arith.constant dense<0xFF800000> : vector<34xf32>
      %114 = vector.multi_reduction <maximumf>, %113, %cst_42 [1] : vector<34x34xf32> to vector<34xf32>
      %115 = vector.shape_cast %114 : vector<34xf32> to vector<34x1xf32>
      %116 = vector.broadcast %115 : vector<34x1xf32> to vector<34x34xf32>
      %117 = arith.subf %113, %116 : vector<34x34xf32>
      %118 = math.exp %117 : vector<34x34xf32>
      %cst_43 = arith.constant dense<0.000000e+00> : vector<34xf32>
      %119 = vector.multi_reduction <add>, %118, %cst_43 [1] : vector<34x34xf32> to vector<34xf32>
      %120 = vector.shape_cast %119 : vector<34xf32> to vector<34x1xf32>
      %121 = tpu.reciprocal %120 {approx = true} : vector<34x1xf32> -> vector<34x1xf32>
      %122 = vector.broadcast %121 : vector<34x1xf32> to vector<34x34xf32>
      %123 = arith.mulf %118, %122 : vector<34x34xf32>
      %124 = vector.broadcast %109 : vector<1x128xf32> to vector<34x128xf32>
      %125 = arith.mulf %49, %124 : vector<34x128xf32>
      %cst_44 = arith.constant dense<0.000000e+00> : vector<34x128xf32>
      %126 = tpu.matmul %123, %125, %cst_44 {dimension_numbers = #tpu.dot_dimension_numbers<[1], [0], [0], [1], [0, 0, 1, 1], [], []>} : vector<34x34xf32>, vector<34x128xf32>, vector<34x128xf32> -> vector<34x128xf32>
      %127 = arith.addf %102, %126 : vector<34x128xf32>
      %c96_i32_45 = arith.constant 96 : i32
      %128 = vector.broadcast %c96_i32_45 : i32 to vector<1x128xi32>
      %129 = arith.cmpi sge, %51, %128 : vector<1x128xi32>
      %c128_i32 = arith.constant 128 : i32
      %130 = vector.broadcast %c128_i32 : i32 to vector<1x128xi32>
      %131 = arith.cmpi slt, %51, %130 : vector<1x128xi32>
      %132 = arith.andi %129, %131 : vector<1x128xi1>
      %133 = arith.extui %132 : vector<1x128xi1> to vector<1x128xi32>
      %134 = arith.sitofp %133 : vector<1x128xi32> to vector<1x128xf32>
      %135 = vector.broadcast %134 : vector<1x128xf32> to vector<34x128xf32>
      %136 = arith.mulf %48, %135 : vector<34x128xf32>
      %cst_46 = arith.constant dense<0.000000e+00> : vector<34x34xf32>
      %137 = tpu.matmul %47, %136, %cst_46 {dimension_numbers = #tpu.dot_dimension_numbers<[1], [1], [0], [0], [0, 0, 1, 0], [], []>} : vector<34x128xf32>, vector<34x128xf32>, vector<34x34xf32> -> vector<34x34xf32>
      %138 = arith.addf %137, %50 : vector<34x34xf32>
      %cst_47 = arith.constant dense<0xFF800000> : vector<34xf32>
      %139 = vector.multi_reduction <maximumf>, %138, %cst_47 [1] : vector<34x34xf32> to vector<34xf32>
      %140 = vector.shape_cast %139 : vector<34xf32> to vector<34x1xf32>
      %141 = vector.broadcast %140 : vector<34x1xf32> to vector<34x34xf32>
      %142 = arith.subf %138, %141 : vector<34x34xf32>
      %143 = math.exp %142 : vector<34x34xf32>
      %cst_48 = arith.constant dense<0.000000e+00> : vector<34xf32>
      %144 = vector.multi_reduction <add>, %143, %cst_48 [1] : vector<34x34xf32> to vector<34xf32>
      %145 = vector.shape_cast %144 : vector<34xf32> to vector<34x1xf32>
      %146 = tpu.reciprocal %145 {approx = true} : vector<34x1xf32> -> vector<34x1xf32>
      %147 = vector.broadcast %146 : vector<34x1xf32> to vector<34x34xf32>
      %148 = arith.mulf %143, %147 : vector<34x34xf32>
      %149 = vector.broadcast %134 : vector<1x128xf32> to vector<34x128xf32>
      %150 = arith.mulf %49, %149 : vector<34x128xf32>
      %cst_49 = arith.constant dense<0.000000e+00> : vector<34x128xf32>
      %151 = tpu.matmul %148, %150, %cst_49 {dimension_numbers = #tpu.dot_dimension_numbers<[1], [0], [0], [1], [0, 0, 1, 1], [], []>} : vector<34x34xf32>, vector<34x128xf32>, vector<34x128xf32> -> vector<34x128xf32>
      %152 = arith.addf %127, %151 : vector<34x128xf32>
      %153 = arith.truncf %152 : vector<34x128xf32> to vector<34x128xbf16>
      %c0_50 = arith.constant 0 : index
      %c0_51 = arith.constant 0 : index
      %c0_52 = arith.constant 0 : index
      %154 = vector.load %arg13[%c0_50, %c0_51, %c0_52] : memref<1x128x128xbf16, #tpu.memory_space<vmem>>, vector<1x128x128xbf16>
      %155 = vector.shape_cast %154 : vector<1x128x128xbf16> to vector<128x128xbf16>
      %cst_53 = arith.constant dense<0.000000e+00> : vector<34x128xf32>
      %156 = tpu.matmul %153, %155, %cst_53 {dimension_numbers = #tpu.dot_dimension_numbers<[1], [0], [0], [1], [0, 0, 1, 1], [], []>} : vector<34x128xbf16>, vector<128x128xbf16>, vector<34x128xf32> -> vector<34x128xf32>
      %157 = arith.addf %10, %156 : vector<34x128xf32>
      %c0_54 = arith.constant 0 : index
      %c0_55 = arith.constant 0 : index
      %c0_56 = arith.constant 0 : index
      %158 = vector.load %arg14[%c0_54, %c0_55, %c0_56] : memref<1x1x128xf32, #tpu.memory_space<vmem>>, vector<1x1x128xf32>
      %159 = vector.shape_cast %158 : vector<1x1x128xf32> to vector<1x128xf32>
      %160 = vector.broadcast %159 : vector<1x128xf32> to vector<34x128xf32>
      %161 = arith.addf %157, %160 : vector<34x128xf32>
      %c0_57 = arith.constant 0 : index
      %c0_58 = arith.constant 0 : index
      %c0_59 = arith.constant 0 : index
      %162 = vector.load %arg15[%c0_57, %c0_58, %c0_59] : memref<1x1x128xf32, #tpu.memory_space<vmem>>, vector<1x1x128xf32>
      %163 = vector.shape_cast %162 : vector<1x1x128xf32> to vector<1x128xf32>
      %c0_60 = arith.constant 0 : index
      %c0_61 = arith.constant 0 : index
      %c0_62 = arith.constant 0 : index
      %164 = vector.load %arg16[%c0_60, %c0_61, %c0_62] : memref<1x1x128xf32, #tpu.memory_space<vmem>>, vector<1x1x128xf32>
      %165 = vector.shape_cast %164 : vector<1x1x128xf32> to vector<1x128xf32>
      %cst_63 = arith.constant dense<0.000000e+00> : vector<34xf32>
      %166 = vector.multi_reduction <add>, %161, %cst_63 [1] : vector<34x128xf32> to vector<34xf32>
      %167 = vector.shape_cast %166 : vector<34xf32> to vector<34x1xf32>
      %cst_64 = arith.constant 1.280000e+02 : f32
      %168 = vector.broadcast %cst_64 : f32 to vector<34x1xf32>
      %169 = arith.divf %167, %168 : vector<34x1xf32>
      %170 = vector.broadcast %169 : vector<34x1xf32> to vector<34x128xf32>
      %171 = arith.subf %161, %170 : vector<34x128xf32>
      %172 = vector.broadcast %169 : vector<34x1xf32> to vector<34x128xf32>
      %173 = arith.subf %161, %172 : vector<34x128xf32>
      %174 = arith.mulf %171, %173 : vector<34x128xf32>
      %cst_65 = arith.constant dense<0.000000e+00> : vector<34xf32>
      %175 = vector.multi_reduction <add>, %174, %cst_65 [1] : vector<34x128xf32> to vector<34xf32>
      %176 = vector.shape_cast %175 : vector<34xf32> to vector<34x1xf32>
      %cst_66 = arith.constant 1.280000e+02 : f32
      %177 = vector.broadcast %cst_66 : f32 to vector<34x1xf32>
      %178 = arith.divf %176, %177 : vector<34x1xf32>
      %179 = vector.broadcast %169 : vector<34x1xf32> to vector<34x128xf32>
      %180 = arith.subf %161, %179 : vector<34x128xf32>
      %cst_67 = arith.constant 9.99999974E-6 : f32
      %181 = vector.broadcast %cst_67 : f32 to vector<34x1xf32>
      %182 = arith.addf %178, %181 : vector<34x1xf32>
      %183 = math.rsqrt %182 : vector<34x1xf32>
      %184 = vector.broadcast %183 : vector<34x1xf32> to vector<34x128xf32>
      %185 = arith.mulf %180, %184 : vector<34x128xf32>
      %186 = vector.broadcast %163 : vector<1x128xf32> to vector<34x128xf32>
      %187 = arith.mulf %185, %186 : vector<34x128xf32>
      %188 = vector.broadcast %165 : vector<1x128xf32> to vector<34x128xf32>
      %189 = arith.addf %187, %188 : vector<34x128xf32>
      %190 = arith.truncf %189 : vector<34x128xf32> to vector<34x128xbf16>
      %c0_68 = arith.constant 0 : index
      %c0_69 = arith.constant 0 : index
      %c0_70 = arith.constant 0 : index
      %191 = vector.load %arg17[%c0_68, %c0_69, %c0_70] : memref<1x128x256xbf16, #tpu.memory_space<vmem>>, vector<1x128x256xbf16>
      %192 = vector.shape_cast %191 : vector<1x128x256xbf16> to vector<128x256xbf16>
      %cst_71 = arith.constant dense<0.000000e+00> : vector<34x256xf32>
      %193 = tpu.matmul %190, %192, %cst_71 {dimension_numbers = #tpu.dot_dimension_numbers<[1], [0], [0], [1], [0, 0, 1, 1], [], []>} : vector<34x128xbf16>, vector<128x256xbf16>, vector<34x256xf32> -> vector<34x256xf32>
      %c0_72 = arith.constant 0 : index
      %c0_73 = arith.constant 0 : index
      %c0_74 = arith.constant 0 : index
      %194 = vector.load %arg18[%c0_72, %c0_73, %c0_74] : memref<1x1x256xf32, #tpu.memory_space<vmem>>, vector<1x1x256xf32>
      %195 = vector.shape_cast %194 : vector<1x1x256xf32> to vector<1x256xf32>
      %196 = vector.broadcast %195 : vector<1x256xf32> to vector<34x256xf32>
      %197 = arith.addf %193, %196 : vector<34x256xf32>
      %cst_75 = arith.constant 1.702000e+00 : f32
      %198 = vector.broadcast %cst_75 : f32 to vector<34x256xf32>
      %199 = arith.mulf %198, %197 : vector<34x256xf32>
      %200 = arith.negf %199 : vector<34x256xf32>
      %201 = math.exp %200 : vector<34x256xf32>
      %cst_76 = arith.constant 1.000000e+00 : f32
      %202 = vector.broadcast %cst_76 : f32 to vector<34x256xf32>
      %203 = arith.addf %202, %201 : vector<34x256xf32>
      %204 = arith.divf %202, %203 : vector<34x256xf32>
      %205 = arith.mulf %197, %204 : vector<34x256xf32>
      %206 = arith.truncf %205 : vector<34x256xf32> to vector<34x256xbf16>
      %c0_77 = arith.constant 0 : index
      %c0_78 = arith.constant 0 : index
      %c0_79 = arith.constant 0 : index
      %207 = vector.load %arg19[%c0_77, %c0_78, %c0_79] : memref<1x256x128xbf16, #tpu.memory_space<vmem>>, vector<1x256x128xbf16>
      %208 = vector.shape_cast %207 : vector<1x256x128xbf16> to vector<256x128xbf16>
      %cst_80 = arith.constant dense<0.000000e+00> : vector<34x128xf32>
      %209 = tpu.matmul %206, %208, %cst_80 {dimension_numbers = #tpu.dot_dimension_numbers<[1], [0], [0], [1], [0, 0, 1, 1], [], []>} : vector<34x256xbf16>, vector<256x128xbf16>, vector<34x128xf32> -> vector<34x128xf32>
      %c0_81 = arith.constant 0 : index
      %c0_82 = arith.constant 0 : index
      %c0_83 = arith.constant 0 : index
      %210 = vector.load %arg20[%c0_81, %c0_82, %c0_83] : memref<1x1x128xf32, #tpu.memory_space<vmem>>, vector<1x1x128xf32>
      %211 = vector.shape_cast %210 : vector<1x1x128xf32> to vector<1x128xf32>
      %212 = vector.broadcast %211 : vector<1x128xf32> to vector<34x128xf32>
      %213 = arith.addf %209, %212 : vector<34x128xf32>
      %214 = arith.addf %161, %213 : vector<34x128xf32>
      %c0_84 = arith.constant 0 : index
      %c0_85 = arith.constant 0 : index
      %215 = vector.load %arg22[%c0_84, %c0_85] : memref<34x128xf32, #tpu.memory_space<vmem>>, vector<34x128xf32>
      tpu.vector_store %arg22[%c0_84, %c0_85], %214 {strides = array<i32>} : memref<34x128xf32, #tpu.memory_space<vmem>>, vector<34x128xf32>,
    } else {
    }
    %c0 = arith.constant 0 : index
    %c0_3 = arith.constant 0 : index
    %6 = vector.load %arg22[%c0, %c0_3] : memref<34x128xf32, #tpu.memory_space<vmem>>, vector<34x128xf32>
    %c0_4 = arith.constant 0 : index
    %c0_5 = arith.constant 0 : index
    %c0_6 = arith.constant 0 : index
    %c0_7 = arith.constant 0 : index
    %7 = vector.load %arg21[%c0_4, %c0_5, %c0_6, %c0_7] : memref<1x1x34x128xf32, #tpu.memory_space<vmem>>, vector<1x1x34x128xf32>
    %8 = vector.shape_cast %7 : vector<1x1x34x128xf32> to vector<34x128xf32>
    %9 = vector.shape_cast %6 : vector<34x128xf32> to vector<1x1x34x128xf32>
    tpu.vector_store %arg21[%c0_4, %c0_5, %c0_6, %c0_7], %9 {strides = array<i32>} : memref<1x1x34x128xf32, #tpu.memory_space<vmem>>, vector<1x1x34x128xf32>,
    return
  }
  func.func @transform_0(%arg0: i32, %arg1: i32, %arg2: memref<5xi32, #tpu.memory_space<smem>>) -> (i32, i32, i32) {
    %c0_i32 = arith.constant 0 : i32
    %c0_i32_0 = arith.constant 0 : i32
    %c0_i32_1 = arith.constant 0 : i32
    return %arg0, %c0_i32, %c0_i32_0 : i32, i32, i32
  }
  func.func @transform_1(%arg0: i32, %arg1: i32, %arg2: memref<5xi32, #tpu.memory_space<smem>>) -> (i32, i32) {
    %c0_i32 = arith.constant 0 : i32
    %c0_i32_0 = arith.constant 0 : i32
    %c0_i32_1 = arith.constant 0 : i32
    return %c0_i32, %c0_i32_0 : i32, i32
  }
  func.func @transform_2(%arg0: i32, %arg1: i32, %arg2: memref<5xi32, #tpu.memory_space<smem>>) -> (i32, i32) {
    %c0_i32 = arith.constant 0 : i32
    %c0_i32_0 = arith.constant 0 : i32
    %c0_i32_1 = arith.constant 0 : i32
    return %c0_i32, %c0_i32_0 : i32, i32
  }
  func.func @transform_3(%arg0: i32, %arg1: i32, %arg2: memref<5xi32, #tpu.memory_space<smem>>) -> (i32, i32) {
    %c0_i32 = arith.constant 0 : i32
    %c0_i32_0 = arith.constant 0 : i32
    %c0_i32_1 = arith.constant 0 : i32
    return %c0_i32, %c0_i32_0 : i32, i32
  }
  func.func @transform_4(%arg0: i32, %arg1: i32, %arg2: memref<5xi32, #tpu.memory_space<smem>>) -> (i32, i32) {
    %c0_i32 = arith.constant 0 : i32
    %c0_i32_0 = arith.constant 0 : i32
    %c0_i32_1 = arith.constant 0 : i32
    return %c0_i32, %c0_i32_0 : i32, i32
  }
  func.func @transform_5(%arg0: i32, %arg1: i32, %arg2: memref<5xi32, #tpu.memory_space<smem>>) -> (i32, i32) {
    %c0_i32 = arith.constant 0 : i32
    %c0_i32_0 = arith.constant 0 : i32
    %c0_i32_1 = arith.constant 0 : i32
    return %c0_i32, %c0_i32_0 : i32, i32
  }
  func.func @transform_6(%arg0: i32, %arg1: i32, %arg2: memref<5xi32, #tpu.memory_space<smem>>) -> (i32, i32, i32) {
    %c1_i32 = arith.constant 1 : i32
    %0 = arith.subi %arg1, %c1_i32 : i32
    %c0_i32 = arith.constant 0 : i32
    %1 = arith.maxsi %0, %c0_i32 : i32
    %c0_i32_0 = arith.constant 0 : i32
    %c0_i32_1 = arith.constant 0 : i32
    %c0_i32_2 = arith.constant 0 : i32
    return %1, %c0_i32_0, %c0_i32_1 : i32, i32, i32
  }
  func.func @transform_7(%arg0: i32, %arg1: i32, %arg2: memref<5xi32, #tpu.memory_space<smem>>) -> (i32, i32, i32) {
    %c1_i32 = arith.constant 1 : i32
    %0 = arith.subi %arg1, %c1_i32 : i32
    %c0_i32 = arith.constant 0 : i32
    %1 = arith.maxsi %0, %c0_i32 : i32
    %c0_i32_0 = arith.constant 0 : i32
    %c0_i32_1 = arith.constant 0 : i32
    %c0_i32_2 = arith.constant 0 : i32
    return %1, %c0_i32_0, %c0_i32_1 : i32, i32, i32
  }
  func.func @transform_8(%arg0: i32, %arg1: i32, %arg2: memref<5xi32, #tpu.memory_space<smem>>) -> (i32, i32, i32) {
    %c1_i32 = arith.constant 1 : i32
    %0 = arith.subi %arg1, %c1_i32 : i32
    %c0_i32 = arith.constant 0 : i32
    %1 = arith.maxsi %0, %c0_i32 : i32
    %c0_i32_0 = arith.constant 0 : i32
    %c0_i32_1 = arith.constant 0 : i32
    %c0_i32_2 = arith.constant 0 : i32
    return %1, %c0_i32_0, %c0_i32_1 : i32, i32, i32
  }
  func.func @transform_9(%arg0: i32, %arg1: i32, %arg2: memref<5xi32, #tpu.memory_space<smem>>) -> (i32, i32, i32) {
    %c1_i32 = arith.constant 1 : i32
    %0 = arith.subi %arg1, %c1_i32 : i32
    %c0_i32 = arith.constant 0 : i32
    %1 = arith.maxsi %0, %c0_i32 : i32
    %c0_i32_0 = arith.constant 0 : i32
    %c0_i32_1 = arith.constant 0 : i32
    %c0_i32_2 = arith.constant 0 : i32
    return %1, %c0_i32_0, %c0_i32_1 : i32, i32, i32
  }
  func.func @transform_10(%arg0: i32, %arg1: i32, %arg2: memref<5xi32, #tpu.memory_space<smem>>) -> (i32, i32, i32) {
    %c1_i32 = arith.constant 1 : i32
    %0 = arith.subi %arg1, %c1_i32 : i32
    %c0_i32 = arith.constant 0 : i32
    %1 = arith.maxsi %0, %c0_i32 : i32
    %c0_i32_0 = arith.constant 0 : i32
    %c0_i32_1 = arith.constant 0 : i32
    %c0_i32_2 = arith.constant 0 : i32
    return %1, %c0_i32_0, %c0_i32_1 : i32, i32, i32
  }
  func.func @transform_11(%arg0: i32, %arg1: i32, %arg2: memref<5xi32, #tpu.memory_space<smem>>) -> (i32, i32, i32) {
    %c1_i32 = arith.constant 1 : i32
    %0 = arith.subi %arg1, %c1_i32 : i32
    %c0_i32 = arith.constant 0 : i32
    %1 = arith.maxsi %0, %c0_i32 : i32
    %c0_i32_0 = arith.constant 0 : i32
    %c0_i32_1 = arith.constant 0 : i32
    %c0_i32_2 = arith.constant 0 : i32
    return %1, %c0_i32_0, %c0_i32_1 : i32, i32, i32
  }
  func.func @transform_12(%arg0: i32, %arg1: i32, %arg2: memref<5xi32, #tpu.memory_space<smem>>) -> (i32, i32, i32) {
    %c1_i32 = arith.constant 1 : i32
    %0 = arith.subi %arg1, %c1_i32 : i32
    %c0_i32 = arith.constant 0 : i32
    %1 = arith.maxsi %0, %c0_i32 : i32
    %c0_i32_0 = arith.constant 0 : i32
    %c0_i32_1 = arith.constant 0 : i32
    %c0_i32_2 = arith.constant 0 : i32
    return %1, %c0_i32_0, %c0_i32_1 : i32, i32, i32
  }
  func.func @transform_13(%arg0: i32, %arg1: i32, %arg2: memref<5xi32, #tpu.memory_space<smem>>) -> (i32, i32, i32) {
    %c1_i32 = arith.constant 1 : i32
    %0 = arith.subi %arg1, %c1_i32 : i32
    %c0_i32 = arith.constant 0 : i32
    %1 = arith.maxsi %0, %c0_i32 : i32
    %c0_i32_0 = arith.constant 0 : i32
    %c0_i32_1 = arith.constant 0 : i32
    %c0_i32_2 = arith.constant 0 : i32
    return %1, %c0_i32_0, %c0_i32_1 : i32, i32, i32
  }
  func.func @transform_14(%arg0: i32, %arg1: i32, %arg2: memref<5xi32, #tpu.memory_space<smem>>) -> (i32, i32, i32) {
    %c1_i32 = arith.constant 1 : i32
    %0 = arith.subi %arg1, %c1_i32 : i32
    %c0_i32 = arith.constant 0 : i32
    %1 = arith.maxsi %0, %c0_i32 : i32
    %c0_i32_0 = arith.constant 0 : i32
    %c0_i32_1 = arith.constant 0 : i32
    %c0_i32_2 = arith.constant 0 : i32
    return %1, %c0_i32_0, %c0_i32_1 : i32, i32, i32
  }
  func.func @transform_15(%arg0: i32, %arg1: i32, %arg2: memref<5xi32, #tpu.memory_space<smem>>) -> (i32, i32, i32) {
    %c1_i32 = arith.constant 1 : i32
    %0 = arith.subi %arg1, %c1_i32 : i32
    %c0_i32 = arith.constant 0 : i32
    %1 = arith.maxsi %0, %c0_i32 : i32
    %c0_i32_0 = arith.constant 0 : i32
    %c0_i32_1 = arith.constant 0 : i32
    %c0_i32_2 = arith.constant 0 : i32
    return %1, %c0_i32_0, %c0_i32_1 : i32, i32, i32
  }
  func.func @transform_16(%arg0: i32, %arg1: i32, %arg2: memref<5xi32, #tpu.memory_space<smem>>) -> (i32, i32, i32) {
    %c1_i32 = arith.constant 1 : i32
    %0 = arith.subi %arg1, %c1_i32 : i32
    %c0_i32 = arith.constant 0 : i32
    %1 = arith.maxsi %0, %c0_i32 : i32
    %c0_i32_0 = arith.constant 0 : i32
    %c0_i32_1 = arith.constant 0 : i32
    %c0_i32_2 = arith.constant 0 : i32
    return %1, %c0_i32_0, %c0_i32_1 : i32, i32, i32
  }
  func.func @transform_17(%arg0: i32, %arg1: i32, %arg2: memref<5xi32, #tpu.memory_space<smem>>) -> (i32, i32, i32) {
    %c1_i32 = arith.constant 1 : i32
    %0 = arith.subi %arg1, %c1_i32 : i32
    %c0_i32 = arith.constant 0 : i32
    %1 = arith.maxsi %0, %c0_i32 : i32
    %c0_i32_0 = arith.constant 0 : i32
    %c0_i32_1 = arith.constant 0 : i32
    %c0_i32_2 = arith.constant 0 : i32
    return %1, %c0_i32_0, %c0_i32_1 : i32, i32, i32
  }
  func.func @transform_18(%arg0: i32, %arg1: i32, %arg2: memref<5xi32, #tpu.memory_space<smem>>) -> (i32, i32, i32, i32) {
    %0 = arith.index_cast %arg1 : i32 to index
    %1 = memref.load %arg2[%0] : memref<5xi32, #tpu.memory_space<smem>>
    %c0_i32 = arith.constant 0 : i32
    %c0_i32_0 = arith.constant 0 : i32
    %c0_i32_1 = arith.constant 0 : i32
    return %1, %arg0, %c0_i32, %c0_i32_0 : i32, i32, i32, i32
  }
}

</mosaic_0001>

<llo_original>
// kernel: tile.9
$region0: #{tile.9}
  %s0 = inlined_call_operand.vmem [shape: f32[2,17,128], index: 0, kind: input, shape index: {}]
  %s1 = inlined_call_operand.vmem [shape: f32[34,128], index: 1, kind: output, shape index: {}]
  %v2 = vld [vmem:[%s0] sm:$0xff]
  %3 = vst [vmem:[%s1] sm:$0xff] %v2
  %s4 = scalar_lea.vmem %s0, 8
  %v5 = vld [vmem:[%s4] sm:$0xff]
  %s6 = scalar_lea.vmem %s1, 8
  %7 = vst [vmem:[%s6] sm:$0xff] %v5
  %s8 = scalar_lea.vmem %s0, 16
  %s9 = smov 3
  %v10 = vld [vmem:[%s8] ss:$8 sm:%s9]
  %s11 = scalar_lea.vmem %s1, 16
  %12 = vst [vmem:[%s11] sm:$0x3] %v10
  %s13 = scalar_lea.vmem %s0, 25
  %v14 = vld [vmem:[%s13] sm:$0xff]
  %s15 = scalar_lea.vmem %s1, 18
  %16 = vst [vmem:[%s15] sm:$0xff] %v14
  %s17 = scalar_lea.vmem %s0, 33
  %v18 = vld [vmem:[%s17] sm:$0xff]
  %s19 = scalar_lea.vmem %s1, 26
  %20 = vst [vmem:[%s19] sm:$0xff] %v18

// kernel: visual_encoder_forward.1
$region0: #{visual_encoder_forward.1}
  #allocation0 [shape = 'u32[]', space=smem, size = 0x4, offset = 0x4, fixed_abs, tag = 'smem constant byte address 0x4 - core index']
  #allocation1 [shape = 'u32[144,128]{1,0:T(1,128)}', space=vmem, size = 0x12000, scoped, tag = 'internal scratch']
  #allocation2 [shape = 'f32[34,128]{1,0:T(8,128)}', space=vmem, size = 0x5000, scoped, tag = 'scratch operand']
  #allocation3 [shape = 's32[1]{0}', space=sflag, size = 0x4, scoped, tag = 'scoped memory for visual_encoder_forward.1']
  #allocation4 [shape = 'u8[512]{0}', space=smem, size = 0x200, scoped, tag = 'prefetched SMEM operand 0']
  %s0 = inlined_call_operand.vmem [shape: s32[5], index: 0, kind: input, shape index: {}]
  %s1 = inlined_call_operand.vmem [shape: f32[2,34,128], index: 1, kind: input, shape index: {}]
  %s2 = inlined_call_operand.vmem [shape: bf16[128,128], index: 2, kind: input, shape index: {}]
  %s3 = inlined_call_operand.vmem [shape: f32[34,128], index: 3, kind: input, shape index: {}]
  %s4 = inlined_call_operand.vmem [shape: f32[1,128], index: 4, kind: input, shape index: {}]
  %s5 = inlined_call_operand.vmem [shape: f32[1,128], index: 5, kind: input, shape index: {}]
  %s6 = inlined_call_operand.vmem [shape: f32[34,34], index: 6, kind: input, shape index: {}]
  %s7 = inlined_call_operand.vmem [shape: f32[4,1,128], index: 7, kind: input, shape index: {}]
  %s8 = inlined_call_operand.vmem [shape: f32[4,1,128], index: 8, kind: input, shape index: {}]
  %s9 = inlined_call_operand.vmem [shape: bf16[4,128,384], index: 9, kind: input, shape index: {}]
  %s10 = inlined_call_operand.vmem [shape: f32[4,1,384], index: 10, kind: input, shape index: {}]
  %s11 = inlined_call_operand.vmem [shape: bf16[4,128,128], index: 11, kind: input, shape index: {}]
  %s12 = inlined_call_operand.vmem [shape: f32[4,1,128], index: 12, kind: input, shape index: {}]
  %s13 = inlined_call_operand.vmem [shape: f32[4,1,128], index: 13, kind: input, shape index: {}]
  %s14 = inlined_call_operand.vmem [shape: f32[4,1,128], index: 14, kind: input, shape index: {}]
  %s15 = inlined_call_operand.vmem [shape: bf16[4,128,256], index: 15, kind: input, shape index: {}]
  %s16 = inlined_call_operand.vmem [shape: f32[4,1,256], index: 16, kind: input, shape index: {}]
  %s17 = inlined_call_operand.vmem [shape: bf16[4,256,128], index: 17, kind: input, shape index: {}]
  %s18 = inlined_call_operand.vmem [shape: f32[4,1,128], index: 18, kind: input, shape index: {}]
  %s19 = inlined_call_operand.vmem [shape: f32[4,2,34,128], index: 19, kind: output, shape index: {}]
  %s20 = sld [smem:[#allocation0]]
  $region113: #{visual_encoder_forward.1} parent=0
    _
  %s22 = ssub.s32 1, %s20
  %s23 = scalar_select 0, %s22, %s20
  %s24 = sshll.u32 %s0, 4
  %s25 = int_to_ptr.vmem [resolvable:$true] %s24
  %27 = dma.vmem_to_smem %s25, 16, [#allocation4], [#allocation3]
  %28 = dma.done [#allocation3], 16
  %29 = sfence
  loop: start=0, step=1, limit=12
  $region2: #{visual_encoder_forward.1} parent=0 // loop_pre_header
    _
  $region3: #{visual_encoder_forward.1} parent=0 // loop_header
    %s31 = sphi 0, %s35
    %p32 = scmp.ge.s32.totalorder %s31, 12
    %s38 = sphi 0, %s50
    %s39 = sphi 0, %s46
    %s40 = sphi 0, %s38
    %s41 = sphi 0, %s39
    %s42 = sphi 0, %s40
    %s43 = sphi 0, %s41
    %s53 = sphi 0, %s55
    %s56 = sphi 0, %s53
    %s57 = sphi 0, %s56
    %s73 = sphi 0, %s57
    %s77 = sphi 0, %s77
    %s79 = sphi 0, %s77
    %s80 = sphi 0, %s79
    %s94 = sphi 0, %s80
    %s98 = sphi 0, %s98
    %s100 = sphi 0, %s98
    %s101 = sphi 0, %s100
    %s115 = sphi 0, %s101
    %s119 = sphi 0, %s119
    %s121 = sphi 0, %s119
    %s122 = sphi 0, %s121
    %s136 = sphi 0, %s122
    %s140 = sphi 0, %s140
    %s142 = sphi 0, %s140
    %s143 = sphi 0, %s142
    %s157 = sphi 0, %s143
    %s161 = sphi 0, %s161
    %s163 = sphi 0, %s161
    %s164 = sphi 0, %s163
    %s178 = sphi 0, %s164
    %s190 = sphi 0, %s192
    %s193 = sphi 0, %s190
    %s194 = sphi 0, %s193
    %s210 = sphi 0, %s194
    %s222 = sphi 0, %s224
    %s225 = sphi 0, %s222
    %s226 = sphi 0, %s225
    %s242 = sphi 0, %s226
    %s254 = sphi 0, %s256
    %s257 = sphi 0, %s254
    %s258 = sphi 0, %s257
    %s274 = sphi 0, %s258
    %s286 = sphi 0, %s288
    %s289 = sphi 0, %s286
    %s290 = sphi 0, %s289
    %s306 = sphi 0, %s290
    %s318 = sphi 0, %s320
    %s321 = sphi 0, %s318
    %s322 = sphi 0, %s321
    %s338 = sphi 0, %s322
    %s350 = sphi 0, %s352
    %s353 = sphi 0, %s350
    %s354 = sphi 0, %s353
    %s370 = sphi 0, %s354
    %s382 = sphi 0, %s384
    %s385 = sphi 0, %s382
    %s386 = sphi 0, %s385
    %s402 = sphi 0, %s386
    %s414 = sphi 0, %s416
    %s417 = sphi 0, %s414
    %s418 = sphi 0, %s417
    %s434 = sphi 0, %s418
    %s446 = sphi 0, %s448
    %s449 = sphi 0, %s446
    %s450 = sphi 0, %s449
    %s466 = sphi 0, %s450
    %s478 = sphi 0, %s480
    %s481 = sphi 0, %s478
    %s482 = sphi 0, %s481
    %s498 = sphi 0, %s482
    %s510 = sphi 0, %s512
    %s513 = sphi 0, %s510
    %s514 = sphi 0, %s513
    %s530 = sphi 0, %s514
    %s542 = sphi 0, %s544
    %s545 = sphi 0, %s542
    %s546 = sphi 0, %s545
    %s562 = sphi 0, %s546
    %s572 = sphi 0, %s574
    %s575 = sphi 0, %s572
    %s576 = sphi 0, %s575
    %s592 = sphi 0, %s576
  $region4: #{visual_encoder_forward.1} parent=0 // loop_header_branch
    %34 = sbr.rel (%p32) target = $region8
  $region5: #{visual_encoder_forward.1} parent=0 // loop_body
    %s36 = ssub.s32 %s31, 1
    %s37 = ssub.s32 %s31, 2
    %s44 = sadd.s32 1, %s39
    %p45 = scmp.ge.s32.totalorder %s44, 5
    %s46 = scalar_select %p45, 0, %s44
    %s47 = sadd.s32 1, %s38
    %s48 = scalar_select %p45, %s47, %s38
    %p49 = scmp.ge.s32.totalorder %s48, 2
    %s50 = scalar_select %p49, 0, %s48
    %s51 = ssub.s32 %s38, %s50
    %p52 = scmp.eq.s32.totalorder %s51, 0
    %s54 = sadd.s32 %s53, 1
    %s55 = scalar_select %p52, %s53, %s54
    %p58 = pneg %p52
    %p59 = scmp.eq.s32.totalorder %s31, 9
    %p60 = por %p58, %p59
    %p61 = scmp.ne.s32.totalorder %s53, %s56
    %p62 = scmp.eq.s32.totalorder %s31, 0
    %p63 = por %p61, %p62
    %p64 = scmp.ne.s32.totalorder %s53, %s56
    %p65 = scmp.eq.s32.totalorder %s36, 9
    %p66 = por %p64, %p65
    %p67 = scmp.ne.s32.totalorder %s56, %s57
    %p68 = scmp.eq.s32.totalorder %s36, 0
    %p69 = por %p67, %p68
    %p70 = scmp.ne.s32.totalorder %s56, %s57
    %p71 = scmp.eq.s32.totalorder %s37, 9
    %p72 = por %p70, %p71
    %p74 = scmp.ne.s32.totalorder %s57, %s73
    %p75 = scmp.eq.s32.totalorder %s37, 0
    %p76 = por %p74, %p75
    %s78 = sadd.s32 %s77, 1
    %p81 = scmp.eq.s32.totalorder %s31, 9
    %p82 = scmp.ne.s32.totalorder %s77, %s79
    %p83 = scmp.eq.s32.totalorder %s31, 0
    %p84 = por %p82, %p83
    %p85 = scmp.ne.s32.totalorder %s77, %s79
    %p86 = scmp.eq.s32.totalorder %s36, 9
    %p87 = por %p85, %p86
    %p88 = scmp.ne.s32.totalorder %s79, %s80
    %p89 = scmp.eq.s32.totalorder %s36, 0
    %p90 = por %p88, %p89
    %p91 = scmp.ne.s32.totalorder %s79, %s80
    %p92 = scmp.eq.s32.totalorder %s37, 9
    %p93 = por %p91, %p92
    %p95 = scmp.ne.s32.totalorder %s80, %s94
    %p96 = scmp.eq.s32.totalorder %s37, 0
    %p97 = por %p95, %p96
    %s99 = sadd.s32 %s98, 1
    %p102 = scmp.eq.s32.totalorder %s31, 9
    %p103 = scmp.ne.s32.totalorder %s98, %s100
    %p104 = scmp.eq.s32.totalorder %s31, 0
    %p105 = por %p103, %p104
    %p106 = scmp.ne.s32.totalorder %s98, %s100
    %p107 = scmp.eq.s32.totalorder %s36, 9
    %p108 = por %p106, %p107
    %p109 = scmp.ne.s32.totalorder %s100, %s101
    %p110 = scmp.eq.s32.totalorder %s36, 0
    %p111 = por %p109, %p110
    %p112 = scmp.ne.s32.totalorder %s100, %s101
    %p113 = scmp.eq.s32.totalorder %s37, 9
    %p114 = por %p112, %p113
    %p116 = scmp.ne.s32.totalorder %s101, %s115
    %p117 = scmp.eq.s32.totalorder %s37, 0
    %p118 = por %p116, %p117
    %s120 = sadd.s32 %s119, 1
    %p123 = scmp.eq.s32.totalorder %s31, 9
    %p124 = scmp.ne.s32.totalorder %s119, %s121
    %p125 = scmp.eq.s32.totalorder %s31, 0
    %p126 = por %p124, %p125
    %p127 = scmp.ne.s32.totalorder %s119, %s121
    %p128 = scmp.eq.s32.totalorder %s36, 9
    %p129 = por %p127, %p128
    %p130 = scmp.ne.s32.totalorder %s121, %s122
    %p131 = scmp.eq.s32.totalorder %s36, 0
    %p132 = por %p130, %p131
    %p133 = scmp.ne.s32.totalorder %s121, %s122
    %p134 = scmp.eq.s32.totalorder %s37, 9
    %p135 = por %p133, %p134
    %p137 = scmp.ne.s32.totalorder %s122, %s136
    %p138 = scmp.eq.s32.totalorder %s37, 0
    %p139 = por %p137, %p138
    %s141 = sadd.s32 %s140, 1
    %p144 = scmp.eq.s32.totalorder %s31, 9
    %p145 = scmp.ne.s32.totalorder %s140, %s142
    %p146 = scmp.eq.s32.totalorder %s31, 0
    %p147 = por %p145, %p146
    %p148 = scmp.ne.s32.totalorder %s140, %s142
    %p149 = scmp.eq.s32.totalorder %s36, 9
    %p150 = por %p148, %p149
    %p151 = scmp.ne.s32.totalorder %s142, %s143
    %p152 = scmp.eq.s32.totalorder %s36, 0
    %p153 = por %p151, %p152
    %p154 = scmp.ne.s32.totalorder %s142, %s143
    %p155 = scmp.eq.s32.totalorder %s37, 9
    %p156 = por %p154, %p155
    %p158 = scmp.ne.s32.totalorder %s143, %s157
    %p159 = scmp.eq.s32.totalorder %s37, 0
    %p160 = por %p158, %p159
    %s162 = sadd.s32 %s161, 1
    %p165 = scmp.eq.s32.totalorder %s31, 9
    %p166 = scmp.ne.s32.totalorder %s161, %s163
    %p167 = scmp.eq.s32.totalorder %s31, 0
    %p168 = por %p166, %p167
    %p169 = scmp.ne.s32.totalorder %s161, %s163
    %p170 = scmp.eq.s32.totalorder %s36, 9
    %p171 = por %p169, %p170
    %p172 = scmp.ne.s32.totalorder %s163, %s164
    %p173 = scmp.eq.s32.totalorder %s36, 0
    %p174 = por %p172, %p173
    %p175 = scmp.ne.s32.totalorder %s163, %s164
    %p176 = scmp.eq.s32.totalorder %s37, 9
    %p177 = por %p175, %p176
    %p179 = scmp.ne.s32.totalorder %s164, %s178
    %p180 = scmp.eq.s32.totalorder %s37, 0
    %p181 = por %p179, %p180
    %s182 = ssub.s32 %s39, 1
    %p183 = scmp.gt.s32.totalorder %s182, 0
    %s184 = scalar_select %p183, %s182, 0
    %s185 = ssub.s32 %s46, 1
    %p186 = scmp.gt.s32.totalorder %s185, 0
    %s187 = scalar_select %p186, %s185, 0
    %s188 = ssub.s32 %s184, %s187
    %p189 = scmp.eq.s32.totalorder %s188, 0
    %s191 = sadd.s32 %s190, 1
    %s192 = scalar_select %p189, %s190, %s191
    %p195 = pneg %p189
    %p196 = scmp.eq.s32.totalorder %s31, 9
    %p197 = por %p195, %p196
    %p198 = scmp.ne.s32.totalorder %s190, %s193
    %p199 = scmp.eq.s32.totalorder %s31, 0
    %p200 = por %p198, %p199
    %p201 = scmp.ne.s32.totalorder %s190, %s193
    %p202 = scmp.eq.s32.totalorder %s36, 9
    %p203 = por %p201, %p202
    %p204 = scmp.ne.s32.totalorder %s193, %s194
    %p205 = scmp.eq.s32.totalorder %s36, 0
    %p206 = por %p204, %p205
    %p207 = scmp.ne.s32.totalorder %s193, %s194
    %p208 = scmp.eq.s32.totalorder %s37, 9
    %p209 = por %p207, %p208
    %p211 = scmp.ne.s32.totalorder %s194, %s210
    %p212 = scmp.eq.s32.totalorder %s37, 0
    %p213 = por %p211, %p212
    %s214 = ssub.s32 %s39, 1
    %p215 = scmp.gt.s32.totalorder %s214, 0
    %s216 = scalar_select %p215, %s214, 0
    %s217 = ssub.s32 %s46, 1
    %p218 = scmp.gt.s32.totalorder %s217, 0
    %s219 = scalar_select %p218, %s217, 0
    %s220 = ssub.s32 %s216, %s219
    %p221 = scmp.eq.s32.totalorder %s220, 0
    %s223 = sadd.s32 %s222, 1
    %s224 = scalar_select %p221, %s222, %s223
    %p227 = pneg %p221
    %p228 = scmp.eq.s32.totalorder %s31, 9
    %p229 = por %p227, %p228
    %p230 = scmp.ne.s32.totalorder %s222, %s225
    %p231 = scmp.eq.s32.totalorder %s31, 0
    %p232 = por %p230, %p231
    %p233 = scmp.ne.s32.totalorder %s222, %s225
    %p234 = scmp.eq.s32.totalorder %s36, 9
    %p235 = por %p233, %p234
    %p236 = scmp.ne.s32.totalorder %s225, %s226
    %p237 = scmp.eq.s32.totalorder %s36, 0
    %p238 = por %p236, %p237
    %p239 = scmp.ne.s32.totalorder %s225, %s226
    %p240 = scmp.eq.s32.totalorder %s37, 9
    %p241 = por %p239, %p240
    %p243 = scmp.ne.s32.totalorder %s226, %s242
    %p244 = scmp.eq.s32.totalorder %s37, 0
    %p245 = por %p243, %p244
    %s246 = ssub.s32 %s39, 1
    %p247 = scmp.gt.s32.totalorder %s246, 0
    %s248 = scalar_select %p247, %s246, 0
    %s249 = ssub.s32 %s46, 1
    %p250 = scmp.gt.s32.totalorder %s249, 0
    %s251 = scalar_select %p250, %s249, 0
    %s252 = ssub.s32 %s248, %s251
    %p253 = scmp.eq.s32.totalorder %s252, 0
    %s255 = sadd.s32 %s254, 1
    %s256 = scalar_select %p253, %s254, %s255
    %p259 = pneg %p253
    %p260 = scmp.eq.s32.totalorder %s31, 9
    %p261 = por %p259, %p260
    %p262 = scmp.ne.s32.totalorder %s254, %s257
    %p263 = scmp.eq.s32.totalorder %s31, 0
    %p264 = por %p262, %p263
    %p265 = scmp.ne.s32.totalorder %s254, %s257
    %p266 = scmp.eq.s32.totalorder %s36, 9
    %p267 = por %p265, %p266
    %p268 = scmp.ne.s32.totalorder %s257, %s258
    %p269 = scmp.eq.s32.totalorder %s36, 0
    %p270 = por %p268, %p269
    %p271 = scmp.ne.s32.totalorder %s257, %s258
    %p272 = scmp.eq.s32.totalorder %s37, 9
    %p273 = por %p271, %p272
    %p275 = scmp.ne.s32.totalorder %s258, %s274
    %p276 = scmp.eq.s32.totalorder %s37, 0
    %p277 = por %p275, %p276
    %s278 = ssub.s32 %s39, 1
    %p279 = scmp.gt.s32.totalorder %s278, 0
    %s280 = scalar_select %p279, %s278, 0
    %s281 = ssub.s32 %s46, 1
    %p282 = scmp.gt.s32.totalorder %s281, 0
    %s283 = scalar_select %p282, %s281, 0
    %s284 = ssub.s32 %s280, %s283
    %p285 = scmp.eq.s32.totalorder %s284, 0
    %s287 = sadd.s32 %s286, 1
    %s288 = scalar_select %p285, %s286, %s287
    %p291 = pneg %p285
    %p292 = scmp.eq.s32.totalorder %s31, 9
    %p293 = por %p291, %p292
    %p294 = scmp.ne.s32.totalorder %s286, %s289
    %p295 = scmp.eq.s32.totalorder %s31, 0
    %p296 = por %p294, %p295
    %p297 = scmp.ne.s32.totalorder %s286, %s289
    %p298 = scmp.eq.s32.totalorder %s36, 9
    %p299 = por %p297, %p298
    %p300 = scmp.ne.s32.totalorder %s289, %s290
    %p301 = scmp.eq.s32.totalorder %s36, 0
    %p302 = por %p300, %p301
    %p303 = scmp.ne.s32.totalorder %s289, %s290
    %p304 = scmp.eq.s32.totalorder %s37, 9
    %p305 = por %p303, %p304
    %p307 = scmp.ne.s32.totalorder %s290, %s306
    %p308 = scmp.eq.s32.totalorder %s37, 0
    %p309 = por %p307, %p308
    %s310 = ssub.s32 %s39, 1
    %p311 = scmp.gt.s32.totalorder %s310, 0
    %s312 = scalar_select %p311, %s310, 0
    %s313 = ssub.s32 %s46, 1
    %p314 = scmp.gt.s32.totalorder %s313, 0
    %s315 = scalar_select %p314, %s313, 0
    %s316 = ssub.s32 %s312, %s315
    %p317 = scmp.eq.s32.totalorder %s316, 0
    %s319 = sadd.s32 %s318, 1
    %s320 = scalar_select %p317, %s318, %s319
    %p323 = pneg %p317
    %p324 = scmp.eq.s32.totalorder %s31, 9
    %p325 = por %p323, %p324
    %p326 = scmp.ne.s32.totalorder %s318, %s321
    %p327 = scmp.eq.s32.totalorder %s31, 0
    %p328 = por %p326, %p327
    %p329 = scmp.ne.s32.totalorder %s318, %s321
    %p330 = scmp.eq.s32.totalorder %s36, 9
    %p331 = por %p329, %p330
    %p332 = scmp.ne.s32.totalorder %s321, %s322
    %p333 = scmp.eq.s32.totalorder %s36, 0
    %p334 = por %p332, %p333
    %p335 = scmp.ne.s32.totalorder %s321, %s322
    %p336 = scmp.eq.s32.totalorder %s37, 9
    %p337 = por %p335, %p336
    %p339 = scmp.ne.s32.totalorder %s322, %s338
    %p340 = scmp.eq.s32.totalorder %s37, 0
    %p341 = por %p339, %p340
    %s342 = ssub.s32 %s39, 1
    %p343 = scmp.gt.s32.totalorder %s342, 0
    %s344 = scalar_select %p343, %s342, 0
    %s345 = ssub.s32 %s46, 1
    %p346 = scmp.gt.s32.totalorder %s345, 0
    %s347 = scalar_select %p346, %s345, 0
    %s348 = ssub.s32 %s344, %s347
    %p349 = scmp.eq.s32.totalorder %s348, 0
    %s351 = sadd.s32 %s350, 1
    %s352 = scalar_select %p349, %s350, %s351
    %p355 = pneg %p349
    %p356 = scmp.eq.s32.totalorder %s31, 9
    %p357 = por %p355, %p356
    %p358 = scmp.ne.s32.totalorder %s350, %s353
    %p359 = scmp.eq.s32.totalorder %s31, 0
    %p360 = por %p358, %p359
    %p361 = scmp.ne.s32.totalorder %s350, %s353
    %p362 = scmp.eq.s32.totalorder %s36, 9
    %p363 = por %p361, %p362
    %p364 = scmp.ne.s32.totalorder %s353, %s354
    %p365 = scmp.eq.s32.totalorder %s36, 0
    %p366 = por %p364, %p365
    %p367 = scmp.ne.s32.totalorder %s353, %s354
    %p368 = scmp.eq.s32.totalorder %s37, 9
    %p369 = por %p367, %p368
    %p371 = scmp.ne.s32.totalorder %s354, %s370
    %p372 = scmp.eq.s32.totalorder %s37, 0
    %p373 = por %p371, %p372
    %s374 = ssub.s32 %s39, 1
    %p375 = scmp.gt.s32.totalorder %s374, 0
    %s376 = scalar_select %p375, %s374, 0
    %s377 = ssub.s32 %s46, 1
    %p378 = scmp.gt.s32.totalorder %s377, 0
    %s379 = scalar_select %p378, %s377, 0
    %s380 = ssub.s32 %s376, %s379
    %p381 = scmp.eq.s32.totalorder %s380, 0
    %s383 = sadd.s32 %s382, 1
    %s384 = scalar_select %p381, %s382, %s383
    %p387 = pneg %p381
    %p388 = scmp.eq.s32.totalorder %s31, 9
    %p389 = por %p387, %p388
    %p390 = scmp.ne.s32.totalorder %s382, %s385
    %p391 = scmp.eq.s32.totalorder %s31, 0
    %p392 = por %p390, %p391
    %p393 = scmp.ne.s32.totalorder %s382, %s385
    %p394 = scmp.eq.s32.totalorder %s36, 9
    %p395 = por %p393, %p394
    %p396 = scmp.ne.s32.totalorder %s385, %s386
    %p397 = scmp.eq.s32.totalorder %s36, 0
    %p398 = por %p396, %p397
    %p399 = scmp.ne.s32.totalorder %s385, %s386
    %p400 = scmp.eq.s32.totalorder %s37, 9
    %p401 = por %p399, %p400
    %p403 = scmp.ne.s32.totalorder %s386, %s402
    %p404 = scmp.eq.s32.totalorder %s37, 0
    %p405 = por %p403, %p404
    %s406 = ssub.s32 %s39, 1
    %p407 = scmp.gt.s32.totalorder %s406, 0
    %s408 = scalar_select %p407, %s406, 0
    %s409 = ssub.s32 %s46, 1
    %p410 = scmp.gt.s32.totalorder %s409, 0
    %s411 = scalar_select %p410, %s409, 0
    %s412 = ssub.s32 %s408, %s411
    %p413 = scmp.eq.s32.totalorder %s412, 0
    %s415 = sadd.s32 %s414, 1
    %s416 = scalar_select %p413, %s414, %s415
    %p419 = pneg %p413
    %p420 = scmp.eq.s32.totalorder %s31, 9
    %p421 = por %p419, %p420
    %p422 = scmp.ne.s32.totalorder %s414, %s417
    %p423 = scmp.eq.s32.totalorder %s31, 0
    %p424 = por %p422, %p423
    %p425 = scmp.ne.s32.totalorder %s414, %s417
    %p426 = scmp.eq.s32.totalorder %s36, 9
    %p427 = por %p425, %p426
    %p428 = scmp.ne.s32.totalorder %s417, %s418
    %p429 = scmp.eq.s32.totalorder %s36, 0
    %p430 = por %p428, %p429
    %p431 = scmp.ne.s32.totalorder %s417, %s418
    %p432 = scmp.eq.s32.totalorder %s37, 9
    %p433 = por %p431, %p432
    %p435 = scmp.ne.s32.totalorder %s418, %s434
    %p436 = scmp.eq.s32.totalorder %s37, 0
    %p437 = por %p435, %p436
    %s438 = ssub.s32 %s39, 1
    %p439 = scmp.gt.s32.totalorder %s438, 0
    %s440 = scalar_select %p439, %s438, 0
    %s441 = ssub.s32 %s46, 1
    %p442 = scmp.gt.s32.totalorder %s441, 0
    %s443 = scalar_select %p442, %s441, 0
    %s444 = ssub.s32 %s440, %s443
    %p445 = scmp.eq.s32.totalorder %s444, 0
    %s447 = sadd.s32 %s446, 1
    %s448 = scalar_select %p445, %s446, %s447
    %p451 = pneg %p445
    %p452 = scmp.eq.s32.totalorder %s31, 9
    %p453 = por %p451, %p452
    %p454 = scmp.ne.s32.totalorder %s446, %s449
    %p455 = scmp.eq.s32.totalorder %s31, 0
    %p456 = por %p454, %p455
    %p457 = scmp.ne.s32.totalorder %s446, %s449
    %p458 = scmp.eq.s32.totalorder %s36, 9
    %p459 = por %p457, %p458
    %p460 = scmp.ne.s32.totalorder %s449, %s450
    %p461 = scmp.eq.s32.totalorder %s36, 0
    %p462 = por %p460, %p461
    %p463 = scmp.ne.s32.totalorder %s449, %s450
    %p464 = scmp.eq.s32.totalorder %s37, 9
    %p465 = por %p463, %p464
    %p467 = scmp.ne.s32.totalorder %s450, %s466
    %p468 = scmp.eq.s32.totalorder %s37, 0
    %p469 = por %p467, %p468
    %s470 = ssub.s32 %s39, 1
    %p471 = scmp.gt.s32.totalorder %s470, 0
    %s472 = scalar_select %p471, %s470, 0
    %s473 = ssub.s32 %s46, 1
    %p474 = scmp.gt.s32.totalorder %s473, 0
    %s475 = scalar_select %p474, %s473, 0
    %s476 = ssub.s32 %s472, %s475
    %p477 = scmp.eq.s32.totalorder %s476, 0
    %s479 = sadd.s32 %s478, 1
    %s480 = scalar_select %p477, %s478, %s479
    %p483 = pneg %p477
    %p484 = scmp.eq.s32.totalorder %s31, 9
    %p485 = por %p483, %p484
    %p486 = scmp.ne.s32.totalorder %s478, %s481
    %p487 = scmp.eq.s32.totalorder %s31, 0
    %p488 = por %p486, %p487
    %p489 = scmp.ne.s32.totalorder %s478, %s481
    %p490 = scmp.eq.s32.totalorder %s36, 9
    %p491 = por %p489, %p490
    %p492 = scmp.ne.s32.totalorder %s481, %s482
    %p493 = scmp.eq.s32.totalorder %s36, 0
    %p494 = por %p492, %p493
    %p495 = scmp.ne.s32.totalorder %s481, %s482
    %p496 = scmp.eq.s32.totalorder %s37, 9
    %p497 = por %p495, %p496
    %p499 = scmp.ne.s32.totalorder %s482, %s498
    %p500 = scmp.eq.s32.totalorder %s37, 0
    %p501 = por %p499, %p500
    %s502 = ssub.s32 %s39, 1
    %p503 = scmp.gt.s32.totalorder %s502, 0
    %s504 = scalar_select %p503, %s502, 0
    %s505 = ssub.s32 %s46, 1
    %p506 = scmp.gt.s32.totalorder %s505, 0
    %s507 = scalar_select %p506, %s505, 0
    %s508 = ssub.s32 %s504, %s507
    %p509 = scmp.eq.s32.totalorder %s508, 0
    %s511 = sadd.s32 %s510, 1
    %s512 = scalar_select %p509, %s510, %s511
    %p515 = pneg %p509
    %p516 = scmp.eq.s32.totalorder %s31, 9
    %p517 = por %p515, %p516
    %p518 = scmp.ne.s32.totalorder %s510, %s513
    %p519 = scmp.eq.s32.totalorder %s31, 0
    %p520 = por %p518, %p519
    %p521 = scmp.ne.s32.totalorder %s510, %s513
    %p522 = scmp.eq.s32.totalorder %s36, 9
    %p523 = por %p521, %p522
    %p524 = scmp.ne.s32.totalorder %s513, %s514
    %p525 = scmp.eq.s32.totalorder %s36, 0
    %p526 = por %p524, %p525
    %p527 = scmp.ne.s32.totalorder %s513, %s514
    %p528 = scmp.eq.s32.totalorder %s37, 9
    %p529 = por %p527, %p528
    %p531 = scmp.ne.s32.totalorder %s514, %s530
    %p532 = scmp.eq.s32.totalorder %s37, 0
    %p533 = por %p531, %p532
    %s534 = ssub.s32 %s39, 1
    %p535 = scmp.gt.s32.totalorder %s534, 0
    %s536 = scalar_select %p535, %s534, 0
    %s537 = ssub.s32 %s46, 1
    %p538 = scmp.gt.s32.totalorder %s537, 0
    %s539 = scalar_select %p538, %s537, 0
    %s540 = ssub.s32 %s536, %s539
    %p541 = scmp.eq.s32.totalorder %s540, 0
    %s543 = sadd.s32 %s542, 1
    %s544 = scalar_select %p541, %s542, %s543
    %p547 = pneg %p541
    %p548 = scmp.eq.s32.totalorder %s31, 9
    %p549 = por %p547, %p548
    %p550 = scmp.ne.s32.totalorder %s542, %s545
    %p551 = scmp.eq.s32.totalorder %s31, 0
    %p552 = por %p550, %p551
    %p553 = scmp.ne.s32.totalorder %s542, %s545
    %p554 = scmp.eq.s32.totalorder %s36, 9
    %p555 = por %p553, %p554
    %p556 = scmp.ne.s32.totalorder %s545, %s546
    %p557 = scmp.eq.s32.totalorder %s36, 0
    %p558 = por %p556, %p557
    %p559 = scmp.ne.s32.totalorder %s545, %s546
    %p560 = scmp.eq.s32.totalorder %s37, 9
    %p561 = por %p559, %p560
    %p563 = scmp.ne.s32.totalorder %s546, %s562
    %p564 = scmp.eq.s32.totalorder %s37, 0
    %p565 = por %p563, %p564
    %s566 = sld [smem:[#allocation4 + %s39]]
    %s567 = sld [smem:[#allocation4 + %s46]]
    %s568 = ssub.s32 %s566, %s567
    %s569 = ssub.s32 %s38, %s50
    %s570 = sor.u32 %s568, %s569
    %p571 = scmp.eq.s32.totalorder %s570, 0
    %s573 = sadd.s32 %s572, 1
    %s574 = scalar_select %p571, %s572, %s573
    %p577 = pneg %p571
    %p578 = scmp.eq.s32.totalorder %s31, 9
    %p579 = por %p577, %p578
    %p580 = scmp.ne.s32.totalorder %s572, %s575
    %p581 = scmp.eq.s32.totalorder %s31, 0
    %p582 = por %p580, %p581
    %p583 = scmp.ne.s32.totalorder %s572, %s575
    %p584 = scmp.eq.s32.totalorder %s36, 9
    %p585 = por %p583, %p584
    %p586 = scmp.ne.s32.totalorder %s575, %s576
    %p587 = scmp.eq.s32.totalorder %s36, 0
    %p588 = por %p586, %p587
    %p589 = scmp.ne.s32.totalorder %s575, %s576
    %p590 = scmp.eq.s32.totalorder %s37, 9
    %p591 = por %p589, %p590
    %p593 = scmp.ne.s32.totalorder %s576, %s592
    %p594 = scmp.eq.s32.totalorder %s37, 0
    %p595 = por %p593, %p594
    %p596 = scmp.le.s32.totalorder 1, %s31
    %p597 = scmp.lt.s32.totalorder %s31, 11
    %p598 = pnand %p596, %p597
    %p599 = pneg %p598
    // Predicated region
    $region9: #{visual_encoder_forward.1} parent=5 // pred_check
      _
    $region10: #{visual_encoder_forward.1} parent=5 // pred_check_branch
      %601 = sbr.rel (%p598) target = $region12
    $region11: #{visual_encoder_forward.1} parent=5 // pred_region
      %s602 = ssub.s32 %s31, 1
      // Predicated region
      $region13: #{visual_encoder_forward.1} parent=11 // pred_check
        %p603 = pneg %p90
      $region14: #{visual_encoder_forward.1} parent=11 // pred_check_branch
        %605 = sbr.rel (%p603) target = $region16
      $region15: #{visual_encoder_forward.1} parent=11 // pred_region
        _
      $region16: #{visual_encoder_forward.1} parent=11 // pred_fallthru
        _
      // Predicated region
      $region17: #{visual_encoder_forward.1} parent=11 // pred_check
        %p606 = pneg %p111
      $region18: #{visual_encoder_forward.1} parent=11 // pred_check_branch
        %608 = sbr.rel (%p606) target = $region20
      $region19: #{visual_encoder_forward.1} parent=11 // pred_region
        _
      $region20: #{visual_encoder_forward.1} parent=11 // pred_fallthru
        _
      // Predicated region
      $region21: #{visual_encoder_forward.1} parent=11 // pred_check
        %p609 = pneg %p132
      $region22: #{visual_encoder_forward.1} parent=11 // pred_check_branch
        %611 = sbr.rel (%p609) target = $region24
      $region23: #{visual_encoder_forward.1} parent=11 // pred_region
        _
      $region24: #{visual_encoder_forward.1} parent=11 // pred_fallthru
        _
      // Predicated region
      $region25: #{visual_encoder_forward.1} parent=11 // pred_check
        %p612 = pneg %p153
      $region26: #{visual_encoder_forward.1} parent=11 // pred_check_branch
        %614 = sbr.rel (%p612) target = $region28
      $region27: #{visual_encoder_forward.1} parent=11 // pred_region
        _
      $region28: #{visual_encoder_forward.1} parent=11 // pred_fallthru
        _
      // Predicated region
      $region29: #{visual_encoder_forward.1} parent=11 // pred_check
        %p615 = pneg %p174
      $region30: #{visual_encoder_forward.1} parent=11 // pred_check_branch
        %617 = sbr.rel (%p615) target = $region32
      $region31: #{visual_encoder_forward.1} parent=11 // pred_region
        _
      $region32: #{visual_encoder_forward.1} parent=11 // pred_fallthru
        _
    $region12: #{visual_encoder_forward.1} parent=5 // pred_fallthru
      _
    %p618 = scmp.lt.s32.totalorder %s31, 10
    // Predicated region
    $region33: #{visual_encoder_forward.1} parent=5 // pred_check
      %p619 = pneg %p618
    $region34: #{visual_encoder_forward.1} parent=5 // pred_check_branch
      %621 = sbr.rel (%p619) target = $region36
    $region35: #{visual_encoder_forward.1} parent=5 // pred_region
      // Predicated region
      $region37: #{visual_encoder_forward.1} parent=35 // pred_check
        %p622 = pneg %p63
      $region38: #{visual_encoder_forward.1} parent=35 // pred_check_branch
        %624 = sbr.rel (%p622) target = $region40
      $region39: #{visual_encoder_forward.1} parent=35 // pred_region
        %p625 = scmp.lt.s32.totalorder %s38, 1
        %s626 = scalar_select %p625, %s38, 1
        %s627 = smul.addr %s626, 5
        %s628 = smul.addr %s627, 8
        %s629 = scalar_lea.vmem %s1, %s628
      $region40: #{visual_encoder_forward.1} parent=35 // pred_fallthru
        _
      // Predicated region
      $region41: #{visual_encoder_forward.1} parent=35 // pred_check
        %p630 = pneg %p200
      $region42: #{visual_encoder_forward.1} parent=35 // pred_check_branch
        %632 = sbr.rel (%p630) target = $region44
      $region43: #{visual_encoder_forward.1} parent=35 // pred_region
        %s633 = ssub.s32 %s39, 1
        %p634 = scmp.gt.s32.totalorder %s633, 0
        %s635 = scalar_select %p634, %s633, 0
        %p636 = scmp.lt.s32.totalorder %s635, 3
        %s637 = scalar_select %p636, %s635, 3
        %s638 = scalar_lea.vmem %s7, %s637
        %s639 = ssub.s32 %s39, 1
        %p640 = scmp.gt.s32.totalorder %s639, 0
        %s641 = scalar_select %p640, %s639, 0
      $region44: #{visual_encoder_forward.1} parent=35 // pred_fallthru
        _
      // Predicated region
      $region45: #{visual_encoder_forward.1} parent=35 // pred_check
        %p642 = pneg %p232
      $region46: #{visual_encoder_forward.1} parent=35 // pred_check_branch
        %644 = sbr.rel (%p642) target = $region48
      $region47: #{visual_encoder_forward.1} parent=35 // pred_region
        %s645 = ssub.s32 %s39, 1
        %p646 = scmp.gt.s32.totalorder %s645, 0
        %s647 = scalar_select %p646, %s645, 0
        %p648 = scmp.lt.s32.totalorder %s647, 3
        %s649 = scalar_select %p648, %s647, 3
        %s650 = scalar_lea.vmem %s8, %s649
        %s651 = ssub.s32 %s39, 1
        %p652 = scmp.gt.s32.totalorder %s651, 0
        %s653 = scalar_select %p652, %s651, 0
      $region48: #{visual_encoder_forward.1} parent=35 // pred_fallthru
        _
      // Predicated region
      $region49: #{visual_encoder_forward.1} parent=35 // pred_check
        %p654 = pneg %p264
      $region50: #{visual_encoder_forward.1} parent=35 // pred_check_branch
        %656 = sbr.rel (%p654) target = $region52
      $region51: #{visual_encoder_forward.1} parent=35 // pred_region
        %s657 = ssub.s32 %s39, 1
        %p658 = scmp.gt.s32.totalorder %s657, 0
        %s659 = scalar_select %p658, %s657, 0
        %p660 = scmp.lt.s32.totalorder %s659, 3
        %s661 = scalar_select %p660, %s659, 3
        %s662 = smul.addr %s661, 48
        %s663 = smul.addr %s662, 4
        %s664 = scalar_lea.vmem %s9, %s663
        %s665 = ssub.s32 %s39, 1
        %p666 = scmp.gt.s32.totalorder %s665, 0
        %s667 = scalar_select %p666, %s665, 0
      $region52: #{visual_encoder_forward.1} parent=35 // pred_fallthru
        _
      // Predicated region
      $region53: #{visual_encoder_forward.1} parent=35 // pred_check
        %p668 = pneg %p296
      $region54: #{visual_encoder_forward.1} parent=35 // pred_check_branch
        %670 = sbr.rel (%p668) target = $region56
      $region55: #{visual_encoder_forward.1} parent=35 // pred_region
        %s671 = ssub.s32 %s39, 1
        %p672 = scmp.gt.s32.totalorder %s671, 0
        %s673 = scalar_select %p672, %s671, 0
        %p674 = scmp.lt.s32.totalorder %s673, 3
        %s675 = scalar_select %p674, %s673, 3
        %s676 = smul.addr %s675, 3
        %s677 = scalar_lea.vmem %s10, %s676
        %s678 = ssub.s32 %s39, 1
        %p679 = scmp.gt.s32.totalorder %s678, 0
        %s680 = scalar_select %p679, %s678, 0
      $region56: #{visual_encoder_forward.1} parent=35 // pred_fallthru
        _
      // Predicated region
      $region57: #{visual_encoder_forward.1} parent=35 // pred_check
        %p681 = pneg %p328
      $region58: #{visual_encoder_forward.1} parent=35 // pred_check_branch
        %683 = sbr.rel (%p681) target = $region60
      $region59: #{visual_encoder_forward.1} parent=35 // pred_region
        %s684 = ssub.s32 %s39, 1
        %p685 = scmp.gt.s32.totalorder %s684, 0
        %s686 = scalar_select %p685, %s684, 0
        %p687 = scmp.lt.s32.totalorder %s686, 3
        %s688 = scalar_select %p687, %s686, 3
        %s689 = smul.addr %s688, 16
        %s690 = smul.addr %s689, 4
        %s691 = scalar_lea.vmem %s11, %s690
        %s692 = ssub.s32 %s39, 1
        %p693 = scmp.gt.s32.totalorder %s692, 0
        %s694 = scalar_select %p693, %s692, 0
      $region60: #{visual_encoder_forward.1} parent=35 // pred_fallthru
        _
      // Predicated region
      $region61: #{visual_encoder_forward.1} parent=35 // pred_check
        %p695 = pneg %p360
      $region62: #{visual_encoder_forward.1} parent=35 // pred_check_branch
        %697 = sbr.rel (%p695) target = $region64
      $region63: #{visual_encoder_forward.1} parent=35 // pred_region
        %s698 = ssub.s32 %s39, 1
        %p699 = scmp.gt.s32.totalorder %s698, 0
        %s700 = scalar_select %p699, %s698, 0
        %p701 = scmp.lt.s32.totalorder %s700, 3
        %s702 = scalar_select %p701, %s700, 3
        %s703 = scalar_lea.vmem %s12, %s702
        %s704 = ssub.s32 %s39, 1
        %p705 = scmp.gt.s32.totalorder %s704, 0
        %s706 = scalar_select %p705, %s704, 0
      $region64: #{visual_encoder_forward.1} parent=35 // pred_fallthru
        _
      // Predicated region
      $region65: #{visual_encoder_forward.1} parent=35 // pred_check
        %p707 = pneg %p392
      $region66: #{visual_encoder_forward.1} parent=35 // pred_check_branch
        %709 = sbr.rel (%p707) target = $region68
      $region67: #{visual_encoder_forward.1} parent=35 // pred_region
        %s710 = ssub.s32 %s39, 1
        %p711 = scmp.gt.s32.totalorder %s710, 0
        %s712 = scalar_select %p711, %s710, 0
        %p713 = scmp.lt.s32.totalorder %s712, 3
        %s714 = scalar_select %p713, %s712, 3
        %s715 = scalar_lea.vmem %s13, %s714
        %s716 = ssub.s32 %s39, 1
        %p717 = scmp.gt.s32.totalorder %s716, 0
        %s718 = scalar_select %p717, %s716, 0
      $region68: #{visual_encoder_forward.1} parent=35 // pred_fallthru
        _
      // Predicated region
      $region69: #{visual_encoder_forward.1} parent=35 // pred_check
        %p719 = pneg %p424
      $region70: #{visual_encoder_forward.1} parent=35 // pred_check_branch
        %721 = sbr.rel (%p719) target = $region72
      $region71: #{visual_encoder_forward.1} parent=35 // pred_region
        %s722 = ssub.s32 %s39, 1
        %p723 = scmp.gt.s32.totalorder %s722, 0
        %s724 = scalar_select %p723, %s722, 0
        %p725 = scmp.lt.s32.totalorder %s724, 3
        %s726 = scalar_select %p725, %s724, 3
        %s727 = scalar_lea.vmem %s14, %s726
        %s728 = ssub.s32 %s39, 1
        %p729 = scmp.gt.s32.totalorder %s728, 0
        %s730 = scalar_select %p729, %s728, 0
      $region72: #{visual_encoder_forward.1} parent=35 // pred_fallthru
        _
      // Predicated region
      $region73: #{visual_encoder_forward.1} parent=35 // pred_check
        %p731 = pneg %p456
      $region74: #{visual_encoder_forward.1} parent=35 // pred_check_branch
        %733 = sbr.rel (%p731) target = $region76
      $region75: #{visual_encoder_forward.1} parent=35 // pred_region
        %s734 = ssub.s32 %s39, 1
        %p735 = scmp.gt.s32.totalorder %s734, 0
        %s736 = scalar_select %p735, %s734, 0
        %p737 = scmp.lt.s32.totalorder %s736, 3
        %s738 = scalar_select %p737, %s736, 3
        %s739 = smul.addr %s738, 32
        %s740 = smul.addr %s739, 4
        %s741 = scalar_lea.vmem %s15, %s740
        %s742 = ssub.s32 %s39, 1
        %p743 = scmp.gt.s32.totalorder %s742, 0
        %s744 = scalar_select %p743, %s742, 0
      $region76: #{visual_encoder_forward.1} parent=35 // pred_fallthru
        _
      // Predicated region
      $region77: #{visual_encoder_forward.1} parent=35 // pred_check
        %p745 = pneg %p488
      $region78: #{visual_encoder_forward.1} parent=35 // pred_check_branch
        %747 = sbr.rel (%p745) target = $region80
      $region79: #{visual_encoder_forward.1} parent=35 // pred_region
        %s748 = ssub.s32 %s39, 1
        %p749 = scmp.gt.s32.totalorder %s748, 0
        %s750 = scalar_select %p749, %s748, 0
        %p751 = scmp.lt.s32.totalorder %s750, 3
        %s752 = scalar_select %p751, %s750, 3
        %s753 = smul.addr %s752, 2
        %s754 = scalar_lea.vmem %s16, %s753
        %s755 = ssub.s32 %s39, 1
        %p756 = scmp.gt.s32.totalorder %s755, 0
        %s757 = scalar_select %p756, %s755, 0
      $region80: #{visual_encoder_forward.1} parent=35 // pred_fallthru
        _
      // Predicated region
      $region81: #{visual_encoder_forward.1} parent=35 // pred_check
        %p758 = pneg %p520
      $region82: #{visual_encoder_forward.1} parent=35 // pred_check_branch
        %760 = sbr.rel (%p758) target = $region84
      $region83: #{visual_encoder_forward.1} parent=35 // pred_region
        %s761 = ssub.s32 %s39, 1
        %p762 = scmp.gt.s32.totalorder %s761, 0
        %s763 = scalar_select %p762, %s761, 0
        %p764 = scmp.lt.s32.totalorder %s763, 3
        %s765 = scalar_select %p764, %s763, 3
        %s766 = smul.addr %s765, 32
        %s767 = smul.addr %s766, 4
        %s768 = scalar_lea.vmem %s17, %s767
        %s769 = ssub.s32 %s39, 1
        %p770 = scmp.gt.s32.totalorder %s769, 0
        %s771 = scalar_select %p770, %s769, 0
      $region84: #{visual_encoder_forward.1} parent=35 // pred_fallthru
        _
      // Predicated region
      $region85: #{visual_encoder_forward.1} parent=35 // pred_check
        %p772 = pneg %p552
      $region86: #{visual_encoder_forward.1} parent=35 // pred_check_branch
        %774 = sbr.rel (%p772) target = $region88
      $region87: #{visual_encoder_forward.1} parent=35 // pred_region
        %s775 = ssub.s32 %s39, 1
        %p776 = scmp.gt.s32.totalorder %s775, 0
        %s777 = scalar_select %p776, %s775, 0
        %p778 = scmp.lt.s32.totalorder %s777, 3
        %s779 = scalar_select %p778, %s777, 3
        %s780 = scalar_lea.vmem %s18, %s779
        %s781 = ssub.s32 %s39, 1
        %p782 = scmp.gt.s32.totalorder %s781, 0
        %s783 = scalar_select %p782, %s781, 0
      $region88: #{visual_encoder_forward.1} parent=35 // pred_fallthru
        _
    $region36: #{visual_encoder_forward.1} parent=5 // pred_fallthru
      _
    %p784 = scmp.le.s32.totalorder 1, %s31
    %p785 = scmp.lt.s32.totalorder %s31, 11
    %p786 = pnand %p784, %p785
    %p787 = pneg %p786
    // Predicated region
    $region89: #{visual_encoder_forward.1} parent=5 // pred_check
      _
    $region90: #{visual_encoder_forward.1} parent=5 // pred_check_branch
      %789 = sbr.rel (%p786) target = $region92
    $region91: #{visual_encoder_forward.1} parent=5 // pred_region
      %s790 = ssub.s32 %s31, 1
      %p791 = scmp.lt.s32.totalorder %s40, 1
      %s792 = scalar_select %p791, %s40, 1
      %s793 = smul.addr %s792, 5
      %s794 = smul.addr %s793, 8
      %s795 = scalar_lea.vmem %s1, %s794
      %p796 = pneg %p69
      %p797 = pneg %p66
      %p798 = pneg %p90
      %p799 = pneg %p87
      %p800 = pneg %p111
      %p801 = pneg %p108
      %p802 = pneg %p132
      %p803 = pneg %p129
      %p804 = pneg %p153
      %p805 = pneg %p150
      %p806 = pneg %p174
      %p807 = pneg %p171
      %s808 = ssub.s32 %s41, 1
      %p809 = scmp.gt.s32.totalorder %s808, 0
      %s810 = scalar_select %p809, %s808, 0
      %p811 = scmp.lt.s32.totalorder %s810, 3
      %s812 = scalar_select %p811, %s810, 3
      %s813 = scalar_lea.vmem %s7, %s812
      %p814 = pneg %p206
      %p815 = pneg %p203
      %s816 = ssub.s32 %s41, 1
      %p817 = scmp.gt.s32.totalorder %s816, 0
      %s818 = scalar_select %p817, %s816, 0
      %p819 = scmp.lt.s32.totalorder %s818, 3
      %s820 = scalar_select %p819, %s818, 3
      %s821 = scalar_lea.vmem %s8, %s820
      %p822 = pneg %p238
      %p823 = pneg %p235
      %s824 = ssub.s32 %s41, 1
      %p825 = scmp.gt.s32.totalorder %s824, 0
      %s826 = scalar_select %p825, %s824, 0
      %p827 = scmp.lt.s32.totalorder %s826, 3
      %s828 = scalar_select %p827, %s826, 3
      %s829 = smul.addr %s828, 48
      %s830 = smul.addr %s829, 4
      %s831 = scalar_lea.vmem %s9, %s830
      %p832 = pneg %p270
      %p833 = pneg %p267
      %s834 = ssub.s32 %s41, 1
      %p835 = scmp.gt.s32.totalorder %s834, 0
      %s836 = scalar_select %p835, %s834, 0
      %p837 = scmp.lt.s32.totalorder %s836, 3
      %s838 = scalar_select %p837, %s836, 3
      %s839 = smul.addr %s838, 3
      %s840 = scalar_lea.vmem %s10, %s839
      %p841 = pneg %p302
      %p842 = pneg %p299
      %s843 = ssub.s32 %s41, 1
      %p844 = scmp.gt.s32.totalorder %s843, 0
      %s845 = scalar_select %p844, %s843, 0
      %p846 = scmp.lt.s32.totalorder %s845, 3
      %s847 = scalar_select %p846, %s845, 3
      %s848 = smul.addr %s847, 16
      %s849 = smul.addr %s848, 4
      %s850 = scalar_lea.vmem %s11, %s849
      %p851 = pneg %p334
      %p852 = pneg %p331
      %s853 = ssub.s32 %s41, 1
      %p854 = scmp.gt.s32.totalorder %s853, 0
      %s855 = scalar_select %p854, %s853, 0
      %p856 = scmp.lt.s32.totalorder %s855, 3
      %s857 = scalar_select %p856, %s855, 3
      %s858 = scalar_lea.vmem %s12, %s857
      %p859 = pneg %p366
      %p860 = pneg %p363
      %s861 = ssub.s32 %s41, 1
      %p862 = scmp.gt.s32.totalorder %s861, 0
      %s863 = scalar_select %p862, %s861, 0
      %p864 = scmp.lt.s32.totalorder %s863, 3
      %s865 = scalar_select %p864, %s863, 3
      %s866 = scalar_lea.vmem %s13, %s865
      %p867 = pneg %p398
      %p868 = pneg %p395
      %s869 = ssub.s32 %s41, 1
      %p870 = scmp.gt.s32.totalorder %s869, 0
      %s871 = scalar_select %p870, %s869, 0
      %p872 = scmp.lt.s32.totalorder %s871, 3
      %s873 = scalar_select %p872, %s871, 3
      %s874 = scalar_lea.vmem %s14, %s873
      %p875 = pneg %p430
      %p876 = pneg %p427
      %s877 = ssub.s32 %s41, 1
      %p878 = scmp.gt.s32.totalorder %s877, 0
      %s879 = scalar_select %p878, %s877, 0
      %p880 = scmp.lt.s32.totalorder %s879, 3
      %s881 = scalar_select %p880, %s879, 3
      %s882 = smul.addr %s881, 32
      %s883 = smul.addr %s882, 4
      %s884 = scalar_lea.vmem %s15, %s883
      %p885 = pneg %p462
      %p886 = pneg %p459
      %s887 = ssub.s32 %s41, 1
      %p888 = scmp.gt.s32.totalorder %s887, 0
      %s889 = scalar_select %p888, %s887, 0
      %p890 = scmp.lt.s32.totalorder %s889, 3
      %s891 = scalar_select %p890, %s889, 3
      %s892 = smul.addr %s891, 2
      %s893 = scalar_lea.vmem %s16, %s892
      %p894 = pneg %p494
      %p895 = pneg %p491
      %s896 = ssub.s32 %s41, 1
      %p897 = scmp.gt.s32.totalorder %s896, 0
      %s898 = scalar_select %p897, %s896, 0
      %p899 = scmp.lt.s32.totalorder %s898, 3
      %s900 = scalar_select %p899, %s898, 3
      %s901 = smul.addr %s900, 32
      %s902 = smul.addr %s901, 4
      %s903 = scalar_lea.vmem %s17, %s902
      %p904 = pneg %p526
      %p905 = pneg %p523
      %s906 = ssub.s32 %s41, 1
      %p907 = scmp.gt.s32.totalorder %s906, 0
      %s908 = scalar_select %p907, %s906, 0
      %p909 = scmp.lt.s32.totalorder %s908, 3
      %s910 = scalar_select %p909, %s908, 3
      %s911 = scalar_lea.vmem %s18, %s910
      %p912 = pneg %p558
      %p913 = pneg %p555
      %p914 = pneg %p588
      %p915 = pneg %p585
      %s916 = sld [smem:[#allocation4 + %s41]]
      %p917 = scmp.lt.s32.totalorder %s916, 3
      %s918 = scalar_select %p917, %s916, 3
      %p919 = scmp.lt.s32.totalorder %s40, 1
      %s920 = scalar_select %p919, %s40, 1
      %s921 = smul.addr %s920, 5
      %s922 = smul.addr %s918, 10
      %s923 = sadd.s32 %s921, %s922
      %s924 = smul.addr %s923, 8
      %s925 = scalar_lea.vmem %s19, %s924
      %p926 = scmp.lt.s32.totalorder %s40, 1
      %s927 = scalar_select %p926, %s40, 1
      %s928 = smul.addr %s927, 5
      %s929 = smul.addr %s928, 8
      %s930 = scalar_lea.vmem %s1, %s929
      %s931 = ssub.s32 %s41, 1
      %p932 = scmp.gt.s32.totalorder %s931, 0
      %s933 = scalar_select %p932, %s931, 0
      %p934 = scmp.lt.s32.totalorder %s933, 3
      %s935 = scalar_select %p934, %s933, 3
      %s936 = scalar_lea.vmem %s7, %s935
      %s937 = ssub.s32 %s41, 1
      %p938 = scmp.gt.s32.totalorder %s937, 0
      %s939 = scalar_select %p938, %s937, 0
      %s940 = ssub.s32 %s41, 1
      %p941 = scmp.gt.s32.totalorder %s940, 0
      %s942 = scalar_select %p941, %s940, 0
      %p943 = scmp.lt.s32.totalorder %s942, 3
      %s944 = scalar_select %p943, %s942, 3
      %s945 = scalar_lea.vmem %s8, %s944
      %s946 = ssub.s32 %s41, 1
      %p947 = scmp.gt.s32.totalorder %s946, 0
      %s948 = scalar_select %p947, %s946, 0
      %s949 = ssub.s32 %s41, 1
      %p950 = scmp.gt.s32.totalorder %s949, 0
      %s951 = scalar_select %p950, %s949, 0
      %p952 = scmp.lt.s32.totalorder %s951, 3
      %s953 = scalar_select %p952, %s951, 3
      %s954 = smul.addr %s953, 48
      %s955 = smul.addr %s954, 4
      %s956 = scalar_lea.vmem %s9, %s955
      %s957 = ssub.s32 %s41, 1
      %p958 = scmp.gt.s32.totalorder %s957, 0
      %s959 = scalar_select %p958, %s957, 0
      %s960 = ssub.s32 %s41, 1
      %p961 = scmp.gt.s32.totalorder %s960, 0
      %s962 = scalar_select %p961, %s960, 0
      %p963 = scmp.lt.s32.totalorder %s962, 3
      %s964 = scalar_select %p963, %s962, 3
      %s965 = smul.addr %s964, 3
      %s966 = scalar_lea.vmem %s10, %s965
      %s967 = ssub.s32 %s41, 1
      %p968 = scmp.gt.s32.totalorder %s967, 0
      %s969 = scalar_select %p968, %s967, 0
      %s970 = ssub.s32 %s41, 1
      %p971 = scmp.gt.s32.totalorder %s970, 0
      %s972 = scalar_select %p971, %s970, 0
      %p973 = scmp.lt.s32.totalorder %s972, 3
      %s974 = scalar_select %p973, %s972, 3
      %s975 = smul.addr %s974, 16
      %s976 = smul.addr %s975, 4
      %s977 = scalar_lea.vmem %s11, %s976
      %s978 = ssub.s32 %s41, 1
      %p979 = scmp.gt.s32.totalorder %s978, 0
      %s980 = scalar_select %p979, %s978, 0
      %s981 = ssub.s32 %s41, 1
      %p982 = scmp.gt.s32.totalorder %s981, 0
      %s983 = scalar_select %p982, %s981, 0
      %p984 = scmp.lt.s32.totalorder %s983, 3
      %s985 = scalar_select %p984, %s983, 3
      %s986 = scalar_lea.vmem %s12, %s985
      %s987 = ssub.s32 %s41, 1
      %p988 = scmp.gt.s32.totalorder %s987, 0
      %s989 = scalar_select %p988, %s987, 0
      %s990 = ssub.s32 %s41, 1
      %p991 = scmp.gt.s32.totalorder %s990, 0
      %s992 = scalar_select %p991, %s990, 0
      %p993 = scmp.lt.s32.totalorder %s992, 3
      %s994 = scalar_select %p993, %s992, 3
      %s995 = scalar_lea.vmem %s13, %s994
      %s996 = ssub.s32 %s41, 1
      %p997 = scmp.gt.s32.totalorder %s996, 0
      %s998 = scalar_select %p997, %s996, 0
      %s999 = ssub.s32 %s41, 1
      %p1000 = scmp.gt.s32.totalorder %s999, 0
      %s1001 = scalar_select %p1000, %s999, 0
      %p1002 = scmp.lt.s32.totalorder %s1001, 3
      %s1003 = scalar_select %p1002, %s1001, 3
      %s1004 = scalar_lea.vmem %s14, %s1003
      %s1005 = ssub.s32 %s41, 1
      %p1006 = scmp.gt.s32.totalorder %s1005, 0
      %s1007 = scalar_select %p1006, %s1005, 0
      %s1008 = ssub.s32 %s41, 1
      %p1009 = scmp.gt.s32.totalorder %s1008, 0
      %s1010 = scalar_select %p1009, %s1008, 0
      %p1011 = scmp.lt.s32.totalorder %s1010, 3
      %s1012 = scalar_select %p1011, %s1010, 3
      %s1013 = smul.addr %s1012, 32
      %s1014 = smul.addr %s1013, 4
      %s1015 = scalar_lea.vmem %s15, %s1014
      %s1016 = ssub.s32 %s41, 1
      %p1017 = scmp.gt.s32.totalorder %s1016, 0
      %s1018 = scalar_select %p1017, %s1016, 0
      %s1019 = ssub.s32 %s41, 1
      %p1020 = scmp.gt.s32.totalorder %s1019, 0
      %s1021 = scalar_select %p1020, %s1019, 0
      %p1022 = scmp.lt.s32.totalorder %s1021, 3
      %s1023 = scalar_select %p1022, %s1021, 3
      %s1024 = smul.addr %s1023, 2
      %s1025 = scalar_lea.vmem %s16, %s1024
      %s1026 = ssub.s32 %s41, 1
      %p1027 = scmp.gt.s32.totalorder %s1026, 0
      %s1028 = scalar_select %p1027, %s1026, 0
      %s1029 = ssub.s32 %s41, 1
      %p1030 = scmp.gt.s32.totalorder %s1029, 0
      %s1031 = scalar_select %p1030, %s1029, 0
      %p1032 = scmp.lt.s32.totalorder %s1031, 3
      %s1033 = scalar_select %p1032, %s1031, 3
      %s1034 = smul.addr %s1033, 32
      %s1035 = smul.addr %s1034, 4
      %s1036 = scalar_lea.vmem %s17, %s1035
      %s1037 = ssub.s32 %s41, 1
      %p1038 = scmp.gt.s32.totalorder %s1037, 0
      %s1039 = scalar_select %p1038, %s1037, 0
      %s1040 = ssub.s32 %s41, 1
      %p1041 = scmp.gt.s32.totalorder %s1040, 0
      %s1042 = scalar_select %p1041, %s1040, 0
      %p1043 = scmp.lt.s32.totalorder %s1042, 3
      %s1044 = scalar_select %p1043, %s1042, 3
      %s1045 = scalar_lea.vmem %s18, %s1044
      %s1046 = ssub.s32 %s41, 1
      %p1047 = scmp.gt.s32.totalorder %s1046, 0
      %s1048 = scalar_select %p1047, %s1046, 0
      %s1049 = sld [smem:[#allocation4 + %s41]]
      %p1050 = scmp.lt.s32.totalorder %s1049, 3
      %s1051 = scalar_select %p1050, %s1049, 3
      %p1052 = scmp.lt.s32.totalorder %s40, 1
      %s1053 = scalar_select %p1052, %s40, 1
      %s1054 = smul.addr %s1053, 5
      %s1055 = smul.addr %s1051, 10
      %s1056 = sadd.s32 %s1054, %s1055
      %s1057 = smul.addr %s1056, 8
      %s1058 = scalar_lea.vmem %s19, %s1057
      %s1059 = sld [smem:[#allocation4 + %s41]]
      %p1061 = scmp.eq.s32.totalorder %s41, 0
      // Predicated region
      $region93: #{visual_encoder_forward.1} parent=91 // pred_check
        %p1062 = pneg %p1061
      $region94: #{visual_encoder_forward.1} parent=91 // pred_check_branch
        %1064 = sbr.rel (%p1062) target = $region96
      $region95: #{visual_encoder_forward.1} parent=91 // pred_region
        %v1065 = vld [vmem:[%s930] sm:$0xff]
        %v1066 = vld [vmem:[%s930 + $0x8] sm:$0xff]
        %v1067 = vld [vmem:[%s930 + $0x10] sm:$0xff]
        %v1068 = vld [vmem:[%s930 + $0x18] sm:$0xff]
        %v1069 = vld [vmem:[%s930 + $0x20] sm:$0x3]
        %v1070 = vpack.c.bf16 %v1066, %v1065
        %v1071 = vpack.c.bf16 %v1068, %v1067
        %v1072 = vpack.c.bf16 %v1069, %v1069
        %v1073 = vld [vmem:[%s2] sm:$0xf]
        %v1074 = vld [vmem:[%s2 + $0x4] sm:$0xf]
        %v1075 = vld [vmem:[%s2 + $0x8] sm:$0xf]
        %v1076 = vld [vmem:[%s2 + $0xc] sm:$0xf]
        %v1077 = vld [vmem:[%s2 + $0x10] sm:$0xf]
        %v1078 = vld [vmem:[%s2 + $0x14] sm:$0xf]
        %v1079 = vld [vmem:[%s2 + $0x18] sm:$0xf]
        %v1080 = vld [vmem:[%s2 + $0x1c] sm:$0xf]
        %v1081 = vld [vmem:[%s2 + $0x20] sm:$0xf]
        %v1082 = vld [vmem:[%s2 + $0x24] sm:$0xf]
        %v1083 = vld [vmem:[%s2 + $0x28] sm:$0xf]
        %v1084 = vld [vmem:[%s2 + $0x2c] sm:$0xf]
        %v1085 = vld [vmem:[%s2 + $0x30] sm:$0xf]
        %v1086 = vld [vmem:[%s2 + $0x34] sm:$0xf]
        %v1087 = vld [vmem:[%s2 + $0x38] sm:$0xf]
        %v1088 = vld [vmem:[%s2 + $0x3c] sm:$0xf]
        %v1089 = vld [vmem:[%s3] sm:$0xff]
        %v1090 = vld [vmem:[%s3 + $0x8] sm:$0xff]
        %v1091 = vld [vmem:[%s3 + $0x10] sm:$0xff]
        %v1092 = vld [vmem:[%s3 + $0x18] sm:$0xff]
        %v1093 = vld [vmem:[%s3 + $0x20] sm:$0x3]
        %v1110 = vunpack.c.l.b16 %v1073
        %v1111 = vunpack.c.l.b16 %v1074
        %v1112 = vunpack.c.l.b16 %v1075
        %v1113 = vunpack.c.l.b16 %v1076
        %v1114 = vunpack.c.l.b16 %v1077
        %v1115 = vunpack.c.l.b16 %v1078
        %v1116 = vunpack.c.l.b16 %v1079
        %v1117 = vunpack.c.l.b16 %v1080
        %v1118 = vunpack.c.l.b16 %v1081
        %v1119 = vunpack.c.l.b16 %v1082
        %v1120 = vunpack.c.l.b16 %v1083
        %v1121 = vunpack.c.l.b16 %v1084
        %v1122 = vunpack.c.l.b16 %v1085
        %v1123 = vunpack.c.l.b16 %v1086
        %v1124 = vunpack.c.l.b16 %v1087
        %v1125 = vunpack.c.l.b16 %v1088
        %v1126 = vpack.c.b16 %v1111, %v1110
        %v1127 = vpack.c.b16 %v1113, %v1112
        %v1128 = vpack.c.b16 %v1115, %v1114
        %v1129 = vpack.c.b16 %v1117, %v1116
        %v1130 = vpack.c.b16 %v1119, %v1118
        %v1131 = vpack.c.b16 %v1121, %v1120
        %v1132 = vpack.c.b16 %v1123, %v1122
        %v1133 = vpack.c.b16 %v1125, %v1124
        %1142 = vmatprep.subr.bf16.mxu0 0
        %1143 = vmatpush1.bf16.msra.mxu0 %v1126
        %1144 = vmatprep.subr.bf16.mxu0 0
        %1145 = vmatpush1.bf16.msra.mxu0 %v1127
        %1146 = vmatprep.subr.bf16.mxu0 0
        %1147 = vmatpush1.bf16.msra.mxu0 %v1128
        %1148 = vmatprep.subr.bf16.mxu0 0
        %1149 = vmatpush1.bf16.msra.mxu0 %v1129
        %1150 = vmatprep.subr.bf16.mxu0 0
        %1151 = vmatpush1.bf16.msra.mxu0 %v1130
        %1152 = vmatprep.subr.bf16.mxu0 0
        %1153 = vmatpush1.bf16.msra.mxu0 %v1131
        %1154 = vmatprep.subr.bf16.mxu0 0
        %1155 = vmatpush1.bf16.msra.mxu0 %v1132
        %1156 = vmatprep.subr.bf16.mxu0 0
        %1157 = vmatpush1.bf16.msra.mxu0 %v1133
        %1158 = vmatprep.subr.bf16.mxu0 0
        %1159 = vmatpush1.bf16.msra.mxu0 0
        %1160 = vmatprep.subr.bf16.mxu0 0
        %1161 = vmatpush1.bf16.msra.mxu0 0
        %1162 = vmatprep.subr.bf16.mxu0 0
        %1163 = vmatpush1.bf16.msra.mxu0 0
        %1164 = vmatprep.subr.bf16.mxu0 0
        %1165 = vmatpush1.bf16.msra.mxu0 0
        %1166 = vmatprep.subr.bf16.mxu0 0
        %1167 = vmatpush1.bf16.msra.mxu0 0
        %1168 = vmatprep.subr.bf16.mxu0 0
        %1169 = vmatpush1.bf16.msra.mxu0 0
        %1170 = vmatprep.subr.bf16.mxu0 0
        %1171 = vmatpush1.bf16.msra.mxu0 0
        %1172 = vmatprep.subr.bf16.mxu0 0
        %1173 = vmatpush1.bf16.msra.mxu0 0
        %1174 = vmatprep.mubr.bf16.mxu0 0
        %1175 = vmatmul.mubr.bf16.gmra.mrb[0].mxu0 %v1070
        %v1176 = vpop.f32.mrb[0].mxu0
        %v1177 = vadd.f32 %v1089, %v1176
        %v1178 = vpop.f32.mrb[0].mxu0
        %v1179 = vpop.f32.mrb[0].mxu0
        %v1180 = vadd.f32 %v1090, %v1179
        %v1181 = vpop.f32.mrb[0].mxu0
        %1182 = vmatprep.mubr.bf16.mxu0 0
        %1183 = vmatmul.mubr.bf16.gmra.mrb[0].mxu0 %v1071
        %v1184 = vpop.f32.mrb[0].mxu0
        %v1185 = vadd.f32 %v1091, %v1184
        %v1186 = vpop.f32.mrb[0].mxu0
        %v1187 = vpop.f32.mrb[0].mxu0
        %v1188 = vadd.f32 %v1092, %v1187
        %v1189 = vpop.f32.mrb[0].mxu0
        %1190 = vmatprep.mubr.bf16.mxu0 0
        %1191 = vmatmul.mubr.bf16.gmra.mrb[0].mxu0 %v1072
        %v1192 = vpop.f32.mrb[0].mxu0
        %v1193 = vadd.f32 %v1093, %v1192
        %v1194 = vpop.f32.mrb[0].mxu0
        %v1195 = vpop.f32.mrb[0].mxu0
        %v1196 = vpop.f32.mrb[0].mxu0
        %1197 = vdwg.mxu0
        %v1198 = vld [vmem:[%s4] sm:$0x1]
        %v1199 = vld [vmem:[%s5] sm:$0x1]
        %1200 = vadd.xlane.f32.xlu0 %v1177
        %v1201 = vpop.xlane.xlu0 %1200
        %1202 = vadd.xlane.f32.xlu0 %v1180
        %v1203 = vpop.xlane.xlu0 %1202
        %1204 = vadd.xlane.f32.xlu0 %v1185
        %v1205 = vpop.xlane.xlu0 %1204
        %1206 = vadd.xlane.f32.xlu0 %v1188
        %v1207 = vpop.xlane.xlu0 %1206
        %vm1208 = vcmask 1041408
        %v1209 = vsel %vm1208, %v1193, 0.0
        %1210 = vadd.xlane.f32.xlu0 %v1209
        %v1211 = vpop.xlane.xlu0 %1210
        %v1212 = vrcp.pop 128.0
        %v1213 = vmul.f32 %v1201, %v1212
        %v1214 = vmul.f32 %v1203, %v1212
        %v1215 = vmul.f32 %v1205, %v1212
        %v1216 = vmul.f32 %v1207, %v1212
        %v1217 = vmul.f32 %v1211, %v1212
        %v1218 = vsub.f32 %v1177, %v1213
        %v1219 = vsub.f32 %v1180, %v1214
        %v1220 = vsub.f32 %v1185, %v1215
        %v1221 = vsub.f32 %v1188, %v1216
        %v1222 = vsub.f32 %v1193, %v1217
        %v1223 = vmul.f32 %v1218, %v1218
        %v1224 = vmul.f32 %v1219, %v1219
        %v1225 = vmul.f32 %v1220, %v1220
        %v1226 = vmul.f32 %v1221, %v1221
        %v1227 = vmul.f32 %v1222, %v1222
        %1228 = vadd.xlane.f32.xlu0 %v1223
        %v1229 = vpop.xlane.xlu0 %1228
        %1230 = vadd.xlane.f32.xlu0 %v1224
        %v1231 = vpop.xlane.xlu0 %1230
        %1232 = vadd.xlane.f32.xlu0 %v1225
        %v1233 = vpop.xlane.xlu0 %1232
        %1234 = vadd.xlane.f32.xlu0 %v1226
        %v1235 = vpop.xlane.xlu0 %1234
        %v1236 = vsel %vm1208, %v1227, 0.0
        %1237 = vadd.xlane.f32.xlu0 %v1236
        %v1238 = vpop.xlane.xlu0 %1237
        %v1239 = vmul.f32 %v1229, %v1212
        %v1240 = vmul.f32 %v1231, %v1212
        %v1241 = vmul.f32 %v1233, %v1212
        %v1242 = vmul.f32 %v1235, %v1212
        %v1243 = vmul.f32 %v1238, %v1212
        %v1244 = vadd.f32 %v1239, 1e-05
        %v1245 = vadd.f32 %v1240, 1e-05
        %v1246 = vadd.f32 %v1241, 1e-05
        %v1247 = vadd.f32 %v1242, 1e-05
        %v1248 = vadd.f32 %v1243, 1e-05
        %v1249 = vrsqrt.pop %v1244
        %v1250 = vrsqrt.pop %v1245
        %v1251 = vrsqrt.pop %v1246
        %v1252 = vrsqrt.pop %v1247
        %v1253 = vrsqrt.pop %v1248
        %v1254 = vmul.f32 %v1218, %v1249
        %v1255 = vmul.f32 %v1219, %v1250
        %v1256 = vmul.f32 %v1220, %v1251
        %v1257 = vmul.f32 %v1221, %v1252
        %v1258 = vmul.f32 %v1222, %v1253
        %v1260 = vlaneseq
        %v1261 = vshrl.u32 %v1260, 7
        %v1262 = vsub.s32 0, %v1261
        %v1263 = vrot.slane %v1198, %v1262
        %v1265 = vmul.f32 %v1254, %v1263
        %v1266 = vmul.f32 %v1255, %v1263
        %v1267 = vmul.f32 %v1256, %v1263
        %v1268 = vmul.f32 %v1257, %v1263
        %v1269 = vmul.f32 %v1258, %v1263
        %v1271 = vlaneseq
        %v1272 = vshrl.u32 %v1271, 7
        %v1273 = vsub.s32 0, %v1272
        %v1274 = vrot.slane %v1199, %v1273
        %v1276 = vadd.f32 %v1265, %v1274
        %v1277 = vadd.f32 %v1266, %v1274
        %v1278 = vadd.f32 %v1267, %v1274
        %v1279 = vadd.f32 %v1268, %v1274
        %v1280 = vadd.f32 %v1269, %v1274
        %1281 = vst [vmem:[#allocation2] sm:$0xff] %v1276
        %1282 = vst [vmem:[#allocation2 + $0x8] sm:$0xff] %v1277
        %1283 = vst [vmem:[#allocation2 + $0x10] sm:$0xff] %v1278
        %1284 = vst [vmem:[#allocation2 + $0x18] sm:$0xff] %v1279
        %1285 = vst [vmem:[#allocation2 + $0x20] sm:$0x3] %v1280
      $region96: #{visual_encoder_forward.1} parent=91 // pred_fallthru
        _
      %p1286 = scmp.gt.s32.totalorder %s41, 0
      // Predicated region
      $region97: #{visual_encoder_forward.1} parent=91 // pred_check
        %p1287 = pneg %p1286
      $region98: #{visual_encoder_forward.1} parent=91 // pred_check_branch
        %1289 = sbr.rel (%p1287) target = $region100
      $region99: #{visual_encoder_forward.1} parent=91 // pred_region
        %v1290 = vld [vmem:[#allocation2] sm:$0xff]
        %v1291 = vld [vmem:[#allocation2 + $0x8] sm:$0xff]
        %v1292 = vld [vmem:[#allocation2 + $0x10] sm:$0xff]
        %v1293 = vld [vmem:[#allocation2 + $0x18] sm:$0xff]
        %v1294 = vld [vmem:[#allocation2 + $0x20] sm:$0x3]
        %v1295 = vld [vmem:[%s936] sm:$0x1]
        %v1296 = vld [vmem:[%s945] sm:$0x1]
        %1297 = vadd.xlane.f32.xlu0 %v1290
        %v1298 = vpop.xlane.xlu0 %1297
        %1299 = vadd.xlane.f32.xlu0 %v1291
        %v1300 = vpop.xlane.xlu0 %1299
        %1301 = vadd.xlane.f32.xlu0 %v1292
        %v1302 = vpop.xlane.xlu0 %1301
        %1303 = vadd.xlane.f32.xlu0 %v1293
        %v1304 = vpop.xlane.xlu0 %1303
        %vm1305 = vcmask 1041408
        %v1306 = vsel %vm1305, %v1294, 0.0
        %1307 = vadd.xlane.f32.xlu0 %v1306
        %v1308 = vpop.xlane.xlu0 %1307
        %v1309 = vrcp.pop 128.0
        %v1310 = vmul.f32 %v1298, %v1309
        %v1311 = vmul.f32 %v1300, %v1309
        %v1312 = vmul.f32 %v1302, %v1309
        %v1313 = vmul.f32 %v1304, %v1309
        %v1314 = vmul.f32 %v1308, %v1309
        %v1315 = vsub.f32 %v1290, %v1310
        %v1316 = vsub.f32 %v1291, %v1311
        %v1317 = vsub.f32 %v1292, %v1312
        %v1318 = vsub.f32 %v1293, %v1313
        %v1319 = vsub.f32 %v1294, %v1314
        %v1320 = vmul.f32 %v1315, %v1315
        %v1321 = vmul.f32 %v1316, %v1316
        %v1322 = vmul.f32 %v1317, %v1317
        %v1323 = vmul.f32 %v1318, %v1318
        %v1324 = vmul.f32 %v1319, %v1319
        %1325 = vadd.xlane.f32.xlu0 %v1320
        %v1326 = vpop.xlane.xlu0 %1325
        %1327 = vadd.xlane.f32.xlu0 %v1321
        %v1328 = vpop.xlane.xlu0 %1327
        %1329 = vadd.xlane.f32.xlu0 %v1322
        %v1330 = vpop.xlane.xlu0 %1329
        %1331 = vadd.xlane.f32.xlu0 %v1323
        %v1332 = vpop.xlane.xlu0 %1331
        %v1333 = vsel %vm1305, %v1324, 0.0
        %1334 = vadd.xlane.f32.xlu0 %v1333
        %v1335 = vpop.xlane.xlu0 %1334
        %v1336 = vmul.f32 %v1326, %v1309
        %v1337 = vmul.f32 %v1328, %v1309
        %v1338 = vmul.f32 %v1330, %v1309
        %v1339 = vmul.f32 %v1332, %v1309
        %v1340 = vmul.f32 %v1335, %v1309
        %v1341 = vadd.f32 %v1336, 1e-05
        %v1342 = vadd.f32 %v1337, 1e-05
        %v1343 = vadd.f32 %v1338, 1e-05
        %v1344 = vadd.f32 %v1339, 1e-05
        %v1345 = vadd.f32 %v1340, 1e-05
        %v1346 = vrsqrt.pop %v1341
        %v1347 = vrsqrt.pop %v1342
        %v1348 = vrsqrt.pop %v1343
        %v1349 = vrsqrt.pop %v1344
        %v1350 = vrsqrt.pop %v1345
        %v1351 = vmul.f32 %v1315, %v1346
        %v1352 = vmul.f32 %v1316, %v1347
        %v1353 = vmul.f32 %v1317, %v1348
        %v1354 = vmul.f32 %v1318, %v1349
        %v1355 = vmul.f32 %v1319, %v1350
        %v1357 = vlaneseq
        %v1358 = vshrl.u32 %v1357, 7
        %v1359 = vsub.s32 0, %v1358
        %v1360 = vrot.slane %v1295, %v1359
        %v1362 = vmul.f32 %v1351, %v1360
        %v1363 = vmul.f32 %v1352, %v1360
        %v1364 = vmul.f32 %v1353, %v1360
        %v1365 = vmul.f32 %v1354, %v1360
        %v1366 = vmul.f32 %v1355, %v1360
        %v1368 = vlaneseq
        %v1369 = vshrl.u32 %v1368, 7
        %v1370 = vsub.s32 0, %v1369
        %v1371 = vrot.slane %v1296, %v1370
        %v1373 = vadd.f32 %v1362, %v1371
        %v1374 = vadd.f32 %v1363, %v1371
        %v1375 = vadd.f32 %v1364, %v1371
        %v1376 = vadd.f32 %v1365, %v1371
        %v1377 = vadd.f32 %v1366, %v1371
        %v1378 = vpack.c.bf16 %v1374, %v1373
        %v1379 = vpack.c.bf16 %v1376, %v1375
        %v1380 = vpack.c.bf16 %v1377, %v1377
        %v1381 = vld [vmem:[%s956] sm:$0xff]
        %v1382 = vld [vmem:[%s956 + $0x8] sm:$0xf]
        %v1383 = vld [vmem:[%s956 + $0xc] sm:$0xff]
        %v1384 = vld [vmem:[%s956 + $0x14] sm:$0xf]
        %v1385 = vld [vmem:[%s956 + $0x18] sm:$0xff]
        %v1386 = vld [vmem:[%s956 + $0x20] sm:$0xf]
        %v1387 = vld [vmem:[%s956 + $0x24] sm:$0xff]
        %v1388 = vld [vmem:[%s956 + $0x2c] sm:$0xf]
        %v1389 = vld [vmem:[%s956 + $0x30] sm:$0xff]
        %v1390 = vld [vmem:[%s956 + $0x38] sm:$0xf]
        %v1391 = vld [vmem:[%s956 + $0x3c] sm:$0xff]
        %v1392 = vld [vmem:[%s956 + $0x44] sm:$0xf]
        %v1393 = vld [vmem:[%s956 + $0x48] sm:$0xff]
        %v1394 = vld [vmem:[%s956 + $0x50] sm:$0xf]
        %v1395 = vld [vmem:[%s956 + $0x54] sm:$0xff]
        %v1396 = vld [vmem:[%s956 + $0x5c] sm:$0xf]
        %v1397 = vld [vmem:[%s956 + $0x60] sm:$0xff]
        %v1398 = vld [vmem:[%s956 + $0x68] sm:$0xf]
        %v1399 = vld [vmem:[%s956 + $0x6c] sm:$0xff]
        %v1400 = vld [vmem:[%s956 + $0x74] sm:$0xf]
        %v1401 = vld [vmem:[%s956 + $0x78] sm:$0xff]
        %v1402 = vld [vmem:[%s956 + $0x80] sm:$0xf]
        %v1403 = vld [vmem:[%s956 + $0x84] sm:$0xff]
        %v1404 = vld [vmem:[%s956 + $0x8c] sm:$0xf]
        %v1405 = vld [vmem:[%s956 + $0x90] sm:$0xff]
        %v1406 = vld [vmem:[%s956 + $0x98] sm:$0xf]
        %v1407 = vld [vmem:[%s956 + $0x9c] sm:$0xff]
        %v1408 = vld [vmem:[%s956 + $0xa4] sm:$0xf]
        %v1409 = vld [vmem:[%s956 + $0xa8] sm:$0xff]
        %v1410 = vld [vmem:[%s956 + $0xb0] sm:$0xf]
        %v1411 = vld [vmem:[%s956 + $0xb4] sm:$0xff]
        %v1412 = vld [vmem:[%s956 + $0xbc] sm:$0xf]
        %v1413 = vld [vmem:[%s966] sm:$0x7]
        %v1415 = vlaneseq
        %v1416 = vshrl.u32 %v1415, 7
        %v1417 = vsub.s32 0, %v1416
        %v1418 = vrot.slane %v1413, %v1417
        %v1419 = vlaneseq
        %v1420 = vshrl.u32 %v1419, 7
        %v1421 = vsub.s32 1, %v1420
        %v1422 = vrot.slane %v1413, %v1421
        %v1423 = vlaneseq
        %v1424 = vshrl.u32 %v1423, 7
        %v1425 = vsub.s32 2, %v1424
        %v1426 = vrot.slane %v1413, %v1425
        %v1462 = vunpack.c.l.b16 %v1381
        %v1463 = vunpack.c.h.b16 %v1381
        %v1464 = vunpack.c.l.b16 %v1382
        %v1465 = vunpack.c.l.b16 %v1383
        %v1466 = vunpack.c.h.b16 %v1383
        %v1467 = vunpack.c.l.b16 %v1384
        %v1468 = vunpack.c.l.b16 %v1385
        %v1469 = vunpack.c.h.b16 %v1385
        %v1470 = vunpack.c.l.b16 %v1386
        %v1471 = vunpack.c.l.b16 %v1387
        %v1472 = vunpack.c.h.b16 %v1387
        %v1473 = vunpack.c.l.b16 %v1388
        %v1474 = vunpack.c.l.b16 %v1389
        %v1475 = vunpack.c.h.b16 %v1389
        %v1476 = vunpack.c.l.b16 %v1390
        %v1477 = vunpack.c.l.b16 %v1391
        %v1478 = vunpack.c.h.b16 %v1391
        %v1479 = vunpack.c.l.b16 %v1392
        %v1480 = vunpack.c.l.b16 %v1393
        %v1481 = vunpack.c.h.b16 %v1393
        %v1482 = vunpack.c.l.b16 %v1394
        %v1483 = vunpack.c.l.b16 %v1395
        %v1484 = vunpack.c.h.b16 %v1395
        %v1485 = vunpack.c.l.b16 %v1396
        %v1486 = vunpack.c.l.b16 %v1397
        %v1487 = vunpack.c.h.b16 %v1397
        %v1488 = vunpack.c.l.b16 %v1398
        %v1489 = vunpack.c.l.b16 %v1399
        %v1490 = vunpack.c.h.b16 %v1399
        %v1491 = vunpack.c.l.b16 %v1400
        %v1492 = vunpack.c.l.b16 %v1401
        %v1493 = vunpack.c.h.b16 %v1401
        %v1494 = vunpack.c.l.b16 %v1402
        %v1495 = vunpack.c.l.b16 %v1403
        %v1496 = vunpack.c.h.b16 %v1403
        %v1497 = vunpack.c.l.b16 %v1404
        %v1498 = vunpack.c.l.b16 %v1405
        %v1499 = vunpack.c.h.b16 %v1405
        %v1500 = vunpack.c.l.b16 %v1406
        %v1501 = vunpack.c.l.b16 %v1407
        %v1502 = vunpack.c.h.b16 %v1407
        %v1503 = vunpack.c.l.b16 %v1408
        %v1504 = vunpack.c.l.b16 %v1409
        %v1505 = vunpack.c.h.b16 %v1409
        %v1506 = vunpack.c.l.b16 %v1410
        %v1507 = vunpack.c.l.b16 %v1411
        %v1508 = vunpack.c.h.b16 %v1411
        %v1509 = vunpack.c.l.b16 %v1412
        %v1510 = vpack.c.b16 %v1465, %v1462
        %v1511 = vpack.c.b16 %v1466, %v1463
        %v1512 = vpack.c.b16 %v1467, %v1464
        %v1513 = vpack.c.b16 %v1471, %v1468
        %v1514 = vpack.c.b16 %v1472, %v1469
        %v1515 = vpack.c.b16 %v1473, %v1470
        %v1516 = vpack.c.b16 %v1477, %v1474
        %v1517 = vpack.c.b16 %v1478, %v1475
        %v1518 = vpack.c.b16 %v1479, %v1476
        %v1519 = vpack.c.b16 %v1483, %v1480
        %v1520 = vpack.c.b16 %v1484, %v1481
        %v1521 = vpack.c.b16 %v1485, %v1482
        %v1522 = vpack.c.b16 %v1489, %v1486
        %v1523 = vpack.c.b16 %v1490, %v1487
        %v1524 = vpack.c.b16 %v1491, %v1488
        %v1525 = vpack.c.b16 %v1495, %v1492
        %v1526 = vpack.c.b16 %v1496, %v1493
        %v1527 = vpack.c.b16 %v1497, %v1494
        %v1528 = vpack.c.b16 %v1501, %v1498
        %v1529 = vpack.c.b16 %v1502, %v1499
        %v1530 = vpack.c.b16 %v1503, %v1500
        %v1531 = vpack.c.b16 %v1507, %v1504
        %v1532 = vpack.c.b16 %v1508, %v1505
        %v1533 = vpack.c.b16 %v1509, %v1506
        %1558 = vmatprep.subr.bf16.mxu0 %v1511
        %1559 = vmatpush1.bf16.msra.mxu0 %v1510
        %1560 = vmatprep.subr.bf16.mxu0 %v1514
        %1561 = vmatpush1.bf16.msra.mxu0 %v1513
        %1562 = vmatprep.subr.bf16.mxu0 %v1517
        %1563 = vmatpush1.bf16.msra.mxu0 %v1516
        %1564 = vmatprep.subr.bf16.mxu0 %v1520
        %1565 = vmatpush1.bf16.msra.mxu0 %v1519
        %1566 = vmatprep.subr.bf16.mxu0 %v1523
        %1567 = vmatpush1.bf16.msra.mxu0 %v1522
        %1568 = vmatprep.subr.bf16.mxu0 %v1526
        %1569 = vmatpush1.bf16.msra.mxu0 %v1525
        %1570 = vmatprep.subr.bf16.mxu0 %v1529
        %1571 = vmatpush1.bf16.msra.mxu0 %v1528
        %1572 = vmatprep.subr.bf16.mxu0 %v1532
        %1573 = vmatpush1.bf16.msra.mxu0 %v1531
        %1574 = vmatprep.subr.bf16.mxu0 0
        %1575 = vmatpush1.bf16.msra.mxu0 0
        %1576 = vmatprep.subr.bf16.mxu0 0
        %1577 = vmatpush1.bf16.msra.mxu0 0
        %1578 = vmatprep.subr.bf16.mxu0 0
        %1579 = vmatpush1.bf16.msra.mxu0 0
        %1580 = vmatprep.subr.bf16.mxu0 0
        %1581 = vmatpush1.bf16.msra.mxu0 0
        %1582 = vmatprep.subr.bf16.mxu0 0
        %1583 = vmatpush1.bf16.msra.mxu0 0
        %1584 = vmatprep.subr.bf16.mxu0 0
        %1585 = vmatpush1.bf16.msra.mxu0 0
        %1586 = vmatprep.subr.bf16.mxu0 0
        %1587 = vmatpush1.bf16.msra.mxu0 0
        %1588 = vmatprep.subr.bf16.mxu0 0
        %1589 = vmatpush1.bf16.msra.mxu0 0
        %1590 = vmatprep.mubr.bf16.mxu0 0
        %1591 = vmatmul.mubr.bf16.gmra.mrb[0].mxu0 %v1378
        %v1592 = vpop.f32.mrb[0].mxu0
        %v1593 = vadd.f32 %v1418, %v1592
        %v1594 = vpop.f32.mrb[0].mxu0
        %v1595 = vadd.f32 %v1422, %v1594
        %v1596 = vpop.f32.mrb[0].mxu0
        %v1597 = vadd.f32 %v1418, %v1596
        %v1598 = vpop.f32.mrb[0].mxu0
        %v1599 = vadd.f32 %v1422, %v1598
        %1600 = vmatprep.mubr.bf16.mxu0 0
        %1601 = vmatmul.mubr.bf16.gmra.mrb[0].mxu0 %v1379
        %v1602 = vpop.f32.mrb[0].mxu0
        %v1603 = vadd.f32 %v1418, %v1602
        %v1604 = vpop.f32.mrb[0].mxu0
        %v1605 = vadd.f32 %v1422, %v1604
        %v1606 = vpop.f32.mrb[0].mxu0
        %v1607 = vadd.f32 %v1418, %v1606
        %v1608 = vpop.f32.mrb[0].mxu0
        %v1609 = vadd.f32 %v1422, %v1608
        %1610 = vmatprep.mubr.bf16.mxu0 0
        %1611 = vmatmul.mubr.bf16.gmra.mrb[0].mxu0 %v1380
        %v1612 = vpop.f32.mrb[0].mxu0
        %v1613 = vadd.f32 %v1418, %v1612
        %v1614 = vpop.f32.mrb[0].mxu0
        %v1615 = vadd.f32 %v1422, %v1614
        %v1616 = vpop.f32.mrb[0].mxu0
        %v1617 = vpop.f32.mrb[0].mxu0
        %1618 = vdwg.mxu0
        %1619 = vmatprep.subr.bf16.mxu0 0
        %1620 = vmatpush1.bf16.msra.mxu0 %v1512
        %1621 = vmatprep.subr.bf16.mxu0 0
        %1622 = vmatpush1.bf16.msra.mxu0 %v1515
        %1623 = vmatprep.subr.bf16.mxu0 0
        %1624 = vmatpush1.bf16.msra.mxu0 %v1518
        %1625 = vmatprep.subr.bf16.mxu0 0
        %1626 = vmatpush1.bf16.msra.mxu0 %v1521
        %1627 = vmatprep.subr.bf16.mxu0 0
        %1628 = vmatpush1.bf16.msra.mxu0 %v1524
        %1629 = vmatprep.subr.bf16.mxu0 0
        %1630 = vmatpush1.bf16.msra.mxu0 %v1527
        %1631 = vmatprep.subr.bf16.mxu0 0
        %1632 = vmatpush1.bf16.msra.mxu0 %v1530
        %1633 = vmatprep.subr.bf16.mxu0 0
        %1634 = vmatpush1.bf16.msra.mxu0 %v1533
        %1635 = vmatprep.subr.bf16.mxu0 0
        %1636 = vmatpush1.bf16.msra.mxu0 0
        %1637 = vmatprep.subr.bf16.mxu0 0
        %1638 = vmatpush1.bf16.msra.mxu0 0
        %1639 = vmatprep.subr.bf16.mxu0 0
        %1640 = vmatpush1.bf16.msra.mxu0 0
        %1641 = vmatprep.subr.bf16.mxu0 0
        %1642 = vmatpush1.bf16.msra.mxu0 0
        %1643 = vmatprep.subr.bf16.mxu0 0
        %1644 = vmatpush1.bf16.msra.mxu0 0
        %1645 = vmatprep.subr.bf16.mxu0 0
        %1646 = vmatpush1.bf16.msra.mxu0 0
        %1647 = vmatprep.subr.bf16.mxu0 0
        %1648 = vmatpush1.bf16.msra.mxu0 0
        %1649 = vmatprep.subr.bf16.mxu0 0
        %1650 = vmatpush1.bf16.msra.mxu0 0
        %1651 = vmatprep.mubr.bf16.mxu0 0
        %1652 = vmatmul.mubr.bf16.gmra.mrb[0].mxu0 %v1378
        %v1653 = vpop.f32.mrb[0].mxu0
        %v1654 = vadd.f32 %v1426, %v1653
        %v1655 = vpop.f32.mrb[0].mxu0
        %v1656 = vpop.f32.mrb[0].mxu0
        %v1657 = vadd.f32 %v1426, %v1656
        %v1658 = vpop.f32.mrb[0].mxu0
        %1659 = vmatprep.mubr.bf16.mxu0 0
        %1660 = vmatmul.mubr.bf16.gmra.mrb[0].mxu0 %v1379
        %v1661 = vpop.f32.mrb[0].mxu0
        %v1662 = vadd.f32 %v1426, %v1661
        %v1663 = vpop.f32.mrb[0].mxu0
        %v1664 = vpop.f32.mrb[0].mxu0
        %v1665 = vadd.f32 %v1426, %v1664
        %v1666 = vpop.f32.mrb[0].mxu0
        %1667 = vmatprep.mubr.bf16.mxu0 0
        %1668 = vmatmul.mubr.bf16.gmra.mrb[0].mxu0 %v1380
        %v1669 = vpop.f32.mrb[0].mxu0
        %v1670 = vadd.f32 %v1426, %v1669
        %v1671 = vpop.f32.mrb[0].mxu0
        %v1672 = vpop.f32.mrb[0].mxu0
        %v1673 = vpop.f32.mrb[0].mxu0
        %1674 = vdwg.mxu0
        %v1675 = vld [vmem:[%s6] sm:$0xff]
        %v1676 = vld [vmem:[%s6 + $0x8] sm:$0xff]
        %v1677 = vld [vmem:[%s6 + $0x10] sm:$0xff]
        %v1678 = vld [vmem:[%s6 + $0x18] sm:$0xff]
        %v1679 = vld [vmem:[%s6 + $0x20] sm:$0x3]
        %v1680 = vlaneseq
        %v1681 = vand.u32 %v1680, 127
        %vm1682 = vcmp.ge.s32.totalorder %v1681, 0
        %vm1683 = vcmp.lt.s32.totalorder %v1681, 32
        %vm1684 = vmand %vm1682, %vm1683
        %v1685 = vsel %vm1684, 1, 0
        %v1686 = vcvt.s32.f32 %v1685
        %v1687 = vmul.f32 %v1595, %v1686
        %v1688 = vmul.f32 %v1599, %v1686
        %v1689 = vmul.f32 %v1605, %v1686
        %v1690 = vmul.f32 %v1609, %v1686
        %v1691 = vmul.f32 %v1615, %v1686
        %1692 = vmatprep.subr.mxu0 0.0
        %1693 = vmatpush1.xpose.msra.mxu0 %v1687
        %1694 = vmatprep.subr.mxu0 0.0
        %1695 = vmatpush1.xpose.msra.mxu0 %v1688
        %1696 = vmatprep.subr.mxu0 0.0
        %1697 = vmatpush1.xpose.msra.mxu0 %v1689
        %1698 = vmatprep.subr.mxu0 0.0
        %1699 = vmatpush1.xpose.msra.mxu0 %v1690
        %1700 = vmatprep.subr.mxu0 0.0
        %1701 = vmatpush1.xpose.msra.mxu0 %v1691
        %1702 = vmatprep.subr.mxu0 0.0
        %1703 = vmatpush1.xpose.msra.mxu0 0.0
        %1704 = vmatprep.subr.mxu0 0.0
        %1705 = vmatpush1.xpose.msra.mxu0 0.0
        %1706 = vmatprep.subr.mxu0 0.0
        %1707 = vmatpush1.xpose.msra.mxu0 0.0
        %1708 = vmatprep.subr.mxu0 0.0
        %1709 = vmatpush1.xpose.msra.mxu0 0.0
        %1710 = vmatprep.subr.mxu0 0.0
        %1711 = vmatpush1.xpose.msra.mxu0 0.0
        %1712 = vmatprep.subr.mxu0 0.0
        %1713 = vmatpush1.xpose.msra.mxu0 0.0
        %1714 = vmatprep.subr.mxu0 0.0
        %1715 = vmatpush1.xpose.msra.mxu0 0.0
        %1716 = vmatprep.subr.mxu0 0.0
        %1717 = vmatpush1.xpose.msra.mxu0 0.0
        %1718 = vmatprep.subr.mxu0 0.0
        %1719 = vmatpush1.xpose.msra.mxu0 0.0
        %1720 = vmatprep.subr.mxu0 0.0
        %1721 = vmatpush1.xpose.msra.mxu0 0.0
        %1722 = vmatprep.subr.mxu0 0.0
        %1723 = vmatpush1.xpose.msra.mxu0 0.0
        %1724 = vmatprep.subr.mxu0 0.0
        %1725 = vmatpush1.xpose.msra.mxu0 0.0
        %1726 = vmatprep.subr.mxu0 0.0
        %1727 = vmatpush1.xpose.msra.mxu0 0.0
        %1728 = vmatprep.subr.mxu0 0.0
        %1729 = vmatpush1.xpose.msra.mxu0 0.0
        %1730 = vmatprep.subr.mxu0 0.0
        %1731 = vmatpush1.xpose.msra.mxu0 0.0
        %1732 = vmatprep.subr.mxu0 0.0
        %1733 = vmatpush1.xpose.msra.mxu0 0.0
        %1734 = vmatprep.subr.mxu0 0.0
        %1735 = vmatpush1.xpose.msra.mxu0 0.0
        %1736 = vmatprep.subr.mxu0 0.0
        %1737 = vmatpush1.xpose.msra.mxu0 0.0
        %1738 = vmatprep.subr.mxu0 0.0
        %1739 = vmatpush1.xpose.msra.mxu0 0.0
        %1740 = vmatprep.subr.mxu0 0.0
        %1741 = vmatpush1.xpose.msra.mxu0 0.0
        %1742 = vmatprep.subr.mxu0 0.0
        %1743 = vmatpush1.xpose.msra.mxu0 0.0
        %1744 = vmatprep.subr.mxu0 0.0
        %1745 = vmatpush1.xpose.msra.mxu0 0.0
        %1746 = vmatprep.subr.mxu0 0.0
        %1747 = vmatpush1.xpose.msra.mxu0 0.0
        %1748 = vmatprep.subr.mxu0 0.0
        %1749 = vmatpush1.xpose.msra.mxu0 0.0
        %1750 = vmatprep.subr.mxu0 0.0
        %1751 = vmatpush1.xpose.msra.mxu0 0.0
        %1752 = vmatprep.subr.mxu0 0.0
        %1753 = vmatpush1.xpose.msra.mxu0 0.0
        %1754 = vmatprep.subr.mxu0 0.0
        %1755 = vmatpush1.xpose.msra.mxu0 0.0
        %1756 = vmatprep.mubr.f32.mxu0 0.0
        %1757 = vmatmul.mubr.f32.gmra.mrb[0].mxu0 %v1593
        %v1758 = vpop.f32.mrb[0].mxu0
        %v1759 = vadd.f32 %v1675, %v1758
        %v1760 = vpop.f32.mrb[0].mxu0
        %1761 = vmatprep.mubr.f32.mxu0 0.0
        %1762 = vmatmul.mubr.f32.gmra.mrb[0].mxu0 %v1597
        %v1763 = vpop.f32.mrb[0].mxu0
        %v1764 = vadd.f32 %v1676, %v1763
        %v1765 = vpop.f32.mrb[0].mxu0
        %1766 = vmatprep.mubr.f32.mxu0 0.0
        %1767 = vmatmul.mubr.f32.gmra.mrb[0].mxu0 %v1603
        %v1768 = vpop.f32.mrb[0].mxu0
        %v1769 = vadd.f32 %v1677, %v1768
        %v1770 = vpop.f32.mrb[0].mxu0
        %1771 = vmatprep.mubr.f32.mxu0 0.0
        %1772 = vmatmul.mubr.f32.gmra.mrb[0].mxu0 %v1607
        %v1773 = vpop.f32.mrb[0].mxu0
        %v1774 = vadd.f32 %v1678, %v1773
        %v1775 = vpop.f32.mrb[0].mxu0
        %1776 = vmatprep.mubr.f32.mxu0 0.0
        %1777 = vmatmul.mubr.f32.gmra.mrb[0].mxu0 %v1613
        %v1778 = vpop.f32.mrb[0].mxu0
        %v1779 = vadd.f32 %v1679, %v1778
        %v1780 = vpop.f32.mrb[0].mxu0
        %1781 = vdwg.mxu0
        %vm1782 = vcmask 277504
        %v1783 = vsel %vm1782, %v1759, -inf
        %1784 = vmax.xlane.f32.xlu0 %v1783
        %v1785 = vpop.xlane.xlu0 %1784
        %v1786 = vsel %vm1782, %v1764, -inf
        %1787 = vmax.xlane.f32.xlu0 %v1786
        %v1788 = vpop.xlane.xlu0 %1787
        %v1789 = vsel %vm1782, %v1769, -inf
        %1790 = vmax.xlane.f32.xlu0 %v1789
        %v1791 = vpop.xlane.xlu0 %1790
        %v1792 = vsel %vm1782, %v1774, -inf
        %1793 = vmax.xlane.f32.xlu0 %v1792
        %v1794 = vpop.xlane.xlu0 %1793
        %vm1795 = vcmask 271360
        %v1796 = vsel %vm1795, %v1779, -inf
        %1797 = vmax.xlane.f32.xlu0 %v1796
        %v1798 = vpop.xlane.xlu0 %1797
        %v1799 = vsub.f32 %v1759, %v1785
        %v1800 = vsub.f32 %v1764, %v1788
        %v1801 = vsub.f32 %v1769, %v1791
        %v1802 = vsub.f32 %v1774, %v1794
        %v1803 = vsub.f32 %v1779, %v1798
        %v1804 = vmul.f32 %v1799, 1.442695
        %v1805 = vpow.pop %v1804
        %v1806 = vmul.f32 %v1800, 1.442695
        %v1807 = vpow.pop %v1806
        %v1808 = vmul.f32 %v1801, 1.442695
        %v1809 = vpow.pop %v1808
        %v1810 = vmul.f32 %v1802, 1.442695
        %v1811 = vpow.pop %v1810
        %v1812 = vmul.f32 %v1803, 1.442695
        %v1813 = vpow.pop %v1812
        %v1814 = vsel %vm1782, %v1805, 0.0
        %1815 = vadd.xlane.f32.xlu0 %v1814
        %v1816 = vpop.xlane.xlu0 %1815
        %v1817 = vsel %vm1782, %v1807, 0.0
        %1818 = vadd.xlane.f32.xlu0 %v1817
        %v1819 = vpop.xlane.xlu0 %1818
        %v1820 = vsel %vm1782, %v1809, 0.0
        %1821 = vadd.xlane.f32.xlu0 %v1820
        %v1822 = vpop.xlane.xlu0 %1821
        %v1823 = vsel %vm1782, %v1811, 0.0
        %1824 = vadd.xlane.f32.xlu0 %v1823
        %v1825 = vpop.xlane.xlu0 %1824
        %v1826 = vsel %vm1795, %v1813, 0.0
        %1827 = vadd.xlane.f32.xlu0 %v1826
        %v1828 = vpop.xlane.xlu0 %1827
        %v1829 = vrcp.pop %v1816
        %v1830 = vrcp.pop %v1819
        %v1831 = vrcp.pop %v1822
        %v1832 = vrcp.pop %v1825
        %v1833 = vrcp.pop %v1828
        %v1834 = vmul.f32 %v1805, %v1829
        %v1835 = vmul.f32 %v1807, %v1830
        %v1836 = vmul.f32 %v1809, %v1831
        %v1837 = vmul.f32 %v1811, %v1832
        %v1838 = vmul.f32 %v1813, %v1833
        %v1839 = vmul.f32 %v1654, %v1686
        %v1840 = vmul.f32 %v1657, %v1686
        %v1841 = vmul.f32 %v1662, %v1686
        %v1842 = vmul.f32 %v1665, %v1686
        %v1843 = vmul.f32 %v1670, %v1686
        %vm1844 = vcmp.ge.s32.totalorder %v1681, 32
        %vm1845 = vcmp.lt.s32.totalorder %v1681, 64
        %vm1846 = vmand %vm1844, %vm1845
        %v1847 = vsel %vm1846, 1, 0
        %v1848 = vcvt.s32.f32 %v1847
        %v1849 = vmul.f32 %v1595, %v1848
        %v1850 = vmul.f32 %v1599, %v1848
        %v1851 = vmul.f32 %v1605, %v1848
        %v1852 = vmul.f32 %v1609, %v1848
        %v1853 = vmul.f32 %v1615, %v1848
        %1854 = vmatprep.subr.mxu0 0.0
        %1855 = vmatpush1.xpose.msra.mxu0 %v1849
        %1856 = vmatprep.subr.mxu0 0.0
        %1857 = vmatpush1.xpose.msra.mxu0 %v1850
        %1858 = vmatprep.subr.mxu0 0.0
        %1859 = vmatpush1.xpose.msra.mxu0 %v1851
        %1860 = vmatprep.subr.mxu0 0.0
        %1861 = vmatpush1.xpose.msra.mxu0 %v1852
        %1862 = vmatprep.subr.mxu0 0.0
        %1863 = vmatpush1.xpose.msra.mxu0 %v1853
        %1864 = vmatprep.subr.mxu0 0.0
        %1865 = vmatpush1.xpose.msra.mxu0 0.0
        %1866 = vmatprep.subr.mxu0 0.0
        %1867 = vmatpush1.xpose.msra.mxu0 0.0
        %1868 = vmatprep.subr.mxu0 0.0
        %1869 = vmatpush1.xpose.msra.mxu0 0.0
        %1870 = vmatprep.subr.mxu0 0.0
        %1871 = vmatpush1.xpose.msra.mxu0 0.0
        %1872 = vmatprep.subr.mxu0 0.0
        %1873 = vmatpush1.xpose.msra.mxu0 0.0
        %1874 = vmatprep.subr.mxu0 0.0
        %1875 = vmatpush1.xpose.msra.mxu0 0.0
        %1876 = vmatprep.subr.mxu0 0.0
        %1877 = vmatpush1.xpose.msra.mxu0 0.0
        %1878 = vmatprep.subr.mxu0 0.0
        %1879 = vmatpush1.xpose.msra.mxu0 0.0
        %1880 = vmatprep.subr.mxu0 0.0
        %1881 = vmatpush1.xpose.msra.mxu0 0.0
        %1882 = vmatprep.subr.mxu0 0.0
        %1883 = vmatpush1.xpose.msra.mxu0 0.0
        %1884 = vmatprep.subr.mxu0 0.0
        %1885 = vmatpush1.xpose.msra.mxu0 0.0
        %1886 = vmatprep.subr.mxu0 0.0
        %1887 = vmatpush1.xpose.msra.mxu0 0.0
        %1888 = vmatprep.subr.mxu0 0.0
        %1889 = vmatpush1.xpose.msra.mxu0 0.0
        %1890 = vmatprep.subr.mxu0 0.0
        %1891 = vmatpush1.xpose.msra.mxu0 0.0
        %1892 = vmatprep.subr.mxu0 0.0
        %1893 = vmatpush1.xpose.msra.mxu0 0.0
        %1894 = vmatprep.subr.mxu0 0.0
        %1895 = vmatpush1.xpose.msra.mxu0 0.0
        %1896 = vmatprep.subr.mxu0 0.0
        %1897 = vmatpush1.xpose.msra.mxu0 0.0
        %1898 = vmatprep.subr.mxu0 0.0
        %1899 = vmatpush1.xpose.msra.mxu0 0.0
        %1900 = vmatprep.subr.mxu0 0.0
        %1901 = vmatpush1.xpose.msra.mxu0 0.0
        %1902 = vmatprep.subr.mxu0 0.0
        %1903 = vmatpush1.xpose.msra.mxu0 0.0
        %1904 = vmatprep.subr.mxu0 0.0
        %1905 = vmatpush1.xpose.msra.mxu0 0.0
        %1906 = vmatprep.subr.mxu0 0.0
        %1907 = vmatpush1.xpose.msra.mxu0 0.0
        %1908 = vmatprep.subr.mxu0 0.0
        %1909 = vmatpush1.xpose.msra.mxu0 0.0
        %1910 = vmatprep.subr.mxu0 0.0
        %1911 = vmatpush1.xpose.msra.mxu0 0.0
        %1912 = vmatprep.subr.mxu0 0.0
        %1913 = vmatpush1.xpose.msra.mxu0 0.0
        %1914 = vmatprep.subr.mxu0 0.0
        %1915 = vmatpush1.xpose.msra.mxu0 0.0
        %1916 = vmatprep.subr.mxu0 0.0
        %1917 = vmatpush1.xpose.msra.mxu0 0.0
        %1918 = vmatprep.mubr.f32.mxu0 0.0
        %1919 = vmatmul.mubr.f32.gmra.mrb[0].mxu0 %v1593
        %v1920 = vpop.f32.mrb[0].mxu0
        %v1921 = vadd.f32 %v1675, %v1920
        %v1922 = vpop.f32.mrb[0].mxu0
        %1923 = vmatprep.mubr.f32.mxu0 0.0
        %1924 = vmatmul.mubr.f32.gmra.mrb[0].mxu0 %v1597
        %v1925 = vpop.f32.mrb[0].mxu0
        %v1926 = vadd.f32 %v1676, %v1925
        %v1927 = vpop.f32.mrb[0].mxu0
        %1928 = vmatprep.mubr.f32.mxu0 0.0
        %1929 = vmatmul.mubr.f32.gmra.mrb[0].mxu0 %v1603
        %v1930 = vpop.f32.mrb[0].mxu0
        %v1931 = vadd.f32 %v1677, %v1930
        %v1932 = vpop.f32.mrb[0].mxu0
        %1933 = vmatprep.mubr.f32.mxu0 0.0
        %1934 = vmatmul.mubr.f32.gmra.mrb[0].mxu0 %v1607
        %v1935 = vpop.f32.mrb[0].mxu0
        %v1936 = vadd.f32 %v1678, %v1935
        %v1937 = vpop.f32.mrb[0].mxu0
        %1938 = vmatprep.mubr.f32.mxu0 0.0
        %1939 = vmatmul.mubr.f32.gmra.mrb[0].mxu0 %v1613
        %v1940 = vpop.f32.mrb[0].mxu0
        %v1941 = vadd.f32 %v1679, %v1940
        %v1942 = vpop.f32.mrb[0].mxu0
        %1943 = vdwg.mxu0
        %v1944 = vsel %vm1782, %v1921, -inf
        %1945 = vmax.xlane.f32.xlu0 %v1944
        %v1946 = vpop.xlane.xlu0 %1945
        %v1947 = vsel %vm1782, %v1926, -inf
        %1948 = vmax.xlane.f32.xlu0 %v1947
        %v1949 = vpop.xlane.xlu0 %1948
        %v1950 = vsel %vm1782, %v1931, -inf
        %1951 = vmax.xlane.f32.xlu0 %v1950
        %v1952 = vpop.xlane.xlu0 %1951
        %v1953 = vsel %vm1782, %v1936, -inf
        %1954 = vmax.xlane.f32.xlu0 %v1953
        %v1955 = vpop.xlane.xlu0 %1954
        %v1956 = vsel %vm1795, %v1941, -inf
        %1957 = vmax.xlane.f32.xlu0 %v1956
        %v1958 = vpop.xlane.xlu0 %1957
        %v1959 = vsub.f32 %v1921, %v1946
        %v1960 = vsub.f32 %v1926, %v1949
        %v1961 = vsub.f32 %v1931, %v1952
        %v1962 = vsub.f32 %v1936, %v1955
        %v1963 = vsub.f32 %v1941, %v1958
        %v1964 = vmul.f32 %v1959, 1.442695
        %v1965 = vpow.pop %v1964
        %v1966 = vmul.f32 %v1960, 1.442695
        %v1967 = vpow.pop %v1966
        %v1968 = vmul.f32 %v1961, 1.442695
        %v1969 = vpow.pop %v1968
        %v1970 = vmul.f32 %v1962, 1.442695
        %v1971 = vpow.pop %v1970
        %v1972 = vmul.f32 %v1963, 1.442695
        %v1973 = vpow.pop %v1972
        %v1974 = vsel %vm1782, %v1965, 0.0
        %1975 = vadd.xlane.f32.xlu0 %v1974
        %v1976 = vpop.xlane.xlu0 %1975
        %v1977 = vsel %vm1782, %v1967, 0.0
        %1978 = vadd.xlane.f32.xlu0 %v1977
        %v1979 = vpop.xlane.xlu0 %1978
        %v1980 = vsel %vm1782, %v1969, 0.0
        %1981 = vadd.xlane.f32.xlu0 %v1980
        %v1982 = vpop.xlane.xlu0 %1981
        %v1983 = vsel %vm1782, %v1971, 0.0
        %1984 = vadd.xlane.f32.xlu0 %v1983
        %v1985 = vpop.xlane.xlu0 %1984
        %v1986 = vsel %vm1795, %v1973, 0.0
        %1987 = vadd.xlane.f32.xlu0 %v1986
        %v1988 = vpop.xlane.xlu0 %1987
        %v1989 = vrcp.pop %v1976
        %v1990 = vrcp.pop %v1979
        %v1991 = vrcp.pop %v1982
        %v1992 = vrcp.pop %v1985
        %v1993 = vrcp.pop %v1988
        %v1994 = vmul.f32 %v1965, %v1989
        %v1995 = vmul.f32 %v1967, %v1990
        %v1996 = vmul.f32 %v1969, %v1991
        %v1997 = vmul.f32 %v1971, %v1992
        %v1998 = vmul.f32 %v1973, %v1993
        %v1999 = vmul.f32 %v1654, %v1848
        %v2000 = vmul.f32 %v1657, %v1848
        %v2001 = vmul.f32 %v1662, %v1848
        %v2002 = vmul.f32 %v1665, %v1848
        %v2003 = vmul.f32 %v1670, %v1848
        %v2005 = vsel %vm1782, %v1994, 0
        %v2008 = vsel %vm1782, %v1995, 0
        %v2011 = vsel %vm1782, %v1996, 0
        %v2014 = vsel %vm1782, %v1997, 0
        %v2017 = vsel %vm1782, %v1998, 0
        %v2020 = vsel %vm1305, %v2003, 0
        %2022 = vmatprep.subr.mxu0 0.0
        %2023 = vmatpush1.msra.mxu0 %v1999
        %2024 = vmatprep.subr.mxu0 0.0
        %2025 = vmatpush1.msra.mxu0 %v2000
        %2026 = vmatprep.subr.mxu0 0.0
        %2027 = vmatpush1.msra.mxu0 %v2001
        %2028 = vmatprep.subr.mxu0 0.0
        %2029 = vmatpush1.msra.mxu0 %v2002
        %2030 = vmatprep.subr.mxu0 0.0
        %2031 = vmatpush1.msra.mxu0 %v2020
        %2032 = vmatprep.subr.mxu0 0.0
        %2033 = vmatpush1.msra.mxu0 0.0
        %2034 = vmatprep.subr.mxu0 0.0
        %2035 = vmatpush1.msra.mxu0 0.0
        %2036 = vmatprep.subr.mxu0 0.0
        %2037 = vmatpush1.msra.mxu0 0.0
        %2038 = vmatprep.subr.mxu0 0.0
        %2039 = vmatpush1.msra.mxu0 0.0
        %2040 = vmatprep.subr.mxu0 0.0
        %2041 = vmatpush1.msra.mxu0 0.0
        %2042 = vmatprep.subr.mxu0 0.0
        %2043 = vmatpush1.msra.mxu0 0.0
        %2044 = vmatprep.subr.mxu0 0.0
        %2045 = vmatpush1.msra.mxu0 0.0
        %2046 = vmatprep.subr.mxu0 0.0
        %2047 = vmatpush1.msra.mxu0 0.0
        %2048 = vmatprep.subr.mxu0 0.0
        %2049 = vmatpush1.msra.mxu0 0.0
        %2050 = vmatprep.subr.mxu0 0.0
        %2051 = vmatpush1.msra.mxu0 0.0
        %2052 = vmatprep.subr.mxu0 0.0
        %2053 = vmatpush1.msra.mxu0 0.0
        %2054 = vmatprep.subr.mxu0 0.0
        %2055 = vmatpush1.msra.mxu0 0.0
        %2056 = vmatprep.subr.mxu0 0.0
        %2057 = vmatpush1.msra.mxu0 0.0
        %2058 = vmatprep.subr.mxu0 0.0
        %2059 = vmatpush1.msra.mxu0 0.0
        %2060 = vmatprep.subr.mxu0 0.0
        %2061 = vmatpush1.msra.mxu0 0.0
        %2062 = vmatprep.subr.mxu0 0.0
        %2063 = vmatpush1.msra.mxu0 0.0
        %2064 = vmatprep.subr.mxu0 0.0
        %2065 = vmatpush1.msra.mxu0 0.0
        %2066 = vmatprep.subr.mxu0 0.0
        %2067 = vmatpush1.msra.mxu0 0.0
        %2068 = vmatprep.subr.mxu0 0.0
        %2069 = vmatpush1.msra.mxu0 0.0
        %2070 = vmatprep.subr.mxu0 0.0
        %2071 = vmatpush1.msra.mxu0 0.0
        %2072 = vmatprep.subr.mxu0 0.0
        %2073 = vmatpush1.msra.mxu0 0.0
        %2074 = vmatprep.subr.mxu0 0.0
        %2075 = vmatpush1.msra.mxu0 0.0
        %2076 = vmatprep.subr.mxu0 0.0
        %2077 = vmatpush1.msra.mxu0 0.0
        %2078 = vmatprep.subr.mxu0 0.0
        %2079 = vmatpush1.msra.mxu0 0.0
        %2080 = vmatprep.subr.mxu0 0.0
        %2081 = vmatpush1.msra.mxu0 0.0
        %2082 = vmatprep.subr.mxu0 0.0
        %2083 = vmatpush1.msra.mxu0 0.0
        %2084 = vmatprep.subr.mxu0 0.0
        %2085 = vmatpush1.msra.mxu0 0.0
        %2086 = vmatprep.mubr.f32.mxu0 0.0
        %2087 = vmatmul.mubr.f32.gmra.mrb[0].mxu0 %v2005
        %v2088 = vpop.f32.mrb[0].mxu0
        %v2089 = vadd.f32 0.0, %v2088
        %v2090 = vpop.f32.mrb[0].mxu0
        %2091 = vmatprep.mubr.f32.mxu0 0.0
        %2092 = vmatmul.mubr.f32.gmra.mrb[0].mxu0 %v2008
        %v2093 = vpop.f32.mrb[0].mxu0
        %v2094 = vadd.f32 0.0, %v2093
        %v2095 = vpop.f32.mrb[0].mxu0
        %2096 = vmatprep.mubr.f32.mxu0 0.0
        %2097 = vmatmul.mubr.f32.gmra.mrb[0].mxu0 %v2011
        %v2098 = vpop.f32.mrb[0].mxu0
        %v2099 = vadd.f32 0.0, %v2098
        %v2100 = vpop.f32.mrb[0].mxu0
        %2101 = vmatprep.mubr.f32.mxu0 0.0
        %2102 = vmatmul.mubr.f32.gmra.mrb[0].mxu0 %v2014
        %v2103 = vpop.f32.mrb[0].mxu0
        %v2104 = vadd.f32 0.0, %v2103
        %v2105 = vpop.f32.mrb[0].mxu0
        %2106 = vmatprep.mubr.f32.mxu0 0.0
        %2107 = vmatmul.mubr.f32.gmra.mrb[0].mxu0 %v2017
        %v2108 = vpop.f32.mrb[0].mxu0
        %v2109 = vadd.f32 0.0, %v2108
        %v2110 = vpop.f32.mrb[0].mxu0
        %2111 = vdwg.mxu0
        %v2113 = vsel %vm1782, %v1834, 0
        %v2116 = vsel %vm1782, %v1835, 0
        %v2119 = vsel %vm1782, %v1836, 0
        %v2122 = vsel %vm1782, %v1837, 0
        %v2125 = vsel %vm1782, %v1838, 0
        %v2128 = vsel %vm1305, %v1843, 0
        %2130 = vmatprep.subr.mxu0 0.0
        %2131 = vmatpush1.msra.mxu0 %v1839
        %2132 = vmatprep.subr.mxu0 0.0
        %2133 = vmatpush1.msra.mxu0 %v1840
        %2134 = vmatprep.subr.mxu0 0.0
        %2135 = vmatpush1.msra.mxu0 %v1841
        %2136 = vmatprep.subr.mxu0 0.0
        %2137 = vmatpush1.msra.mxu0 %v1842
        %2138 = vmatprep.subr.mxu0 0.0
        %2139 = vmatpush1.msra.mxu0 %v2128
        %2140 = vmatprep.subr.mxu0 0.0
        %2141 = vmatpush1.msra.mxu0 0.0
        %2142 = vmatprep.subr.mxu0 0.0
        %2143 = vmatpush1.msra.mxu0 0.0
        %2144 = vmatprep.subr.mxu0 0.0
        %2145 = vmatpush1.msra.mxu0 0.0
        %2146 = vmatprep.subr.mxu0 0.0
        %2147 = vmatpush1.msra.mxu0 0.0
        %2148 = vmatprep.subr.mxu0 0.0
        %2149 = vmatpush1.msra.mxu0 0.0
        %2150 = vmatprep.subr.mxu0 0.0
        %2151 = vmatpush1.msra.mxu0 0.0
        %2152 = vmatprep.subr.mxu0 0.0
        %2153 = vmatpush1.msra.mxu0 0.0
        %2154 = vmatprep.subr.mxu0 0.0
        %2155 = vmatpush1.msra.mxu0 0.0
        %2156 = vmatprep.subr.mxu0 0.0
        %2157 = vmatpush1.msra.mxu0 0.0
        %2158 = vmatprep.subr.mxu0 0.0
        %2159 = vmatpush1.msra.mxu0 0.0
        %2160 = vmatprep.subr.mxu0 0.0
        %2161 = vmatpush1.msra.mxu0 0.0
        %2162 = vmatprep.subr.mxu0 0.0
        %2163 = vmatpush1.msra.mxu0 0.0
        %2164 = vmatprep.subr.mxu0 0.0
        %2165 = vmatpush1.msra.mxu0 0.0
        %2166 = vmatprep.subr.mxu0 0.0
        %2167 = vmatpush1.msra.mxu0 0.0
        %2168 = vmatprep.subr.mxu0 0.0
        %2169 = vmatpush1.msra.mxu0 0.0
        %2170 = vmatprep.subr.mxu0 0.0
        %2171 = vmatpush1.msra.mxu0 0.0
        %2172 = vmatprep.subr.mxu0 0.0
        %2173 = vmatpush1.msra.mxu0 0.0
        %2174 = vmatprep.subr.mxu0 0.0
        %2175 = vmatpush1.msra.mxu0 0.0
        %2176 = vmatprep.subr.mxu0 0.0
        %2177 = vmatpush1.msra.mxu0 0.0
        %2178 = vmatprep.subr.mxu0 0.0
        %2179 = vmatpush1.msra.mxu0 0.0
        %2180 = vmatprep.subr.mxu0 0.0
        %2181 = vmatpush1.msra.mxu0 0.0
        %2182 = vmatprep.subr.mxu0 0.0
        %2183 = vmatpush1.msra.mxu0 0.0
        %2184 = vmatprep.subr.mxu0 0.0
        %2185 = vmatpush1.msra.mxu0 0.0
        %2186 = vmatprep.subr.mxu0 0.0
        %2187 = vmatpush1.msra.mxu0 0.0
        %2188 = vmatprep.subr.mxu0 0.0
        %2189 = vmatpush1.msra.mxu0 0.0
        %2190 = vmatprep.subr.mxu0 0.0
        %2191 = vmatpush1.msra.mxu0 0.0
        %2192 = vmatprep.subr.mxu0 0.0
        %2193 = vmatpush1.msra.mxu0 0.0
        %2194 = vmatprep.mubr.f32.mxu0 0.0
        %2195 = vmatmul.mubr.f32.gmra.mrb[0].mxu0 %v2113
        %v2196 = vpop.f32.mrb[0].mxu0
        %v2197 = vadd.f32 %v2089, %v2196
        %v2198 = vpop.f32.mrb[0].mxu0
        %2199 = vmatprep.mubr.f32.mxu0 0.0
        %2200 = vmatmul.mubr.f32.gmra.mrb[0].mxu0 %v2116
        %v2201 = vpop.f32.mrb[0].mxu0
        %v2202 = vadd.f32 %v2094, %v2201
        %v2203 = vpop.f32.mrb[0].mxu0
        %2204 = vmatprep.mubr.f32.mxu0 0.0
        %2205 = vmatmul.mubr.f32.gmra.mrb[0].mxu0 %v2119
        %v2206 = vpop.f32.mrb[0].mxu0
        %v2207 = vadd.f32 %v2099, %v2206
        %v2208 = vpop.f32.mrb[0].mxu0
        %2209 = vmatprep.mubr.f32.mxu0 0.0
        %2210 = vmatmul.mubr.f32.gmra.mrb[0].mxu0 %v2122
        %v2211 = vpop.f32.mrb[0].mxu0
        %v2212 = vadd.f32 %v2104, %v2211
        %v2213 = vpop.f32.mrb[0].mxu0
        %2214 = vmatprep.mubr.f32.mxu0 0.0
        %2215 = vmatmul.mubr.f32.gmra.mrb[0].mxu0 %v2125
        %v2216 = vpop.f32.mrb[0].mxu0
        %v2217 = vadd.f32 %v2109, %v2216
        %v2218 = vpop.f32.mrb[0].mxu0
        %2219 = vdwg.mxu0
        %vm2220 = vcmp.ge.s32.totalorder %v1681, 64
        %vm2221 = vcmp.lt.s32.totalorder %v1681, 96
        %vm2222 = vmand %vm2220, %vm2221
        %v2223 = vsel %vm2222, 1, 0
        %v2224 = vcvt.s32.f32 %v2223
        %v2225 = vmul.f32 %v1595, %v2224
        %v2226 = vmul.f32 %v1599, %v2224
        %v2227 = vmul.f32 %v1605, %v2224
        %v2228 = vmul.f32 %v1609, %v2224
        %v2229 = vmul.f32 %v1615, %v2224
        %2230 = vmatprep.subr.mxu0 0.0
        %2231 = vmatpush1.xpose.msra.mxu0 %v2225
        %2232 = vmatprep.subr.mxu0 0.0
        %2233 = vmatpush1.xpose.msra.mxu0 %v2226
        %2234 = vmatprep.subr.mxu0 0.0
        %2235 = vmatpush1.xpose.msra.mxu0 %v2227
        %2236 = vmatprep.subr.mxu0 0.0
        %2237 = vmatpush1.xpose.msra.mxu0 %v2228
        %2238 = vmatprep.subr.mxu0 0.0
        %2239 = vmatpush1.xpose.msra.mxu0 %v2229
        %2240 = vmatprep.subr.mxu0 0.0
        %2241 = vmatpush1.xpose.msra.mxu0 0.0
        %2242 = vmatprep.subr.mxu0 0.0
        %2243 = vmatpush1.xpose.msra.mxu0 0.0
        %2244 = vmatprep.subr.mxu0 0.0
        %2245 = vmatpush1.xpose.msra.mxu0 0.0
        %2246 = vmatprep.subr.mxu0 0.0
        %2247 = vmatpush1.xpose.msra.mxu0 0.0
        %2248 = vmatprep.subr.mxu0 0.0
        %2249 = vmatpush1.xpose.msra.mxu0 0.0
        %2250 = vmatprep.subr.mxu0 0.0
        %2251 = vmatpush1.xpose.msra.mxu0 0.0
        %2252 = vmatprep.subr.mxu0 0.0
        %2253 = vmatpush1.xpose.msra.mxu0 0.0
        %2254 = vmatprep.subr.mxu0 0.0
        %2255 = vmatpush1.xpose.msra.mxu0 0.0
        %2256 = vmatprep.subr.mxu0 0.0
        %2257 = vmatpush1.xpose.msra.mxu0 0.0
        %2258 = vmatprep.subr.mxu0 0.0
        %2259 = vmatpush1.xpose.msra.mxu0 0.0
        %2260 = vmatprep.subr.mxu0 0.0
        %2261 = vmatpush1.xpose.msra.mxu0 0.0
        %2262 = vmatprep.subr.mxu0 0.0
        %2263 = vmatpush1.xpose.msra.mxu0 0.0
        %2264 = vmatprep.subr.mxu0 0.0
        %2265 = vmatpush1.xpose.msra.mxu0 0.0
        %2266 = vmatprep.subr.mxu0 0.0
        %2267 = vmatpush1.xpose.msra.mxu0 0.0
        %2268 = vmatprep.subr.mxu0 0.0
        %2269 = vmatpush1.xpose.msra.mxu0 0.0
        %2270 = vmatprep.subr.mxu0 0.0
        %2271 = vmatpush1.xpose.msra.mxu0 0.0
        %2272 = vmatprep.subr.mxu0 0.0
        %2273 = vmatpush1.xpose.msra.mxu0 0.0
        %2274 = vmatprep.subr.mxu0 0.0
        %2275 = vmatpush1.xpose.msra.mxu0 0.0
        %2276 = vmatprep.subr.mxu0 0.0
        %2277 = vmatpush1.xpose.msra.mxu0 0.0
        %2278 = vmatprep.subr.mxu0 0.0
        %2279 = vmatpush1.xpose.msra.mxu0 0.0
        %2280 = vmatprep.subr.mxu0 0.0
        %2281 = vmatpush1.xpose.msra.mxu0 0.0
        %2282 = vmatprep.subr.mxu0 0.0
        %2283 = vmatpush1.xpose.msra.mxu0 0.0
        %2284 = vmatprep.subr.mxu0 0.0
        %2285 = vmatpush1.xpose.msra.mxu0 0.0
        %2286 = vmatprep.subr.mxu0 0.0
        %2287 = vmatpush1.xpose.msra.mxu0 0.0
        %2288 = vmatprep.subr.mxu0 0.0
        %2289 = vmatpush1.xpose.msra.mxu0 0.0
        %2290 = vmatprep.subr.mxu0 0.0
        %2291 = vmatpush1.xpose.msra.mxu0 0.0
        %2292 = vmatprep.subr.mxu0 0.0
        %2293 = vmatpush1.xpose.msra.mxu0 0.0
        %2294 = vmatprep.mubr.f32.mxu0 0.0
        %2295 = vmatmul.mubr.f32.gmra.mrb[0].mxu0 %v1593
        %v2296 = vpop.f32.mrb[0].mxu0
        %v2297 = vadd.f32 %v1675, %v2296
        %v2298 = vpop.f32.mrb[0].mxu0
        %2299 = vmatprep.mubr.f32.mxu0 0.0
        %2300 = vmatmul.mubr.f32.gmra.mrb[0].mxu0 %v1597
        %v2301 = vpop.f32.mrb[0].mxu0
        %v2302 = vadd.f32 %v1676, %v2301
        %v2303 = vpop.f32.mrb[0].mxu0
        %2304 = vmatprep.mubr.f32.mxu0 0.0
        %2305 = vmatmul.mubr.f32.gmra.mrb[0].mxu0 %v1603
        %v2306 = vpop.f32.mrb[0].mxu0
        %v2307 = vadd.f32 %v1677, %v2306
        %v2308 = vpop.f32.mrb[0].mxu0
        %2309 = vmatprep.mubr.f32.mxu0 0.0
        %2310 = vmatmul.mubr.f32.gmra.mrb[0].mxu0 %v1607
        %v2311 = vpop.f32.mrb[0].mxu0
        %v2312 = vadd.f32 %v1678, %v2311
        %v2313 = vpop.f32.mrb[0].mxu0
        %2314 = vmatprep.mubr.f32.mxu0 0.0
        %2315 = vmatmul.mubr.f32.gmra.mrb[0].mxu0 %v1613
        %v2316 = vpop.f32.mrb[0].mxu0
        %v2317 = vadd.f32 %v1679, %v2316
        %v2318 = vpop.f32.mrb[0].mxu0
        %2319 = vdwg.mxu0
        %v2320 = vsel %vm1782, %v2297, -inf
        %2321 = vmax.xlane.f32.xlu0 %v2320
        %v2322 = vpop.xlane.xlu0 %2321
        %v2323 = vsel %vm1782, %v2302, -inf
        %2324 = vmax.xlane.f32.xlu0 %v2323
        %v2325 = vpop.xlane.xlu0 %2324
        %v2326 = vsel %vm1782, %v2307, -inf
        %2327 = vmax.xlane.f32.xlu0 %v2326
        %v2328 = vpop.xlane.xlu0 %2327
        %v2329 = vsel %vm1782, %v2312, -inf
        %2330 = vmax.xlane.f32.xlu0 %v2329
        %v2331 = vpop.xlane.xlu0 %2330
        %v2332 = vsel %vm1795, %v2317, -inf
        %2333 = vmax.xlane.f32.xlu0 %v2332
        %v2334 = vpop.xlane.xlu0 %2333
        %v2335 = vsub.f32 %v2297, %v2322
        %v2336 = vsub.f32 %v2302, %v2325
        %v2337 = vsub.f32 %v2307, %v2328
        %v2338 = vsub.f32 %v2312, %v2331
        %v2339 = vsub.f32 %v2317, %v2334
        %v2340 = vmul.f32 %v2335, 1.442695
        %v2341 = vpow.pop %v2340
        %v2342 = vmul.f32 %v2336, 1.442695
        %v2343 = vpow.pop %v2342
        %v2344 = vmul.f32 %v2337, 1.442695
        %v2345 = vpow.pop %v2344
        %v2346 = vmul.f32 %v2338, 1.442695
        %v2347 = vpow.pop %v2346
        %v2348 = vmul.f32 %v2339, 1.442695
        %v2349 = vpow.pop %v2348
        %v2350 = vsel %vm1782, %v2341, 0.0
        %2351 = vadd.xlane.f32.xlu0 %v2350
        %v2352 = vpop.xlane.xlu0 %2351
        %v2353 = vsel %vm1782, %v2343, 0.0
        %2354 = vadd.xlane.f32.xlu0 %v2353
        %v2355 = vpop.xlane.xlu0 %2354
        %v2356 = vsel %vm1782, %v2345, 0.0
        %2357 = vadd.xlane.f32.xlu0 %v2356
        %v2358 = vpop.xlane.xlu0 %2357
        %v2359 = vsel %vm1782, %v2347, 0.0
        %2360 = vadd.xlane.f32.xlu0 %v2359
        %v2361 = vpop.xlane.xlu0 %2360
        %v2362 = vsel %vm1795, %v2349, 0.0
        %2363 = vadd.xlane.f32.xlu0 %v2362
        %v2364 = vpop.xlane.xlu0 %2363
        %v2365 = vrcp.pop %v2352
        %v2366 = vrcp.pop %v2355
        %v2367 = vrcp.pop %v2358
        %v2368 = vrcp.pop %v2361
        %v2369 = vrcp.pop %v2364
        %v2370 = vmul.f32 %v2341, %v2365
        %v2371 = vmul.f32 %v2343, %v2366
        %v2372 = vmul.f32 %v2345, %v2367
        %v2373 = vmul.f32 %v2347, %v2368
        %v2374 = vmul.f32 %v2349, %v2369
        %v2375 = vmul.f32 %v1654, %v2224
        %v2376 = vmul.f32 %v1657, %v2224
        %v2377 = vmul.f32 %v1662, %v2224
        %v2378 = vmul.f32 %v1665, %v2224
        %v2379 = vmul.f32 %v1670, %v2224
        %v2381 = vsel %vm1782, %v2370, 0
        %v2384 = vsel %vm1782, %v2371, 0
        %v2387 = vsel %vm1782, %v2372, 0
        %v2390 = vsel %vm1782, %v2373, 0
        %v2393 = vsel %vm1782, %v2374, 0
        %v2396 = vsel %vm1305, %v2379, 0
        %2398 = vmatprep.subr.mxu0 0.0
        %2399 = vmatpush1.msra.mxu0 %v2375
        %2400 = vmatprep.subr.mxu0 0.0
        %2401 = vmatpush1.msra.mxu0 %v2376
        %2402 = vmatprep.subr.mxu0 0.0
        %2403 = vmatpush1.msra.mxu0 %v2377
        %2404 = vmatprep.subr.mxu0 0.0
        %2405 = vmatpush1.msra.mxu0 %v2378
        %2406 = vmatprep.subr.mxu0 0.0
        %2407 = vmatpush1.msra.mxu0 %v2396
        %2408 = vmatprep.subr.mxu0 0.0
        %2409 = vmatpush1.msra.mxu0 0.0
        %2410 = vmatprep.subr.mxu0 0.0
        %2411 = vmatpush1.msra.mxu0 0.0
        %2412 = vmatprep.subr.mxu0 0.0
        %2413 = vmatpush1.msra.mxu0 0.0
        %2414 = vmatprep.subr.mxu0 0.0
        %2415 = vmatpush1.msra.mxu0 0.0
        %2416 = vmatprep.subr.mxu0 0.0
        %2417 = vmatpush1.msra.mxu0 0.0
        %2418 = vmatprep.subr.mxu0 0.0
        %2419 = vmatpush1.msra.mxu0 0.0
        %2420 = vmatprep.subr.mxu0 0.0
        %2421 = vmatpush1.msra.mxu0 0.0
        %2422 = vmatprep.subr.mxu0 0.0
        %2423 = vmatpush1.msra.mxu0 0.0
        %2424 = vmatprep.subr.mxu0 0.0
        %2425 = vmatpush1.msra.mxu0 0.0
        %2426 = vmatprep.subr.mxu0 0.0
        %2427 = vmatpush1.msra.mxu0 0.0
        %2428 = vmatprep.subr.mxu0 0.0
        %2429 = vmatpush1.msra.mxu0 0.0
        %2430 = vmatprep.subr.mxu0 0.0
        %2431 = vmatpush1.msra.mxu0 0.0
        %2432 = vmatprep.subr.mxu0 0.0
        %2433 = vmatpush1.msra.mxu0 0.0
        %2434 = vmatprep.subr.mxu0 0.0
        %2435 = vmatpush1.msra.mxu0 0.0
        %2436 = vmatprep.subr.mxu0 0.0
        %2437 = vmatpush1.msra.mxu0 0.0
        %2438 = vmatprep.subr.mxu0 0.0
        %2439 = vmatpush1.msra.mxu0 0.0
        %2440 = vmatprep.subr.mxu0 0.0
        %2441 = vmatpush1.msra.mxu0 0.0
        %2442 = vmatprep.subr.mxu0 0.0
        %2443 = vmatpush1.msra.mxu0 0.0
        %2444 = vmatprep.subr.mxu0 0.0
        %2445 = vmatpush1.msra.mxu0 0.0
        %2446 = vmatprep.subr.mxu0 0.0
        %2447 = vmatpush1.msra.mxu0 0.0
        %2448 = vmatprep.subr.mxu0 0.0
        %2449 = vmatpush1.msra.mxu0 0.0
        %2450 = vmatprep.subr.mxu0 0.0
        %2451 = vmatpush1.msra.mxu0 0.0
        %2452 = vmatprep.subr.mxu0 0.0
        %2453 = vmatpush1.msra.mxu0 0.0
        %2454 = vmatprep.subr.mxu0 0.0
        %2455 = vmatpush1.msra.mxu0 0.0
        %2456 = vmatprep.subr.mxu0 0.0
        %2457 = vmatpush1.msra.mxu0 0.0
        %2458 = vmatprep.subr.mxu0 0.0
        %2459 = vmatpush1.msra.mxu0 0.0
        %2460 = vmatprep.subr.mxu0 0.0
        %2461 = vmatpush1.msra.mxu0 0.0
        %2462 = vmatprep.mubr.f32.mxu0 0.0
        %2463 = vmatmul.mubr.f32.gmra.mrb[0].mxu0 %v2381
        %v2464 = vpop.f32.mrb[0].mxu0
        %v2465 = vadd.f32 0.0, %v2464
        %v2466 = vpop.f32.mrb[0].mxu0
        %2467 = vmatprep.mubr.f32.mxu0 0.0
        %2468 = vmatmul.mubr.f32.gmra.mrb[0].mxu0 %v2384
        %v2469 = vpop.f32.mrb[0].mxu0
        %v2470 = vadd.f32 0.0, %v2469
        %v2471 = vpop.f32.mrb[0].mxu0
        %2472 = vmatprep.mubr.f32.mxu0 0.0
        %2473 = vmatmul.mubr.f32.gmra.mrb[0].mxu0 %v2387
        %v2474 = vpop.f32.mrb[0].mxu0
        %v2475 = vadd.f32 0.0, %v2474
        %v2476 = vpop.f32.mrb[0].mxu0
        %2477 = vmatprep.mubr.f32.mxu0 0.0
        %2478 = vmatmul.mubr.f32.gmra.mrb[0].mxu0 %v2390
        %v2479 = vpop.f32.mrb[0].mxu0
        %v2480 = vadd.f32 0.0, %v2479
        %v2481 = vpop.f32.mrb[0].mxu0
        %2482 = vmatprep.mubr.f32.mxu0 0.0
        %2483 = vmatmul.mubr.f32.gmra.mrb[0].mxu0 %v2393
        %v2484 = vpop.f32.mrb[0].mxu0
        %v2485 = vadd.f32 0.0, %v2484
        %v2486 = vpop.f32.mrb[0].mxu0
        %2487 = vdwg.mxu0
        %v2488 = vadd.f32 %v2197, %v2465
        %v2489 = vadd.f32 %v2202, %v2470
        %v2490 = vadd.f32 %v2207, %v2475
        %v2491 = vadd.f32 %v2212, %v2480
        %v2492 = vadd.f32 %v2217, %v2485
        %vm2493 = vcmp.ge.s32.totalorder %v1681, 96
        %vm2494 = vcmp.lt.s32.totalorder %v1681, 128
        %vm2495 = vmand %vm2493, %vm2494
        %v2496 = vsel %vm2495, 1, 0
        %v2497 = vcvt.s32.f32 %v2496
        %v2498 = vmul.f32 %v1595, %v2497
        %v2499 = vmul.f32 %v1599, %v2497
        %v2500 = vmul.f32 %v1605, %v2497
        %v2501 = vmul.f32 %v1609, %v2497
        %v2502 = vmul.f32 %v1615, %v2497
        %2503 = vmatprep.subr.mxu0 0.0
        %2504 = vmatpush1.xpose.msra.mxu0 %v2498
        %2505 = vmatprep.subr.mxu0 0.0
        %2506 = vmatpush1.xpose.msra.mxu0 %v2499
        %2507 = vmatprep.subr.mxu0 0.0
        %2508 = vmatpush1.xpose.msra.mxu0 %v2500
        %2509 = vmatprep.subr.mxu0 0.0
        %2510 = vmatpush1.xpose.msra.mxu0 %v2501
        %2511 = vmatprep.subr.mxu0 0.0
        %2512 = vmatpush1.xpose.msra.mxu0 %v2502
        %2513 = vmatprep.subr.mxu0 0.0
        %2514 = vmatpush1.xpose.msra.mxu0 0.0
        %2515 = vmatprep.subr.mxu0 0.0
        %2516 = vmatpush1.xpose.msra.mxu0 0.0
        %2517 = vmatprep.subr.mxu0 0.0
        %2518 = vmatpush1.xpose.msra.mxu0 0.0
        %2519 = vmatprep.subr.mxu0 0.0
        %2520 = vmatpush1.xpose.msra.mxu0 0.0
        %2521 = vmatprep.subr.mxu0 0.0
        %2522 = vmatpush1.xpose.msra.mxu0 0.0
        %2523 = vmatprep.subr.mxu0 0.0
        %2524 = vmatpush1.xpose.msra.mxu0 0.0
        %2525 = vmatprep.subr.mxu0 0.0
        %2526 = vmatpush1.xpose.msra.mxu0 0.0
        %2527 = vmatprep.subr.mxu0 0.0
        %2528 = vmatpush1.xpose.msra.mxu0 0.0
        %2529 = vmatprep.subr.mxu0 0.0
        %2530 = vmatpush1.xpose.msra.mxu0 0.0
        %2531 = vmatprep.subr.mxu0 0.0
        %2532 = vmatpush1.xpose.msra.mxu0 0.0
        %2533 = vmatprep.subr.mxu0 0.0
        %2534 = vmatpush1.xpose.msra.mxu0 0.0
        %2535 = vmatprep.subr.mxu0 0.0
        %2536 = vmatpush1.xpose.msra.mxu0 0.0
        %2537 = vmatprep.subr.mxu0 0.0
        %2538 = vmatpush1.xpose.msra.mxu0 0.0
        %2539 = vmatprep.subr.mxu0 0.0
        %2540 = vmatpush1.xpose.msra.mxu0 0.0
        %2541 = vmatprep.subr.mxu0 0.0
        %2542 = vmatpush1.xpose.msra.mxu0 0.0
        %2543 = vmatprep.subr.mxu0 0.0
        %2544 = vmatpush1.xpose.msra.mxu0 0.0
        %2545 = vmatprep.subr.mxu0 0.0
        %2546 = vmatpush1.xpose.msra.mxu0 0.0
        %2547 = vmatprep.subr.mxu0 0.0
        %2548 = vmatpush1.xpose.msra.mxu0 0.0
        %2549 = vmatprep.subr.mxu0 0.0
        %2550 = vmatpush1.xpose.msra.mxu0 0.0
        %2551 = vmatprep.subr.mxu0 0.0
        %2552 = vmatpush1.xpose.msra.mxu0 0.0
        %2553 = vmatprep.subr.mxu0 0.0
        %2554 = vmatpush1.xpose.msra.mxu0 0.0
        %2555 = vmatprep.subr.mxu0 0.0
        %2556 = vmatpush1.xpose.msra.mxu0 0.0
        %2557 = vmatprep.subr.mxu0 0.0
        %2558 = vmatpush1.xpose.msra.mxu0 0.0
        %2559 = vmatprep.subr.mxu0 0.0
        %2560 = vmatpush1.xpose.msra.mxu0 0.0
        %2561 = vmatprep.subr.mxu0 0.0
        %2562 = vmatpush1.xpose.msra.mxu0 0.0
        %2563 = vmatprep.subr.mxu0 0.0
        %2564 = vmatpush1.xpose.msra.mxu0 0.0
        %2565 = vmatprep.subr.mxu0 0.0
        %2566 = vmatpush1.xpose.msra.mxu0 0.0
        %2567 = vmatprep.mubr.f32.mxu0 0.0
        %2568 = vmatmul.mubr.f32.gmra.mrb[0].mxu0 %v1593
        %v2569 = vpop.f32.mrb[0].mxu0
        %v2570 = vadd.f32 %v1675, %v2569
        %v2571 = vpop.f32.mrb[0].mxu0
        %2572 = vmatprep.mubr.f32.mxu0 0.0
        %2573 = vmatmul.mubr.f32.gmra.mrb[0].mxu0 %v1597
        %v2574 = vpop.f32.mrb[0].mxu0
        %v2575 = vadd.f32 %v1676, %v2574
        %v2576 = vpop.f32.mrb[0].mxu0
        %2577 = vmatprep.mubr.f32.mxu0 0.0
        %2578 = vmatmul.mubr.f32.gmra.mrb[0].mxu0 %v1603
        %v2579 = vpop.f32.mrb[0].mxu0
        %v2580 = vadd.f32 %v1677, %v2579
        %v2581 = vpop.f32.mrb[0].mxu0
        %2582 = vmatprep.mubr.f32.mxu0 0.0
        %2583 = vmatmul.mubr.f32.gmra.mrb[0].mxu0 %v1607
        %v2584 = vpop.f32.mrb[0].mxu0
        %v2585 = vadd.f32 %v1678, %v2584
        %v2586 = vpop.f32.mrb[0].mxu0
        %2587 = vmatprep.mubr.f32.mxu0 0.0
        %2588 = vmatmul.mubr.f32.gmra.mrb[0].mxu0 %v1613
        %v2589 = vpop.f32.mrb[0].mxu0
        %v2590 = vadd.f32 %v1679, %v2589
        %v2591 = vpop.f32.mrb[0].mxu0
        %2592 = vdwg.mxu0
        %v2593 = vsel %vm1782, %v2570, -inf
        %2594 = vmax.xlane.f32.xlu0 %v2593
        %v2595 = vpop.xlane.xlu0 %2594
        %v2596 = vsel %vm1782, %v2575, -inf
        %2597 = vmax.xlane.f32.xlu0 %v2596
        %v2598 = vpop.xlane.xlu0 %2597
        %v2599 = vsel %vm1782, %v2580, -inf
        %2600 = vmax.xlane.f32.xlu0 %v2599
        %v2601 = vpop.xlane.xlu0 %2600
        %v2602 = vsel %vm1782, %v2585, -inf
        %2603 = vmax.xlane.f32.xlu0 %v2602
        %v2604 = vpop.xlane.xlu0 %2603
        %v2605 = vsel %vm1795, %v2590, -inf
        %2606 = vmax.xlane.f32.xlu0 %v2605
        %v2607 = vpop.xlane.xlu0 %2606
        %v2608 = vsub.f32 %v2570, %v2595
        %v2609 = vsub.f32 %v2575, %v2598
        %v2610 = vsub.f32 %v2580, %v2601
        %v2611 = vsub.f32 %v2585, %v2604
        %v2612 = vsub.f32 %v2590, %v2607
        %v2613 = vmul.f32 %v2608, 1.442695
        %v2614 = vpow.pop %v2613
        %v2615 = vmul.f32 %v2609, 1.442695
        %v2616 = vpow.pop %v2615
        %v2617 = vmul.f32 %v2610, 1.442695
        %v2618 = vpow.pop %v2617
        %v2619 = vmul.f32 %v2611, 1.442695
        %v2620 = vpow.pop %v2619
        %v2621 = vmul.f32 %v2612, 1.442695
        %v2622 = vpow.pop %v2621
        %v2623 = vsel %vm1782, %v2614, 0.0
        %2624 = vadd.xlane.f32.xlu0 %v2623
        %v2625 = vpop.xlane.xlu0 %2624
        %v2626 = vsel %vm1782, %v2616, 0.0
        %2627 = vadd.xlane.f32.xlu0 %v2626
        %v2628 = vpop.xlane.xlu0 %2627
        %v2629 = vsel %vm1782, %v2618, 0.0
        %2630 = vadd.xlane.f32.xlu0 %v2629
        %v2631 = vpop.xlane.xlu0 %2630
        %v2632 = vsel %vm1782, %v2620, 0.0
        %2633 = vadd.xlane.f32.xlu0 %v2632
        %v2634 = vpop.xlane.xlu0 %2633
        %v2635 = vsel %vm1795, %v2622, 0.0
        %2636 = vadd.xlane.f32.xlu0 %v2635
        %v2637 = vpop.xlane.xlu0 %2636
        %v2638 = vrcp.pop %v2625
        %v2639 = vrcp.pop %v2628
        %v2640 = vrcp.pop %v2631
        %v2641 = vrcp.pop %v2634
        %v2642 = vrcp.pop %v2637
        %v2643 = vmul.f32 %v2614, %v2638
        %v2644 = vmul.f32 %v2616, %v2639
        %v2645 = vmul.f32 %v2618, %v2640
        %v2646 = vmul.f32 %v2620, %v2641
        %v2647 = vmul.f32 %v2622, %v2642
        %v2648 = vmul.f32 %v1654, %v2497
        %v2649 = vmul.f32 %v1657, %v2497
        %v2650 = vmul.f32 %v1662, %v2497
        %v2651 = vmul.f32 %v1665, %v2497
        %v2652 = vmul.f32 %v1670, %v2497
        %v2654 = vsel %vm1782, %v2643, 0
        %v2657 = vsel %vm1782, %v2644, 0
        %v2660 = vsel %vm1782, %v2645, 0
        %v2663 = vsel %vm1782, %v2646, 0
        %v2666 = vsel %vm1782, %v2647, 0
        %v2669 = vsel %vm1305, %v2652, 0
        %2671 = vmatprep.subr.mxu0 0.0
        %2672 = vmatpush1.msra.mxu0 %v2648
        %2673 = vmatprep.subr.mxu0 0.0
        %2674 = vmatpush1.msra.mxu0 %v2649
        %2675 = vmatprep.subr.mxu0 0.0
        %2676 = vmatpush1.msra.mxu0 %v2650
        %2677 = vmatprep.subr.mxu0 0.0
        %2678 = vmatpush1.msra.mxu0 %v2651
        %2679 = vmatprep.subr.mxu0 0.0
        %2680 = vmatpush1.msra.mxu0 %v2669
        %2681 = vmatprep.subr.mxu0 0.0
        %2682 = vmatpush1.msra.mxu0 0.0
        %2683 = vmatprep.subr.mxu0 0.0
        %2684 = vmatpush1.msra.mxu0 0.0
        %2685 = vmatprep.subr.mxu0 0.0
        %2686 = vmatpush1.msra.mxu0 0.0
        %2687 = vmatprep.subr.mxu0 0.0
        %2688 = vmatpush1.msra.mxu0 0.0
        %2689 = vmatprep.subr.mxu0 0.0
        %2690 = vmatpush1.msra.mxu0 0.0
        %2691 = vmatprep.subr.mxu0 0.0
        %2692 = vmatpush1.msra.mxu0 0.0
        %2693 = vmatprep.subr.mxu0 0.0
        %2694 = vmatpush1.msra.mxu0 0.0
        %2695 = vmatprep.subr.mxu0 0.0
        %2696 = vmatpush1.msra.mxu0 0.0
        %2697 = vmatprep.subr.mxu0 0.0
        %2698 = vmatpush1.msra.mxu0 0.0
        %2699 = vmatprep.subr.mxu0 0.0
        %2700 = vmatpush1.msra.mxu0 0.0
        %2701 = vmatprep.subr.mxu0 0.0
        %2702 = vmatpush1.msra.mxu0 0.0
        %2703 = vmatprep.subr.mxu0 0.0
        %2704 = vmatpush1.msra.mxu0 0.0
        %2705 = vmatprep.subr.mxu0 0.0
        %2706 = vmatpush1.msra.mxu0 0.0
        %2707 = vmatprep.subr.mxu0 0.0
        %2708 = vmatpush1.msra.mxu0 0.0
        %2709 = vmatprep.subr.mxu0 0.0
        %2710 = vmatpush1.msra.mxu0 0.0
        %2711 = vmatprep.subr.mxu0 0.0
        %2712 = vmatpush1.msra.mxu0 0.0
        %2713 = vmatprep.subr.mxu0 0.0
        %2714 = vmatpush1.msra.mxu0 0.0
        %2715 = vmatprep.subr.mxu0 0.0
        %2716 = vmatpush1.msra.mxu0 0.0
        %2717 = vmatprep.subr.mxu0 0.0
        %2718 = vmatpush1.msra.mxu0 0.0
        %2719 = vmatprep.subr.mxu0 0.0
        %2720 = vmatpush1.msra.mxu0 0.0
        %2721 = vmatprep.subr.mxu0 0.0
        %2722 = vmatpush1.msra.mxu0 0.0
        %2723 = vmatprep.subr.mxu0 0.0
        %2724 = vmatpush1.msra.mxu0 0.0
        %2725 = vmatprep.subr.mxu0 0.0
        %2726 = vmatpush1.msra.mxu0 0.0
        %2727 = vmatprep.subr.mxu0 0.0
        %2728 = vmatpush1.msra.mxu0 0.0
        %2729 = vmatprep.subr.mxu0 0.0
        %2730 = vmatpush1.msra.mxu0 0.0
        %2731 = vmatprep.subr.mxu0 0.0
        %2732 = vmatpush1.msra.mxu0 0.0
        %2733 = vmatprep.subr.mxu0 0.0
        %2734 = vmatpush1.msra.mxu0 0.0
        %2735 = vmatprep.mubr.f32.mxu0 0.0
        %2736 = vmatmul.mubr.f32.gmra.mrb[0].mxu0 %v2654
        %v2737 = vpop.f32.mrb[0].mxu0
        %v2738 = vadd.f32 0.0, %v2737
        %v2739 = vpop.f32.mrb[0].mxu0
        %2740 = vmatprep.mubr.f32.mxu0 0.0
        %2741 = vmatmul.mubr.f32.gmra.mrb[0].mxu0 %v2657
        %v2742 = vpop.f32.mrb[0].mxu0
        %v2743 = vadd.f32 0.0, %v2742
        %v2744 = vpop.f32.mrb[0].mxu0
        %2745 = vmatprep.mubr.f32.mxu0 0.0
        %2746 = vmatmul.mubr.f32.gmra.mrb[0].mxu0 %v2660
        %v2747 = vpop.f32.mrb[0].mxu0
        %v2748 = vadd.f32 0.0, %v2747
        %v2749 = vpop.f32.mrb[0].mxu0
        %2750 = vmatprep.mubr.f32.mxu0 0.0
        %2751 = vmatmul.mubr.f32.gmra.mrb[0].mxu0 %v2663
        %v2752 = vpop.f32.mrb[0].mxu0
        %v2753 = vadd.f32 0.0, %v2752
        %v2754 = vpop.f32.mrb[0].mxu0
        %2755 = vmatprep.mubr.f32.mxu0 0.0
        %2756 = vmatmul.mubr.f32.gmra.mrb[0].mxu0 %v2666
        %v2757 = vpop.f32.mrb[0].mxu0
        %v2758 = vadd.f32 0.0, %v2757
        %v2759 = vpop.f32.mrb[0].mxu0
        %2760 = vdwg.mxu0
        %v2761 = vadd.f32 %v2488, %v2738
        %v2762 = vadd.f32 %v2489, %v2743
        %v2763 = vadd.f32 %v2490, %v2748
        %v2764 = vadd.f32 %v2491, %v2753
        %v2765 = vadd.f32 %v2492, %v2758
        %v2766 = vpack.c.bf16 %v2762, %v2761
        %v2767 = vpack.c.bf16 %v2764, %v2763
        %v2768 = vpack.c.bf16 %v2765, %v2765
        %v2769 = vld [vmem:[%s977] sm:$0xf]
        %v2770 = vld [vmem:[%s977 + $0x4] sm:$0xf]
        %v2771 = vld [vmem:[%s977 + $0x8] sm:$0xf]
        %v2772 = vld [vmem:[%s977 + $0xc] sm:$0xf]
        %v2773 = vld [vmem:[%s977 + $0x10] sm:$0xf]
        %v2774 = vld [vmem:[%s977 + $0x14] sm:$0xf]
        %v2775 = vld [vmem:[%s977 + $0x18] sm:$0xf]
        %v2776 = vld [vmem:[%s977 + $0x1c] sm:$0xf]
        %v2777 = vld [vmem:[%s977 + $0x20] sm:$0xf]
        %v2778 = vld [vmem:[%s977 + $0x24] sm:$0xf]
        %v2779 = vld [vmem:[%s977 + $0x28] sm:$0xf]
        %v2780 = vld [vmem:[%s977 + $0x2c] sm:$0xf]
        %v2781 = vld [vmem:[%s977 + $0x30] sm:$0xf]
        %v2782 = vld [vmem:[%s977 + $0x34] sm:$0xf]
        %v2783 = vld [vmem:[%s977 + $0x38] sm:$0xf]
        %v2784 = vld [vmem:[%s977 + $0x3c] sm:$0xf]
        %v2801 = vunpack.c.l.b16 %v2769
        %v2802 = vunpack.c.l.b16 %v2770
        %v2803 = vunpack.c.l.b16 %v2771
        %v2804 = vunpack.c.l.b16 %v2772
        %v2805 = vunpack.c.l.b16 %v2773
        %v2806 = vunpack.c.l.b16 %v2774
        %v2807 = vunpack.c.l.b16 %v2775
        %v2808 = vunpack.c.l.b16 %v2776
        %v2809 = vunpack.c.l.b16 %v2777
        %v2810 = vunpack.c.l.b16 %v2778
        %v2811 = vunpack.c.l.b16 %v2779
        %v2812 = vunpack.c.l.b16 %v2780
        %v2813 = vunpack.c.l.b16 %v2781
        %v2814 = vunpack.c.l.b16 %v2782
        %v2815 = vunpack.c.l.b16 %v2783
        %v2816 = vunpack.c.l.b16 %v2784
        %v2817 = vpack.c.b16 %v2802, %v2801
        %v2818 = vpack.c.b16 %v2804, %v2803
        %v2819 = vpack.c.b16 %v2806, %v2805
        %v2820 = vpack.c.b16 %v2808, %v2807
        %v2821 = vpack.c.b16 %v2810, %v2809
        %v2822 = vpack.c.b16 %v2812, %v2811
        %v2823 = vpack.c.b16 %v2814, %v2813
        %v2824 = vpack.c.b16 %v2816, %v2815
        %2833 = vmatprep.subr.bf16.mxu0 0
        %2834 = vmatpush1.bf16.msra.mxu0 %v2817
        %2835 = vmatprep.subr.bf16.mxu0 0
        %2836 = vmatpush1.bf16.msra.mxu0 %v2818
        %2837 = vmatprep.subr.bf16.mxu0 0
        %2838 = vmatpush1.bf16.msra.mxu0 %v2819
        %2839 = vmatprep.subr.bf16.mxu0 0
        %2840 = vmatpush1.bf16.msra.mxu0 %v2820
        %2841 = vmatprep.subr.bf16.mxu0 0
        %2842 = vmatpush1.bf16.msra.mxu0 %v2821
        %2843 = vmatprep.subr.bf16.mxu0 0
        %2844 = vmatpush1.bf16.msra.mxu0 %v2822
        %2845 = vmatprep.subr.bf16.mxu0 0
        %2846 = vmatpush1.bf16.msra.mxu0 %v2823
        %2847 = vmatprep.subr.bf16.mxu0 0
        %2848 = vmatpush1.bf16.msra.mxu0 %v2824
        %2849 = vmatprep.subr.bf16.mxu0 0
        %2850 = vmatpush1.bf16.msra.mxu0 0
        %2851 = vmatprep.subr.bf16.mxu0 0
        %2852 = vmatpush1.bf16.msra.mxu0 0
        %2853 = vmatprep.subr.bf16.mxu0 0
        %2854 = vmatpush1.bf16.msra.mxu0 0
        %2855 = vmatprep.subr.bf16.mxu0 0
        %2856 = vmatpush1.bf16.msra.mxu0 0
        %2857 = vmatprep.subr.bf16.mxu0 0
        %2858 = vmatpush1.bf16.msra.mxu0 0
        %2859 = vmatprep.subr.bf16.mxu0 0
        %2860 = vmatpush1.bf16.msra.mxu0 0
        %2861 = vmatprep.subr.bf16.mxu0 0
        %2862 = vmatpush1.bf16.msra.mxu0 0
        %2863 = vmatprep.subr.bf16.mxu0 0
        %2864 = vmatpush1.bf16.msra.mxu0 0
        %2865 = vmatprep.mubr.bf16.mxu0 0
        %2866 = vmatmul.mubr.bf16.gmra.mrb[0].mxu0 %v2766
        %v2867 = vpop.f32.mrb[0].mxu0
        %v2868 = vadd.f32 0.0, %v2867
        %v2869 = vpop.f32.mrb[0].mxu0
        %v2870 = vpop.f32.mrb[0].mxu0
        %v2871 = vadd.f32 0.0, %v2870
        %v2872 = vpop.f32.mrb[0].mxu0
        %2873 = vmatprep.mubr.bf16.mxu0 0
        %2874 = vmatmul.mubr.bf16.gmra.mrb[0].mxu0 %v2767
        %v2875 = vpop.f32.mrb[0].mxu0
        %v2876 = vadd.f32 0.0, %v2875
        %v2877 = vpop.f32.mrb[0].mxu0
        %v2878 = vpop.f32.mrb[0].mxu0
        %v2879 = vadd.f32 0.0, %v2878
        %v2880 = vpop.f32.mrb[0].mxu0
        %2881 = vmatprep.mubr.bf16.mxu0 0
        %2882 = vmatmul.mubr.bf16.gmra.mrb[0].mxu0 %v2768
        %v2883 = vpop.f32.mrb[0].mxu0
        %v2884 = vadd.f32 0.0, %v2883
        %v2885 = vpop.f32.mrb[0].mxu0
        %v2886 = vpop.f32.mrb[0].mxu0
        %v2887 = vpop.f32.mrb[0].mxu0
        %2888 = vdwg.mxu0
        %v2889 = vadd.f32 %v1290, %v2868
        %v2890 = vadd.f32 %v1291, %v2871
        %v2891 = vadd.f32 %v1292, %v2876
        %v2892 = vadd.f32 %v1293, %v2879
        %v2893 = vadd.f32 %v1294, %v2884
        %v2894 = vld [vmem:[%s986] sm:$0x1]
        %v2896 = vlaneseq
        %v2897 = vshrl.u32 %v2896, 7
        %v2898 = vsub.s32 0, %v2897
        %v2899 = vrot.slane %v2894, %v2898
        %v2901 = vadd.f32 %v2889, %v2899
        %v2902 = vadd.f32 %v2890, %v2899
        %v2903 = vadd.f32 %v2891, %v2899
        %v2904 = vadd.f32 %v2892, %v2899
        %v2905 = vadd.f32 %v2893, %v2899
        %v2906 = vld [vmem:[%s995] sm:$0x1]
        %v2907 = vld [vmem:[%s1004] sm:$0x1]
        %2908 = vadd.xlane.f32.xlu0 %v2901
        %v2909 = vpop.xlane.xlu0 %2908
        %2910 = vadd.xlane.f32.xlu0 %v2902
        %v2911 = vpop.xlane.xlu0 %2910
        %2912 = vadd.xlane.f32.xlu0 %v2903
        %v2913 = vpop.xlane.xlu0 %2912
        %2914 = vadd.xlane.f32.xlu0 %v2904
        %v2915 = vpop.xlane.xlu0 %2914
        %v2916 = vsel %vm1305, %v2905, 0.0
        %2917 = vadd.xlane.f32.xlu0 %v2916
        %v2918 = vpop.xlane.xlu0 %2917
        %v2919 = vmul.f32 %v2909, %v1309
        %v2920 = vmul.f32 %v2911, %v1309
        %v2921 = vmul.f32 %v2913, %v1309
        %v2922 = vmul.f32 %v2915, %v1309
        %v2923 = vmul.f32 %v2918, %v1309
        %v2924 = vsub.f32 %v2901, %v2919
        %v2925 = vsub.f32 %v2902, %v2920
        %v2926 = vsub.f32 %v2903, %v2921
        %v2927 = vsub.f32 %v2904, %v2922
        %v2928 = vsub.f32 %v2905, %v2923
        %v2929 = vmul.f32 %v2924, %v2924
        %v2930 = vmul.f32 %v2925, %v2925
        %v2931 = vmul.f32 %v2926, %v2926
        %v2932 = vmul.f32 %v2927, %v2927
        %v2933 = vmul.f32 %v2928, %v2928
        %2934 = vadd.xlane.f32.xlu0 %v2929
        %v2935 = vpop.xlane.xlu0 %2934
        %2936 = vadd.xlane.f32.xlu0 %v2930
        %v2937 = vpop.xlane.xlu0 %2936
        %2938 = vadd.xlane.f32.xlu0 %v2931
        %v2939 = vpop.xlane.xlu0 %2938
        %2940 = vadd.xlane.f32.xlu0 %v2932
        %v2941 = vpop.xlane.xlu0 %2940
        %v2942 = vsel %vm1305, %v2933, 0.0
        %2943 = vadd.xlane.f32.xlu0 %v2942
        %v2944 = vpop.xlane.xlu0 %2943
        %v2945 = vmul.f32 %v2935, %v1309
        %v2946 = vmul.f32 %v2937, %v1309
        %v2947 = vmul.f32 %v2939, %v1309
        %v2948 = vmul.f32 %v2941, %v1309
        %v2949 = vmul.f32 %v2944, %v1309
        %v2950 = vadd.f32 %v2945, 1e-05
        %v2951 = vadd.f32 %v2946, 1e-05
        %v2952 = vadd.f32 %v2947, 1e-05
        %v2953 = vadd.f32 %v2948, 1e-05
        %v2954 = vadd.f32 %v2949, 1e-05
        %v2955 = vrsqrt.pop %v2950
        %v2956 = vrsqrt.pop %v2951
        %v2957 = vrsqrt.pop %v2952
        %v2958 = vrsqrt.pop %v2953
        %v2959 = vrsqrt.pop %v2954
        %v2960 = vmul.f32 %v2924, %v2955
        %v2961 = vmul.f32 %v2925, %v2956
        %v2962 = vmul.f32 %v2926, %v2957
        %v2963 = vmul.f32 %v2927, %v2958
        %v2964 = vmul.f32 %v2928, %v2959
        %v2966 = vlaneseq
        %v2967 = vshrl.u32 %v2966, 7
        %v2968 = vsub.s32 0, %v2967
        %v2969 = vrot.slane %v2906, %v2968
        %v2971 = vmul.f32 %v2960, %v2969
        %v2972 = vmul.f32 %v2961, %v2969
        %v2973 = vmul.f32 %v2962, %v2969
        %v2974 = vmul.f32 %v2963, %v2969
        %v2975 = vmul.f32 %v2964, %v2969
        %v2977 = vlaneseq
        %v2978 = vshrl.u32 %v2977, 7
        %v2979 = vsub.s32 0, %v2978
        %v2980 = vrot.slane %v2907, %v2979
        %v2982 = vadd.f32 %v2971, %v2980
        %v2983 = vadd.f32 %v2972, %v2980
        %v2984 = vadd.f32 %v2973, %v2980
        %v2985 = vadd.f32 %v2974, %v2980
        %v2986 = vadd.f32 %v2975, %v2980
        %v2987 = vpack.c.bf16 %v2983, %v2982
        %v2988 = vpack.c.bf16 %v2985, %v2984
        %v2989 = vpack.c.bf16 %v2986, %v2986
        %v2990 = vld [vmem:[%s1015] sm:$0xff]
        %v2991 = vld [vmem:[%s1015 + $0x8] sm:$0xff]
        %v2992 = vld [vmem:[%s1015 + $0x10] sm:$0xff]
        %v2993 = vld [vmem:[%s1015 + $0x18] sm:$0xff]
        %v2994 = vld [vmem:[%s1015 + $0x20] sm:$0xff]
        %v2995 = vld [vmem:[%s1015 + $0x28] sm:$0xff]
        %v2996 = vld [vmem:[%s1015 + $0x30] sm:$0xff]
        %v2997 = vld [vmem:[%s1015 + $0x38] sm:$0xff]
        %v2998 = vld [vmem:[%s1015 + $0x40] sm:$0xff]
        %v2999 = vld [vmem:[%s1015 + $0x48] sm:$0xff]
        %v3000 = vld [vmem:[%s1015 + $0x50] sm:$0xff]
        %v3001 = vld [vmem:[%s1015 + $0x58] sm:$0xff]
        %v3002 = vld [vmem:[%s1015 + $0x60] sm:$0xff]
        %v3003 = vld [vmem:[%s1015 + $0x68] sm:$0xff]
        %v3004 = vld [vmem:[%s1015 + $0x70] sm:$0xff]
        %v3005 = vld [vmem:[%s1015 + $0x78] sm:$0xff]
        %v3006 = vld [vmem:[%s1025] sm:$0x3]
        %v3008 = vlaneseq
        %v3009 = vshrl.u32 %v3008, 7
        %v3010 = vsub.s32 0, %v3009
        %v3011 = vrot.slane %v3006, %v3010
        %v3012 = vlaneseq
        %v3013 = vshrl.u32 %v3012, 7
        %v3014 = vsub.s32 1, %v3013
        %v3015 = vrot.slane %v3006, %v3014
        %v3034 = vunpack.c.l.b16 %v2990
        %v3035 = vunpack.c.h.b16 %v2990
        %v3036 = vunpack.c.l.b16 %v2991
        %v3037 = vunpack.c.h.b16 %v2991
        %v3038 = vunpack.c.l.b16 %v2992
        %v3039 = vunpack.c.h.b16 %v2992
        %v3040 = vunpack.c.l.b16 %v2993
        %v3041 = vunpack.c.h.b16 %v2993
        %v3042 = vunpack.c.l.b16 %v2994
        %v3043 = vunpack.c.h.b16 %v2994
        %v3044 = vunpack.c.l.b16 %v2995
        %v3045 = vunpack.c.h.b16 %v2995
        %v3046 = vunpack.c.l.b16 %v2996
        %v3047 = vunpack.c.h.b16 %v2996
        %v3048 = vunpack.c.l.b16 %v2997
        %v3049 = vunpack.c.h.b16 %v2997
        %v3050 = vunpack.c.l.b16 %v2998
        %v3051 = vunpack.c.h.b16 %v2998
        %v3052 = vunpack.c.l.b16 %v2999
        %v3053 = vunpack.c.h.b16 %v2999
        %v3054 = vunpack.c.l.b16 %v3000
        %v3055 = vunpack.c.h.b16 %v3000
        %v3056 = vunpack.c.l.b16 %v3001
        %v3057 = vunpack.c.h.b16 %v3001
        %v3058 = vunpack.c.l.b16 %v3002
        %v3059 = vunpack.c.h.b16 %v3002
        %v3060 = vunpack.c.l.b16 %v3003
        %v3061 = vunpack.c.h.b16 %v3003
        %v3062 = vunpack.c.l.b16 %v3004
        %v3063 = vunpack.c.h.b16 %v3004
        %v3064 = vunpack.c.l.b16 %v3005
        %v3065 = vunpack.c.h.b16 %v3005
        %v3066 = vpack.c.b16 %v3036, %v3034
        %v3067 = vpack.c.b16 %v3037, %v3035
        %v3068 = vpack.c.b16 %v3040, %v3038
        %v3069 = vpack.c.b16 %v3041, %v3039
        %v3070 = vpack.c.b16 %v3044, %v3042
        %v3071 = vpack.c.b16 %v3045, %v3043
        %v3072 = vpack.c.b16 %v3048, %v3046
        %v3073 = vpack.c.b16 %v3049, %v3047
        %v3074 = vpack.c.b16 %v3052, %v3050
        %v3075 = vpack.c.b16 %v3053, %v3051
        %v3076 = vpack.c.b16 %v3056, %v3054
        %v3077 = vpack.c.b16 %v3057, %v3055
        %v3078 = vpack.c.b16 %v3060, %v3058
        %v3079 = vpack.c.b16 %v3061, %v3059
        %v3080 = vpack.c.b16 %v3064, %v3062
        %v3081 = vpack.c.b16 %v3065, %v3063
        %3098 = vmatprep.subr.bf16.mxu0 %v3067
        %3099 = vmatpush1.bf16.msra.mxu0 %v3066
        %3100 = vmatprep.subr.bf16.mxu0 %v3069
        %3101 = vmatpush1.bf16.msra.mxu0 %v3068
        %3102 = vmatprep.subr.bf16.mxu0 %v3071
        %3103 = vmatpush1.bf16.msra.mxu0 %v3070
        %3104 = vmatprep.subr.bf16.mxu0 %v3073
        %3105 = vmatpush1.bf16.msra.mxu0 %v3072
        %3106 = vmatprep.subr.bf16.mxu0 %v3075
        %3107 = vmatpush1.bf16.msra.mxu0 %v3074
        %3108 = vmatprep.subr.bf16.mxu0 %v3077
        %3109 = vmatpush1.bf16.msra.mxu0 %v3076
        %3110 = vmatprep.subr.bf16.mxu0 %v3079
        %3111 = vmatpush1.bf16.msra.mxu0 %v3078
        %3112 = vmatprep.subr.bf16.mxu0 %v3081
        %3113 = vmatpush1.bf16.msra.mxu0 %v3080
        %3114 = vmatprep.subr.bf16.mxu0 0
        %3115 = vmatpush1.bf16.msra.mxu0 0
        %3116 = vmatprep.subr.bf16.mxu0 0
        %3117 = vmatpush1.bf16.msra.mxu0 0
        %3118 = vmatprep.subr.bf16.mxu0 0
        %3119 = vmatpush1.bf16.msra.mxu0 0
        %3120 = vmatprep.subr.bf16.mxu0 0
        %3121 = vmatpush1.bf16.msra.mxu0 0
        %3122 = vmatprep.subr.bf16.mxu0 0
        %3123 = vmatpush1.bf16.msra.mxu0 0
        %3124 = vmatprep.subr.bf16.mxu0 0
        %3125 = vmatpush1.bf16.msra.mxu0 0
        %3126 = vmatprep.subr.bf16.mxu0 0
        %3127 = vmatpush1.bf16.msra.mxu0 0
        %3128 = vmatprep.subr.bf16.mxu0 0
        %3129 = vmatpush1.bf16.msra.mxu0 0
        %3130 = vmatprep.mubr.bf16.mxu0 0
        %3131 = vmatmul.mubr.bf16.gmra.mrb[0].mxu0 %v2987
        %v3132 = vpop.f32.mrb[0].mxu0
        %v3133 = vadd.f32 %v3011, %v3132
        %v3134 = vpop.f32.mrb[0].mxu0
        %v3135 = vadd.f32 %v3015, %v3134
        %v3136 = vpop.f32.mrb[0].mxu0
        %v3137 = vadd.f32 %v3011, %v3136
        %v3138 = vpop.f32.mrb[0].mxu0
        %v3139 = vadd.f32 %v3015, %v3138
        %3140 = vmatprep.mubr.bf16.mxu0 0
        %3141 = vmatmul.mubr.bf16.gmra.mrb[0].mxu0 %v2988
        %v3142 = vpop.f32.mrb[0].mxu0
        %v3143 = vadd.f32 %v3011, %v3142
        %v3144 = vpop.f32.mrb[0].mxu0
        %v3145 = vadd.f32 %v3015, %v3144
        %v3146 = vpop.f32.mrb[0].mxu0
        %v3147 = vadd.f32 %v3011, %v3146
        %v3148 = vpop.f32.mrb[0].mxu0
        %v3149 = vadd.f32 %v3015, %v3148
        %3150 = vmatprep.mubr.bf16.mxu0 0
        %3151 = vmatmul.mubr.bf16.gmra.mrb[0].mxu0 %v2989
        %v3152 = vpop.f32.mrb[0].mxu0
        %v3153 = vadd.f32 %v3011, %v3152
        %v3154 = vpop.f32.mrb[0].mxu0
        %v3155 = vadd.f32 %v3015, %v3154
        %v3156 = vpop.f32.mrb[0].mxu0
        %v3157 = vpop.f32.mrb[0].mxu0
        %3158 = vdwg.mxu0
        %v3159 = vmul.f32 %v3133, 1.702
        %v3160 = vmul.f32 %v3135, 1.702
        %v3161 = vmul.f32 %v3137, 1.702
        %v3162 = vmul.f32 %v3139, 1.702
        %v3163 = vmul.f32 %v3143, 1.702
        %v3164 = vmul.f32 %v3145, 1.702
        %v3165 = vmul.f32 %v3147, 1.702
        %v3166 = vmul.f32 %v3149, 1.702
        %v3167 = vmul.f32 %v3153, 1.702
        %v3168 = vmul.f32 %v3155, 1.702
        %v3169 = vxor.u32 %v3159, 2147483648
        %v3170 = vxor.u32 %v3160, 2147483648
        %v3171 = vxor.u32 %v3161, 2147483648
        %v3172 = vxor.u32 %v3162, 2147483648
        %v3173 = vxor.u32 %v3163, 2147483648
        %v3174 = vxor.u32 %v3164, 2147483648
        %v3175 = vxor.u32 %v3165, 2147483648
        %v3176 = vxor.u32 %v3166, 2147483648
        %v3177 = vxor.u32 %v3167, 2147483648
        %v3178 = vxor.u32 %v3168, 2147483648
        %v3179 = vmul.f32 %v3169, 1.442695
        %v3180 = vpow.pop %v3179
        %v3181 = vmul.f32 %v3170, 1.442695
        %v3182 = vpow.pop %v3181
        %v3183 = vmul.f32 %v3171, 1.442695
        %v3184 = vpow.pop %v3183
        %v3185 = vmul.f32 %v3172, 1.442695
        %v3186 = vpow.pop %v3185
        %v3187 = vmul.f32 %v3173, 1.442695
        %v3188 = vpow.pop %v3187
        %v3189 = vmul.f32 %v3174, 1.442695
        %v3190 = vpow.pop %v3189
        %v3191 = vmul.f32 %v3175, 1.442695
        %v3192 = vpow.pop %v3191
        %v3193 = vmul.f32 %v3176, 1.442695
        %v3194 = vpow.pop %v3193
        %v3195 = vmul.f32 %v3177, 1.442695
        %v3196 = vpow.pop %v3195
        %v3197 = vmul.f32 %v3178, 1.442695
        %v3198 = vpow.pop %v3197
        %v3199 = vadd.f32 %v3180, 1.0
        %v3200 = vadd.f32 %v3182, 1.0
        %v3201 = vadd.f32 %v3184, 1.0
        %v3202 = vadd.f32 %v3186, 1.0
        %v3203 = vadd.f32 %v3188, 1.0
        %v3204 = vadd.f32 %v3190, 1.0
        %v3205 = vadd.f32 %v3192, 1.0
        %v3206 = vadd.f32 %v3194, 1.0
        %v3207 = vadd.f32 %v3196, 1.0
        %v3208 = vadd.f32 %v3198, 1.0
        %v3209 = vrcp.pop %v3199
        %v3210 = vmul.f32 1.0, %v3209
        %v3211 = vrcp.pop %v3200
        %v3212 = vmul.f32 1.0, %v3211
        %v3213 = vrcp.pop %v3201
        %v3214 = vmul.f32 1.0, %v3213
        %v3215 = vrcp.pop %v3202
        %v3216 = vmul.f32 1.0, %v3215
        %v3217 = vrcp.pop %v3203
        %v3218 = vmul.f32 1.0, %v3217
        %v3219 = vrcp.pop %v3204
        %v3220 = vmul.f32 1.0, %v3219
        %v3221 = vrcp.pop %v3205
        %v3222 = vmul.f32 1.0, %v3221
        %v3223 = vrcp.pop %v3206
        %v3224 = vmul.f32 1.0, %v3223
        %v3225 = vrcp.pop %v3207
        %v3226 = vmul.f32 1.0, %v3225
        %v3227 = vrcp.pop %v3208
        %v3228 = vmul.f32 1.0, %v3227
        %v3229 = vmul.f32 %v3133, %v3210
        %v3230 = vmul.f32 %v3135, %v3212
        %v3231 = vmul.f32 %v3137, %v3214
        %v3232 = vmul.f32 %v3139, %v3216
        %v3233 = vmul.f32 %v3143, %v3218
        %v3234 = vmul.f32 %v3145, %v3220
        %v3235 = vmul.f32 %v3147, %v3222
        %v3236 = vmul.f32 %v3149, %v3224
        %v3237 = vmul.f32 %v3153, %v3226
        %v3238 = vmul.f32 %v3155, %v3228
        %v3239 = vpack.c.bf16 %v3231, %v3229
        %v3240 = vpack.c.bf16 %v3232, %v3230
        %v3241 = vpack.c.bf16 %v3235, %v3233
        %v3242 = vpack.c.bf16 %v3236, %v3234
        %v3243 = vpack.c.bf16 %v3237, %v3237
        %v3244 = vpack.c.bf16 %v3238, %v3238
        %v3245 = vld [vmem:[%s1036] sm:$0xf]
        %v3246 = vld [vmem:[%s1036 + $0x4] sm:$0xf]
        %v3247 = vld [vmem:[%s1036 + $0x8] sm:$0xf]
        %v3248 = vld [vmem:[%s1036 + $0xc] sm:$0xf]
        %v3249 = vld [vmem:[%s1036 + $0x10] sm:$0xf]
        %v3250 = vld [vmem:[%s1036 + $0x14] sm:$0xf]
        %v3251 = vld [vmem:[%s1036 + $0x18] sm:$0xf]
        %v3252 = vld [vmem:[%s1036 + $0x1c] sm:$0xf]
        %v3253 = vld [vmem:[%s1036 + $0x20] sm:$0xf]
        %v3254 = vld [vmem:[%s1036 + $0x24] sm:$0xf]
        %v3255 = vld [vmem:[%s1036 + $0x28] sm:$0xf]
        %v3256 = vld [vmem:[%s1036 + $0x2c] sm:$0xf]
        %v3257 = vld [vmem:[%s1036 + $0x30] sm:$0xf]
        %v3258 = vld [vmem:[%s1036 + $0x34] sm:$0xf]
        %v3259 = vld [vmem:[%s1036 + $0x38] sm:$0xf]
        %v3260 = vld [vmem:[%s1036 + $0x3c] sm:$0xf]
        %v3261 = vld [vmem:[%s1036 + $0x40] sm:$0xf]
        %v3262 = vld [vmem:[%s1036 + $0x44] sm:$0xf]
        %v3263 = vld [vmem:[%s1036 + $0x48] sm:$0xf]
        %v3264 = vld [vmem:[%s1036 + $0x4c] sm:$0xf]
        %v3265 = vld [vmem:[%s1036 + $0x50] sm:$0xf]
        %v3266 = vld [vmem:[%s1036 + $0x54] sm:$0xf]
        %v3267 = vld [vmem:[%s1036 + $0x58] sm:$0xf]
        %v3268 = vld [vmem:[%s1036 + $0x5c] sm:$0xf]
        %v3269 = vld [vmem:[%s1036 + $0x60] sm:$0xf]
        %v3270 = vld [vmem:[%s1036 + $0x64] sm:$0xf]
        %v3271 = vld [vmem:[%s1036 + $0x68] sm:$0xf]
        %v3272 = vld [vmem:[%s1036 + $0x6c] sm:$0xf]
        %v3273 = vld [vmem:[%s1036 + $0x70] sm:$0xf]
        %v3274 = vld [vmem:[%s1036 + $0x74] sm:$0xf]
        %v3275 = vld [vmem:[%s1036 + $0x78] sm:$0xf]
        %v3276 = vld [vmem:[%s1036 + $0x7c] sm:$0xf]
        %v3277 = vld [vmem:[%s1045] sm:$0x1]
        %v3279 = vlaneseq
        %v3280 = vshrl.u32 %v3279, 7
        %v3281 = vsub.s32 0, %v3280
        %v3282 = vrot.slane %v3277, %v3281
        %v3316 = vunpack.c.l.b16 %v3245
        %v3317 = vunpack.c.l.b16 %v3246
        %v3318 = vunpack.c.l.b16 %v3247
        %v3319 = vunpack.c.l.b16 %v3248
        %v3320 = vunpack.c.l.b16 %v3249
        %v3321 = vunpack.c.l.b16 %v3250
        %v3322 = vunpack.c.l.b16 %v3251
        %v3323 = vunpack.c.l.b16 %v3252
        %v3324 = vunpack.c.l.b16 %v3253
        %v3325 = vunpack.c.l.b16 %v3254
        %v3326 = vunpack.c.l.b16 %v3255
        %v3327 = vunpack.c.l.b16 %v3256
        %v3328 = vunpack.c.l.b16 %v3257
        %v3329 = vunpack.c.l.b16 %v3258
        %v3330 = vunpack.c.l.b16 %v3259
        %v3331 = vunpack.c.l.b16 %v3260
        %v3332 = vunpack.c.l.b16 %v3261
        %v3333 = vunpack.c.l.b16 %v3262
        %v3334 = vunpack.c.l.b16 %v3263
        %v3335 = vunpack.c.l.b16 %v3264
        %v3336 = vunpack.c.l.b16 %v3265
        %v3337 = vunpack.c.l.b16 %v3266
        %v3338 = vunpack.c.l.b16 %v3267
        %v3339 = vunpack.c.l.b16 %v3268
        %v3340 = vunpack.c.l.b16 %v3269
        %v3341 = vunpack.c.l.b16 %v3270
        %v3342 = vunpack.c.l.b16 %v3271
        %v3343 = vunpack.c.l.b16 %v3272
        %v3344 = vunpack.c.l.b16 %v3273
        %v3345 = vunpack.c.l.b16 %v3274
        %v3346 = vunpack.c.l.b16 %v3275
        %v3347 = vunpack.c.l.b16 %v3276
        %v3348 = vpack.c.b16 %v3317, %v3316
        %v3349 = vpack.c.b16 %v3319, %v3318
        %v3350 = vpack.c.b16 %v3321, %v3320
        %v3351 = vpack.c.b16 %v3323, %v3322
        %v3352 = vpack.c.b16 %v3325, %v3324
        %v3353 = vpack.c.b16 %v3327, %v3326
        %v3354 = vpack.c.b16 %v3329, %v3328
        %v3355 = vpack.c.b16 %v3331, %v3330
        %v3356 = vpack.c.b16 %v3333, %v3332
        %v3357 = vpack.c.b16 %v3335, %v3334
        %v3358 = vpack.c.b16 %v3337, %v3336
        %v3359 = vpack.c.b16 %v3339, %v3338
        %v3360 = vpack.c.b16 %v3341, %v3340
        %v3361 = vpack.c.b16 %v3343, %v3342
        %v3362 = vpack.c.b16 %v3345, %v3344
        %v3363 = vpack.c.b16 %v3347, %v3346
        %3380 = vmatprep.subr.bf16.mxu0 0
        %3381 = vmatpush1.bf16.msra.mxu0 %v3348
        %3382 = vmatprep.subr.bf16.mxu0 0
        %3383 = vmatpush1.bf16.msra.mxu0 %v3349
        %3384 = vmatprep.subr.bf16.mxu0 0
        %3385 = vmatpush1.bf16.msra.mxu0 %v3350
        %3386 = vmatprep.subr.bf16.mxu0 0
        %3387 = vmatpush1.bf16.msra.mxu0 %v3351
        %3388 = vmatprep.subr.bf16.mxu0 0
        %3389 = vmatpush1.bf16.msra.mxu0 %v3352
        %3390 = vmatprep.subr.bf16.mxu0 0
        %3391 = vmatpush1.bf16.msra.mxu0 %v3353
        %3392 = vmatprep.subr.bf16.mxu0 0
        %3393 = vmatpush1.bf16.msra.mxu0 %v3354
        %3394 = vmatprep.subr.bf16.mxu0 0
        %3395 = vmatpush1.bf16.msra.mxu0 %v3355
        %3396 = vmatprep.subr.bf16.mxu0 0
        %3397 = vmatpush1.bf16.msra.mxu0 %v3356
        %3398 = vmatprep.subr.bf16.mxu0 0
        %3399 = vmatpush1.bf16.msra.mxu0 %v3357
        %3400 = vmatprep.subr.bf16.mxu0 0
        %3401 = vmatpush1.bf16.msra.mxu0 %v3358
        %3402 = vmatprep.subr.bf16.mxu0 0
        %3403 = vmatpush1.bf16.msra.mxu0 %v3359
        %3404 = vmatprep.subr.bf16.mxu0 0
        %3405 = vmatpush1.bf16.msra.mxu0 %v3360
        %3406 = vmatprep.subr.bf16.mxu0 0
        %3407 = vmatpush1.bf16.msra.mxu0 %v3361
        %3408 = vmatprep.subr.bf16.mxu0 0
        %3409 = vmatpush1.bf16.msra.mxu0 %v3362
        %3410 = vmatprep.subr.bf16.mxu0 0
        %3411 = vmatpush1.bf16.msra.mxu0 %v3363
        %3412 = vmatprep.mubr.bf16.mxu0 %v3240
        %3413 = vmatmul.mubr.bf16.gmra.mrb[0].mxu0 %v3239
        %v3414 = vpop.f32.mrb[0].mxu0
        %v3415 = vadd.f32 %v3282, %v3414
        %v3416 = vpop.f32.mrb[0].mxu0
        %v3417 = vpop.f32.mrb[0].mxu0
        %v3418 = vadd.f32 %v3282, %v3417
        %v3419 = vpop.f32.mrb[0].mxu0
        %3420 = vmatprep.mubr.bf16.mxu0 %v3242
        %3421 = vmatmul.mubr.bf16.gmra.mrb[0].mxu0 %v3241
        %v3422 = vpop.f32.mrb[0].mxu0
        %v3423 = vadd.f32 %v3282, %v3422
        %v3424 = vpop.f32.mrb[0].mxu0
        %v3425 = vpop.f32.mrb[0].mxu0
        %v3426 = vadd.f32 %v3282, %v3425
        %v3427 = vpop.f32.mrb[0].mxu0
        %3428 = vmatprep.mubr.bf16.mxu0 %v3244
        %3429 = vmatmul.mubr.bf16.gmra.mrb[0].mxu0 %v3243
        %v3430 = vpop.f32.mrb[0].mxu0
        %v3431 = vadd.f32 %v3282, %v3430
        %v3432 = vpop.f32.mrb[0].mxu0
        %v3433 = vpop.f32.mrb[0].mxu0
        %v3434 = vpop.f32.mrb[0].mxu0
        %3435 = vdwg.mxu0
        %v3436 = vadd.f32 %v2901, %v3415
        %v3437 = vadd.f32 %v2902, %v3418
        %v3438 = vadd.f32 %v2903, %v3423
        %v3439 = vadd.f32 %v2904, %v3426
        %v3440 = vadd.f32 %v2905, %v3431
        %3441 = vst [vmem:[#allocation2] sm:$0xff] %v3436
        %3442 = vst [vmem:[#allocation2 + $0x8] sm:$0xff] %v3437
        %3443 = vst [vmem:[#allocation2 + $0x10] sm:$0xff] %v3438
        %3444 = vst [vmem:[#allocation2 + $0x18] sm:$0xff] %v3439
        %3445 = vst [vmem:[#allocation2 + $0x20] sm:$0x3] %v3440
      $region100: #{visual_encoder_forward.1} parent=91 // pred_fallthru
        _
      %v3446 = vld [vmem:[#allocation2] sm:$0xff]
      %v3447 = vld [vmem:[#allocation2 + $0x8] sm:$0xff]
      %v3448 = vld [vmem:[#allocation2 + $0x10] sm:$0xff]
      %v3449 = vld [vmem:[#allocation2 + $0x18] sm:$0xff]
      %v3450 = vld [vmem:[#allocation2 + $0x20] sm:$0x3]
      %3451 = vst [vmem:[%s1058] sm:$0xff] %v3446
      %3452 = vst [vmem:[%s1058 + $0x8] sm:$0xff] %v3447
      %3453 = vst [vmem:[%s1058 + $0x10] sm:$0xff] %v3448
      %3454 = vst [vmem:[%s1058 + $0x18] sm:$0xff] %v3449
      %3455 = vst [vmem:[%s1058 + $0x20] sm:$0x3] %v3450
      %s3456 = sld [smem:[#allocation4 + %s41]]
      %p3457 = scmp.lt.s32.totalorder %s3456, 3
      %s3458 = scalar_select %p3457, %s3456, 3
      %p3459 = scmp.lt.s32.totalorder %s40, 1
      %s3460 = scalar_select %p3459, %s40, 1
      %s3461 = smul.addr %s3460, 5
      %s3462 = smul.addr %s3458, 10
      %s3463 = sadd.s32 %s3461, %s3462
      %s3464 = smul.addr %s3463, 8
      %s3465 = scalar_lea.vmem %s19, %s3464
      // Predicated region
      $region101: #{visual_encoder_forward.1} parent=91 // pred_check
        %p3466 = pneg %p585
      $region102: #{visual_encoder_forward.1} parent=91 // pred_check_branch
        %3468 = sbr.rel (%p3466) target = $region104
      $region103: #{visual_encoder_forward.1} parent=91 // pred_region
        %s3469 = sld [smem:[#allocation4 + %s41]]
      $region104: #{visual_encoder_forward.1} parent=91 // pred_fallthru
        _
    $region92: #{visual_encoder_forward.1} parent=5 // pred_fallthru
      _
    %p3470 = scmp.le.s32.totalorder 2, %s31
    // Predicated region
    $region105: #{visual_encoder_forward.1} parent=5 // pred_check
      %p3471 = pneg %p3470
    $region106: #{visual_encoder_forward.1} parent=5 // pred_check_branch
      %3473 = sbr.rel (%p3471) target = $region108
    $region107: #{visual_encoder_forward.1} parent=5 // pred_region
      %s3474 = ssub.s32 %s31, 2
      // Predicated region
      $region109: #{visual_encoder_forward.1} parent=107 // pred_check
        %p3475 = pneg %p591
      $region110: #{visual_encoder_forward.1} parent=107 // pred_check_branch
        %3477 = sbr.rel (%p3475) target = $region112
      $region111: #{visual_encoder_forward.1} parent=107 // pred_region
        %s3478 = sld [smem:[#allocation4 + %s43]]
        %p3479 = scmp.lt.s32.totalorder %s3478, 3
        %s3480 = scalar_select %p3479, %s3478, 3
        %p3481 = scmp.lt.s32.totalorder %s42, 1
        %s3482 = scalar_select %p3481, %s42, 1
        %s3483 = smul.addr %s3482, 5
        %s3484 = smul.addr %s3480, 10
        %s3485 = sadd.s32 %s3483, %s3484
        %s3486 = smul.addr %s3485, 8
        %s3487 = scalar_lea.vmem %s19, %s3486
      $region112: #{visual_encoder_forward.1} parent=107 // pred_fallthru
        _
    $region108: #{visual_encoder_forward.1} parent=5 // pred_fallthru
      _
  $region6: #{visual_encoder_forward.1} parent=0 // loop_footer
    %s35 = sadd.s32 1, %s31
  $region7: #{visual_encoder_forward.1} parent=0 // loop_footer_branch
    %30 = sbr.rel target = $region3
  $region8: #{visual_encoder_forward.1} parent=0 // loop_exit
    _

</llo_original>
